<compile_context>
chip_gen: v5e
topology: v5e:2x2
jax: 0.10.0
libtpu: 0.0.40
codegen_flags: <defaults>
</compile_context>

<pallas_src>
import math
import jax
import jax.numpy as jnp
from jax.experimental import pallas as pl
from jax.experimental.pallas import tpu as pltpu  # noqa: F401 (kept for parity with template)

# ---------------- model config (small, consistent with the module) ----------
HIDDEN = 32
VOCAB = 64
VOCAB_PAD = 128          # lane-dense classifier width (cols >= VOCAB are padding)
SEQ = 32                 # > 21 so generate_mask's s1_len block is exercised
BATCH = 2
NUM_HEADS = 2
HEAD_DIM = HIDDEN // NUM_HEADS
INTERMEDIATE = 64
NUM_LAYERS = 2
MAX_POS = 64
LN_EPS = 1e-12
S1_LEN = 21              # from generate_mask
ROWS = BATCH * SEQ       # 64 rows, all processed together

# ---------------- vec-pack row layout (all small f32 vectors in one array) ---
V_EMB_G, V_EMB_B = 0, 1
_ROWS_PER_LAYER = 8      # qkv_b, o_b, ln1_g, ln1_b, i_b, f_b, ln2_g, ln2_b


def _lrow(l, j):
    return 2 + l * _ROWS_PER_LAYER + j


V_CLS_B = 2 + NUM_LAYERS * _ROWS_PER_LAYER
VEC_ROWS = V_CLS_B + 1
VEC_W = 128


# ---------------- in-kernel helpers ------------------------------------------
def _layernorm(x, g, b):
    mu = jnp.mean(x, axis=-1, keepdims=True)
    var = jnp.mean((x - mu) ** 2, axis=-1, keepdims=True)
    return (x - mu) * jax.lax.rsqrt(var + LN_EPS) * g + b


def _mm(x, w_bf16):
    # MXU matmul: bf16 operands, f32 accumulation.
    return jnp.dot(x.astype(jnp.bfloat16), w_bf16, preferred_element_type=jnp.float32)


def _bert_logits(x_ref, mask_ref, vec_ref,
                 qkv_w_ref, o_w_ref, i_w_ref, f_w_ref, cls_w_ref):
    """Fully fused 2-layer BERT encoder + classifier. Returns (B*S, VOCAB_PAD) f32 logits."""
    vec = vec_ref[...]                                     # (VEC_ROWS, 128) f32, loaded once
    h = _layernorm(x_ref[...],
                   vec[V_EMB_G:V_EMB_G + 1, :HIDDEN],
                   vec[V_EMB_B:V_EMB_B + 1, :HIDDEN])      # embedding LN, (B*S, H) f32
    add_mask = mask_ref[...]                               # (B*S, B*S) additive mask, f32

    for l in range(NUM_LAYERS):
        qkv_b = vec[_lrow(l, 0):_lrow(l, 0) + 1, :3 * HIDDEN]
        o_b   = vec[_lrow(l, 1):_lrow(l, 1) + 1, :HIDDEN]
        ln1_g = vec[_lrow(l, 2):_lrow(l, 2) + 1, :HIDDEN]
        ln1_b = vec[_lrow(l, 3):_lrow(l, 3) + 1, :HIDDEN]
        i_b   = vec[_lrow(l, 4):_lrow(l, 4) + 1, :INTERMEDIATE]
        f_b   = vec[_lrow(l, 5):_lrow(l, 5) + 1, :HIDDEN]
        ln2_g = vec[_lrow(l, 6):_lrow(l, 6) + 1, :HIDDEN]
        ln2_b = vec[_lrow(l, 7):_lrow(l, 7) + 1, :HIDDEN]

        # ---- fused QKV projection: one (B*S, H) x (H, 3H) matmul ------------
        # (1/sqrt(head_dim) is pre-folded into the Q columns of qkv_w / qkv_b)
        qkv = _mm(h, qkv_w_ref[l]) + qkv_b                 # (B*S, 3H) f32

        # ---- attention over all B*S rows at once (block-diag mask) ----------
        ctx_heads = []
        for hd in range(NUM_HEADS):
            c0 = hd * HEAD_DIM
            q = qkv[:, c0:c0 + HEAD_DIM]
            k = qkv[:, HIDDEN + c0:HIDDEN + c0 + HEAD_DIM]
            v = qkv[:, 2 * HIDDEN + c0:2 * HIDDEN + c0 + HEAD_DIM]
            # contract last axes of q and k -> no transposed copy of K
            scores = jax.lax.dot_general(
                q.astype(jnp.bfloat16), k.astype(jnp.bfloat16),
                (((1,), (1,)), ((), ())),
                preferred_element_type=jnp.float32) + add_mask      # (B*S, B*S) f32
            m = jnp.max(scores, axis=-1, keepdims=True)
            p = jnp.exp(scores - m)
            p = p * pl.reciprocal(jnp.sum(p, axis=-1, keepdims=True), approx=True)
            ctx_heads.append(jnp.dot(p.astype(jnp.bfloat16), v.astype(jnp.bfloat16),
                                     preferred_element_type=jnp.float32))  # (B*S, D)
        ctx = jnp.concatenate(ctx_heads, axis=-1)          # (B*S, H) — lane concat

        # single output projection + residual + LN (no VMEM scratch round trip)
        attn_out = _mm(ctx, o_w_ref[l]) + o_b
        h = _layernorm(attn_out + h, ln1_g, ln1_b)

        # ---- FFN with fused exact-erf GELU (parity with PyTorch BERT) -------
        ff = _mm(h, i_w_ref[l]) + i_b
        ff = 0.5 * ff * (1.0 + jax.lax.erf(ff * jnp.float32(1.0 / math.sqrt(2.0))))
        ff = _mm(ff, f_w_ref[l]) + f_b
        h = _layernorm(ff + h, ln2_g, ln2_b)

    # ---- classifier (lane-dense 128-wide; pad cols carry -1e9 bias) ---------
    return _mm(h, cls_w_ref[...]) + vec[V_CLS_B:V_CLS_B + 1, :]   # (B*S, 128) f32


# ---------------- fused kernels (one launch per path) -------------------------
def _predict_kernel(x_ref, mask_ref, vec_ref,
                    qkv_w_ref, o_w_ref, i_w_ref, f_w_ref, cls_w_ref, probs_ref):
    logits = _bert_logits(x_ref, mask_ref, vec_ref,
                          qkv_w_ref, o_w_ref, i_w_ref, f_w_ref, cls_w_ref)
    m = jnp.max(logits, axis=-1, keepdims=True)
    e = jnp.exp(logits - m)
    # exact divide for numerical parity with torch.softmax (padded cols -> 0)
    probs_ref[...] = e / jnp.sum(e, axis=-1, keepdims=True)


def _loss_kernel(x_ref, mask_ref, vec_ref,
                 qkv_w_ref, o_w_ref, i_w_ref, f_w_ref, cls_w_ref,
                 labels_ref, loss_ref):
    logits = _bert_logits(x_ref, mask_ref, vec_ref,
                          qkv_w_ref, o_w_ref, i_w_ref, f_w_ref, cls_w_ref)
    labels = labels_ref[...]                               # (B*S, 1) i32
    M, V = logits.shape
    m = jnp.max(logits, axis=-1, keepdims=True)
    lse = jnp.log(jnp.sum(jnp.exp(logits - m), axis=-1, keepdims=True)) + m
    col = jax.lax.broadcasted_iota(jnp.int32, (M, V), 1)
    picked = jnp.sum(jnp.where(col == labels, logits, 0.0), axis=-1, keepdims=True)
    nll = lse - picked                                     # (B*S, 1)
    valid = (labels != 0).astype(jnp.float32)              # ignore_index=0
    denom = jnp.maximum(jnp.sum(valid), 1.0)               # guard all-ignored batch
    loss_ref[0, 0] = jnp.sum(nll * valid) / denom


# ---------------- parameters (deterministic synthetic init) -------------------
def init_params(key):
    def norm(k, shape, scale=0.02):
        return scale * jax.random.normal(k, shape, jnp.float32)

    keys = iter(jax.random.split(key, 32))
    L = NUM_LAYERS
    bf = jnp.bfloat16
    inv_sqrt_d = jnp.float32(1.0 / math.sqrt(HEAD_DIM))

    # fused QKV weight; fold 1/sqrt(head_dim) into the Q columns (weight + bias)
    qkv_w = norm(next(keys), (L, HIDDEN, 3 * HIDDEN))
    qkv_w = qkv_w.at[:, :, :HIDDEN].multiply(inv_sqrt_d)
    qkv_b = jnp.zeros((L, 3 * HIDDEN), jnp.float32)
    qkv_b = qkv_b.at[:, :HIDDEN].multiply(inv_sqrt_d)

    # classifier padded to 128 lanes: pad weight cols = 0, pad bias cols = -1e9
    cls_w = jnp.zeros((HIDDEN, VOCAB_PAD), jnp.float32)
    cls_w = cls_w.at[:, :VOCAB].set(norm(next(keys), (HIDDEN, VOCAB)))
    cls_b = jnp.zeros((VOCAB,), jnp.float32)

    # pack every small f32 bias/LN vector into one (VEC_ROWS, 128) array
    vec = jnp.zeros((VEC_ROWS, VEC_W), jnp.float32)
    vec = vec.at[V_EMB_G, :HIDDEN].set(1.0)                        # emb LN gamma
    for l in range(L):
        vec = vec.at[_lrow(l, 0), :3 * HIDDEN].set(qkv_b[l])       # qkv bias (Q pre-scaled)
        vec = vec.at[_lrow(l, 2), :HIDDEN].set(1.0)                # ln1 gamma
        vec = vec.at[_lrow(l, 6), :HIDDEN].set(1.0)                # ln2 gamma
    vec = vec.at[V_CLS_B, :VOCAB].set(cls_b)
    vec = vec.at[V_CLS_B, VOCAB:].set(-1e9)                        # kill padded logits

    return {
        "word_emb": norm(next(keys), (VOCAB, HIDDEN)),
        "pos_emb": norm(next(keys), (MAX_POS, HIDDEN)),
        "type_emb": norm(next(keys), (2, HIDDEN)),
        "vec": vec,
        # matmul weights stored as bf16 MXU operands
        "qkv_w": qkv_w.astype(bf),
        "o_w": norm(next(keys), (L, HIDDEN, HIDDEN)).astype(bf),
        "i_w": norm(next(keys), (L, HIDDEN, INTERMEDIATE)).astype(bf),
        "f_w": norm(next(keys), (L, INTERMEDIATE, HIDDEN)).astype(bf),
        "cls_w": cls_w.astype(bf),
    }


# ---------------- host-side forward --------------------------------------------
def _embed(params, x_ids):
    B, S = x_ids.shape
    x = (jnp.take(params["word_emb"], x_ids, axis=0)
         + params["pos_emb"][:S][None]
         + params["type_emb"][0][None, None])
    return x.reshape(B * S, HIDDEN)


def _generate_mask(seq_len):
    # exact replication of LanguageModel.generate_mask (per-batch, 1 = attend)
    mask = jnp.tril(jnp.ones((seq_len, seq_len), jnp.float32))
    n = min(S1_LEN, seq_len)
    mask = mask.at[:n, :n].set(1.0)
    # for i in range(s1_len, seq_len): mask[i, :i+1] = 1  -> already 1 from tril
    return mask


def _additive_mask(batch, seq, causal):
    # (B*S, B*S) additive mask: batch loop folded into rows, so off-diagonal
    # (cross-batch) blocks are always masked out with -1e9.
    allow = _generate_mask(seq) if causal else jnp.ones((seq, seq), jnp.float32)
    full = jnp.kron(jnp.eye(batch, dtype=jnp.float32), allow)
    return (1.0 - full) * jnp.float32(-1e9)


def _kernel_inputs(params, x_emb, add_mask):
    return (x_emb, add_mask, params["vec"],
            params["qkv_w"], params["o_w"], params["i_w"], params["f_w"],
            params["cls_w"])


def lm_forward(params, x_ids, y=None):
    B, S = x_ids.shape
    x_emb = _embed(params, x_ids)

    if y is not None:
        add_mask = _additive_mask(B, S, causal=True)       # generate_mask path
        loss = pl.pallas_call(
            _loss_kernel,
            out_shape=jax.ShapeDtypeStruct((1, 1), jnp.float32),
        )(*_kernel_inputs(params, x_emb, add_mask),
          y.reshape(B * S, 1).astype(jnp.int32))
        return loss[0, 0]

    add_mask = _additive_mask(B, S, causal=False)          # BERT default: full attention
    probs = pl.pallas_call(
        _predict_kernel,
        out_shape=jax.ShapeDtypeStruct((B * S, VOCAB_PAD), jnp.float32),
    )(*_kernel_inputs(params, x_emb, add_mask))
    return probs[:, :VOCAB].reshape(B, S, VOCAB)           # drop lane padding


# ---------------- main ----------------------------------------------------------
if __name__ == "__main__":
    key = jax.random.PRNGKey(0)
    k_param, k_x, k_y = jax.random.split(key, 3)

    params = init_params(k_param)
    x_ids = jax.random.randint(k_x, (BATCH, SEQ), 0, VOCAB, dtype=jnp.int32)
    y_ids = jax.random.randint(k_y, (BATCH, SEQ), 1, VOCAB, dtype=jnp.int32)
    y_ids = y_ids.at[:, 0].set(0)   # some ignore_index=0 positions

    predict_fn = jax.jit(lambda p, x: lm_forward(p, x))
    loss_fn = jax.jit(lambda p, x, y: lm_forward(p, x, y))

    probs = jax.block_until_ready(predict_fn(params, x_ids))     # (B, S, V)
    loss = jax.block_until_ready(loss_fn(params, x_ids, y_ids))  # scalar

    assert probs.shape == (BATCH, SEQ, VOCAB)
    assert bool(jnp.all(jnp.isfinite(probs)))
    assert bool(jnp.isfinite(loss))
    print("KERNEL_OK")
</pallas_src>

<mosaic_0001>
module attributes {stable_mosaic.version = 11 : i64} {
  func.func @_predict_kernel(%arg0: memref<64x32xf32, #tpu.memory_space<vmem>>, %arg1: memref<64x64xf32, #tpu.memory_space<vmem>>, %arg2: memref<19x128xf32, #tpu.memory_space<vmem>>, %arg3: memref<2x32x96xbf16, #tpu.memory_space<vmem>>, %arg4: memref<2x32x32xbf16, #tpu.memory_space<vmem>>, %arg5: memref<2x32x64xbf16, #tpu.memory_space<vmem>>, %arg6: memref<2x64x32xbf16, #tpu.memory_space<vmem>>, %arg7: memref<32x128xbf16, #tpu.memory_space<vmem>>, %arg8: memref<64x128xf32, #tpu.memory_space<vmem>>) attributes {dimension_semantics = [], scalar_prefetch = 0 : i64, scratch_operands = 0 : i64, tpu.core_type = #tpu.core_type<tc>} {
    %c0 = arith.constant 0 : index
    %c0_0 = arith.constant 0 : index
    %0 = vector.load %arg2[%c0, %c0_0] : memref<19x128xf32, #tpu.memory_space<vmem>>, vector<19x128xf32>
    %c0_1 = arith.constant 0 : index
    %c0_2 = arith.constant 0 : index
    %1 = vector.load %arg0[%c0_1, %c0_2] : memref<64x32xf32, #tpu.memory_space<vmem>>, vector<64x32xf32>
    %2 = vector.extract_strided_slice %0 {offsets = [0, 0], sizes = [1, 32], strides = [1, 1]} : vector<19x128xf32> to vector<1x32xf32>
    %3 = vector.extract_strided_slice %0 {offsets = [1, 0], sizes = [1, 32], strides = [1, 1]} : vector<19x128xf32> to vector<1x32xf32>
    %cst = arith.constant dense<0.000000e+00> : vector<64xf32>
    %4 = vector.multi_reduction <add>, %1, %cst [1] : vector<64x32xf32> to vector<64xf32>
    %5 = vector.shape_cast %4 : vector<64xf32> to vector<64x1xf32>
    %cst_3 = arith.constant 3.200000e+01 : f32
    %6 = vector.broadcast %cst_3 : f32 to vector<64x1xf32>
    %7 = arith.divf %5, %6 : vector<64x1xf32>
    %8 = vector.broadcast %7 : vector<64x1xf32> to vector<64x32xf32>
    %9 = arith.subf %1, %8 : vector<64x32xf32>
    %10 = arith.mulf %9, %9 : vector<64x32xf32>
    %cst_4 = arith.constant dense<0.000000e+00> : vector<64xf32>
    %11 = vector.multi_reduction <add>, %10, %cst_4 [1] : vector<64x32xf32> to vector<64xf32>
    %12 = vector.shape_cast %11 : vector<64xf32> to vector<64x1xf32>
    %cst_5 = arith.constant 3.200000e+01 : f32
    %13 = vector.broadcast %cst_5 : f32 to vector<64x1xf32>
    %14 = arith.divf %12, %13 : vector<64x1xf32>
    %15 = vector.broadcast %7 : vector<64x1xf32> to vector<64x32xf32>
    %16 = arith.subf %1, %15 : vector<64x32xf32>
    %cst_6 = arith.constant 9.99999996E-13 : f32
    %17 = vector.broadcast %cst_6 : f32 to vector<64x1xf32>
    %18 = arith.addf %14, %17 : vector<64x1xf32>
    %19 = math.rsqrt %18 : vector<64x1xf32>
    %20 = vector.broadcast %19 : vector<64x1xf32> to vector<64x32xf32>
    %21 = arith.mulf %16, %20 : vector<64x32xf32>
    %22 = vector.broadcast %2 : vector<1x32xf32> to vector<64x32xf32>
    %23 = arith.mulf %21, %22 : vector<64x32xf32>
    %24 = vector.broadcast %3 : vector<1x32xf32> to vector<64x32xf32>
    %25 = arith.addf %23, %24 : vector<64x32xf32>
    %c0_7 = arith.constant 0 : index
    %c0_8 = arith.constant 0 : index
    %26 = vector.load %arg1[%c0_7, %c0_8] : memref<64x64xf32, #tpu.memory_space<vmem>>, vector<64x64xf32>
    %27 = vector.extract_strided_slice %0 {offsets = [2, 0], sizes = [1, 96], strides = [1, 1]} : vector<19x128xf32> to vector<1x96xf32>
    %28 = vector.extract_strided_slice %0 {offsets = [3, 0], sizes = [1, 32], strides = [1, 1]} : vector<19x128xf32> to vector<1x32xf32>
    %29 = vector.extract_strided_slice %0 {offsets = [4, 0], sizes = [1, 32], strides = [1, 1]} : vector<19x128xf32> to vector<1x32xf32>
    %30 = vector.extract_strided_slice %0 {offsets = [5, 0], sizes = [1, 32], strides = [1, 1]} : vector<19x128xf32> to vector<1x32xf32>
    %31 = vector.extract_strided_slice %0 {offsets = [6, 0], sizes = [1, 64], strides = [1, 1]} : vector<19x128xf32> to vector<1x64xf32>
    %32 = vector.extract_strided_slice %0 {offsets = [7, 0], sizes = [1, 32], strides = [1, 1]} : vector<19x128xf32> to vector<1x32xf32>
    %33 = vector.extract_strided_slice %0 {offsets = [8, 0], sizes = [1, 32], strides = [1, 1]} : vector<19x128xf32> to vector<1x32xf32>
    %34 = vector.extract_strided_slice %0 {offsets = [9, 0], sizes = [1, 32], strides = [1, 1]} : vector<19x128xf32> to vector<1x32xf32>
    %c0_9 = arith.constant 0 : index
    %c0_10 = arith.constant 0 : index
    %c0_11 = arith.constant 0 : index
    %35 = vector.load %arg3[%c0_9, %c0_10, %c0_11] : memref<2x32x96xbf16, #tpu.memory_space<vmem>>, vector<1x32x96xbf16>
    %36 = vector.shape_cast %35 : vector<1x32x96xbf16> to vector<32x96xbf16>
    %37 = arith.truncf %25 : vector<64x32xf32> to vector<64x32xbf16>
    %cst_12 = arith.constant dense<0.000000e+00> : vector<64x96xf32>
    %38 = tpu.matmul %37, %36, %cst_12 {dimension_numbers = #tpu.dot_dimension_numbers<[1], [0], [0], [1], [0, 0, 1, 1], [], []>} : vector<64x32xbf16>, vector<32x96xbf16>, vector<64x96xf32> -> vector<64x96xf32>
    %39 = vector.broadcast %27 : vector<1x96xf32> to vector<64x96xf32>
    %40 = arith.addf %38, %39 : vector<64x96xf32>
    %41 = vector.extract_strided_slice %40 {offsets = [0, 0], sizes = [64, 16], strides = [1, 1]} : vector<64x96xf32> to vector<64x16xf32>
    %42 = vector.extract_strided_slice %40 {offsets = [0, 32], sizes = [64, 16], strides = [1, 1]} : vector<64x96xf32> to vector<64x16xf32>
    %43 = vector.extract_strided_slice %40 {offsets = [0, 64], sizes = [64, 16], strides = [1, 1]} : vector<64x96xf32> to vector<64x16xf32>
    %44 = arith.truncf %41 : vector<64x16xf32> to vector<64x16xbf16>
    %45 = arith.truncf %42 : vector<64x16xf32> to vector<64x16xbf16>
    %cst_13 = arith.constant dense<0.000000e+00> : vector<64x64xf32>
    %46 = tpu.matmul %44, %45, %cst_13 {dimension_numbers = #tpu.dot_dimension_numbers<[1], [1], [0], [0], [0, 0, 1, 0], [], []>} : vector<64x16xbf16>, vector<64x16xbf16>, vector<64x64xf32> -> vector<64x64xf32>
    %47 = arith.addf %46, %26 : vector<64x64xf32>
    %cst_14 = arith.constant dense<0xFF800000> : vector<64xf32>
    %48 = vector.multi_reduction <maximumf>, %47, %cst_14 [1] : vector<64x64xf32> to vector<64xf32>
    %49 = vector.shape_cast %48 : vector<64xf32> to vector<64x1xf32>
    %50 = vector.broadcast %49 : vector<64x1xf32> to vector<64x64xf32>
    %51 = arith.subf %47, %50 : vector<64x64xf32>
    %52 = math.exp %51 : vector<64x64xf32>
    %cst_15 = arith.constant dense<0.000000e+00> : vector<64xf32>
    %53 = vector.multi_reduction <add>, %52, %cst_15 [1] : vector<64x64xf32> to vector<64xf32>
    %54 = vector.shape_cast %53 : vector<64xf32> to vector<64x1xf32>
    %55 = tpu.reciprocal %54 {approx = true} : vector<64x1xf32> -> vector<64x1xf32>
    %56 = vector.broadcast %55 : vector<64x1xf32> to vector<64x64xf32>
    %57 = arith.mulf %52, %56 : vector<64x64xf32>
    %58 = arith.truncf %57 : vector<64x64xf32> to vector<64x64xbf16>
    %59 = arith.truncf %43 : vector<64x16xf32> to vector<64x16xbf16>
    %cst_16 = arith.constant dense<0.000000e+00> : vector<64x16xf32>
    %60 = tpu.matmul %58, %59, %cst_16 {dimension_numbers = #tpu.dot_dimension_numbers<[1], [0], [0], [1], [0, 0, 1, 1], [], []>} : vector<64x64xbf16>, vector<64x16xbf16>, vector<64x16xf32> -> vector<64x16xf32>
    %61 = vector.extract_strided_slice %40 {offsets = [0, 16], sizes = [64, 16], strides = [1, 1]} : vector<64x96xf32> to vector<64x16xf32>
    %62 = vector.extract_strided_slice %40 {offsets = [0, 48], sizes = [64, 16], strides = [1, 1]} : vector<64x96xf32> to vector<64x16xf32>
    %63 = vector.extract_strided_slice %40 {offsets = [0, 80], sizes = [64, 16], strides = [1, 1]} : vector<64x96xf32> to vector<64x16xf32>
    %64 = arith.truncf %61 : vector<64x16xf32> to vector<64x16xbf16>
    %65 = arith.truncf %62 : vector<64x16xf32> to vector<64x16xbf16>
    %cst_17 = arith.constant dense<0.000000e+00> : vector<64x64xf32>
    %66 = tpu.matmul %64, %65, %cst_17 {dimension_numbers = #tpu.dot_dimension_numbers<[1], [1], [0], [0], [0, 0, 1, 0], [], []>} : vector<64x16xbf16>, vector<64x16xbf16>, vector<64x64xf32> -> vector<64x64xf32>
    %67 = arith.addf %66, %26 : vector<64x64xf32>
    %cst_18 = arith.constant dense<0xFF800000> : vector<64xf32>
    %68 = vector.multi_reduction <maximumf>, %67, %cst_18 [1] : vector<64x64xf32> to vector<64xf32>
    %69 = vector.shape_cast %68 : vector<64xf32> to vector<64x1xf32>
    %70 = vector.broadcast %69 : vector<64x1xf32> to vector<64x64xf32>
    %71 = arith.subf %67, %70 : vector<64x64xf32>
    %72 = math.exp %71 : vector<64x64xf32>
    %cst_19 = arith.constant dense<0.000000e+00> : vector<64xf32>
    %73 = vector.multi_reduction <add>, %72, %cst_19 [1] : vector<64x64xf32> to vector<64xf32>
    %74 = vector.shape_cast %73 : vector<64xf32> to vector<64x1xf32>
    %75 = tpu.reciprocal %74 {approx = true} : vector<64x1xf32> -> vector<64x1xf32>
    %76 = vector.broadcast %75 : vector<64x1xf32> to vector<64x64xf32>
    %77 = arith.mulf %72, %76 : vector<64x64xf32>
    %78 = arith.truncf %77 : vector<64x64xf32> to vector<64x64xbf16>
    %79 = arith.truncf %63 : vector<64x16xf32> to vector<64x16xbf16>
    %cst_20 = arith.constant dense<0.000000e+00> : vector<64x16xf32>
    %80 = tpu.matmul %78, %79, %cst_20 {dimension_numbers = #tpu.dot_dimension_numbers<[1], [0], [0], [1], [0, 0, 1, 1], [], []>} : vector<64x64xbf16>, vector<64x16xbf16>, vector<64x16xf32> -> vector<64x16xf32>
    %81 = tpu.concatenate %60, %80 in 1 : vector<64x16xf32>, vector<64x16xf32> -> vector<64x32xf32>
    %c0_21 = arith.constant 0 : index
    %c0_22 = arith.constant 0 : index
    %c0_23 = arith.constant 0 : index
    %82 = vector.load %arg4[%c0_21, %c0_22, %c0_23] : memref<2x32x32xbf16, #tpu.memory_space<vmem>>, vector<1x32x32xbf16>
    %83 = vector.shape_cast %82 : vector<1x32x32xbf16> to vector<32x32xbf16>
    %84 = arith.truncf %81 : vector<64x32xf32> to vector<64x32xbf16>
    %cst_24 = arith.constant dense<0.000000e+00> : vector<64x32xf32>
    %85 = tpu.matmul %84, %83, %cst_24 {dimension_numbers = #tpu.dot_dimension_numbers<[1], [0], [0], [1], [0, 0, 1, 1], [], []>} : vector<64x32xbf16>, vector<32x32xbf16>, vector<64x32xf32> -> vector<64x32xf32>
    %86 = vector.broadcast %28 : vector<1x32xf32> to vector<64x32xf32>
    %87 = arith.addf %85, %86 : vector<64x32xf32>
    %88 = arith.addf %87, %25 : vector<64x32xf32>
    %cst_25 = arith.constant dense<0.000000e+00> : vector<64xf32>
    %89 = vector.multi_reduction <add>, %88, %cst_25 [1] : vector<64x32xf32> to vector<64xf32>
    %90 = vector.shape_cast %89 : vector<64xf32> to vector<64x1xf32>
    %cst_26 = arith.constant 3.200000e+01 : f32
    %91 = vector.broadcast %cst_26 : f32 to vector<64x1xf32>
    %92 = arith.divf %90, %91 : vector<64x1xf32>
    %93 = vector.broadcast %92 : vector<64x1xf32> to vector<64x32xf32>
    %94 = arith.subf %88, %93 : vector<64x32xf32>
    %95 = arith.mulf %94, %94 : vector<64x32xf32>
    %cst_27 = arith.constant dense<0.000000e+00> : vector<64xf32>
    %96 = vector.multi_reduction <add>, %95, %cst_27 [1] : vector<64x32xf32> to vector<64xf32>
    %97 = vector.shape_cast %96 : vector<64xf32> to vector<64x1xf32>
    %cst_28 = arith.constant 3.200000e+01 : f32
    %98 = vector.broadcast %cst_28 : f32 to vector<64x1xf32>
    %99 = arith.divf %97, %98 : vector<64x1xf32>
    %100 = vector.broadcast %92 : vector<64x1xf32> to vector<64x32xf32>
    %101 = arith.subf %88, %100 : vector<64x32xf32>
    %cst_29 = arith.constant 9.99999996E-13 : f32
    %102 = vector.broadcast %cst_29 : f32 to vector<64x1xf32>
    %103 = arith.addf %99, %102 : vector<64x1xf32>
    %104 = math.rsqrt %103 : vector<64x1xf32>
    %105 = vector.broadcast %104 : vector<64x1xf32> to vector<64x32xf32>
    %106 = arith.mulf %101, %105 : vector<64x32xf32>
    %107 = vector.broadcast %29 : vector<1x32xf32> to vector<64x32xf32>
    %108 = arith.mulf %106, %107 : vector<64x32xf32>
    %109 = vector.broadcast %30 : vector<1x32xf32> to vector<64x32xf32>
    %110 = arith.addf %108, %109 : vector<64x32xf32>
    %c0_30 = arith.constant 0 : index
    %c0_31 = arith.constant 0 : index
    %c0_32 = arith.constant 0 : index
    %111 = vector.load %arg5[%c0_30, %c0_31, %c0_32] : memref<2x32x64xbf16, #tpu.memory_space<vmem>>, vector<1x32x64xbf16>
    %112 = vector.shape_cast %111 : vector<1x32x64xbf16> to vector<32x64xbf16>
    %113 = arith.truncf %110 : vector<64x32xf32> to vector<64x32xbf16>
    %cst_33 = arith.constant dense<0.000000e+00> : vector<64x64xf32>
    %114 = tpu.matmul %113, %112, %cst_33 {dimension_numbers = #tpu.dot_dimension_numbers<[1], [0], [0], [1], [0, 0, 1, 1], [], []>} : vector<64x32xbf16>, vector<32x64xbf16>, vector<64x64xf32> -> vector<64x64xf32>
    %115 = vector.broadcast %31 : vector<1x64xf32> to vector<64x64xf32>
    %116 = arith.addf %114, %115 : vector<64x64xf32>
    %cst_34 = arith.constant 5.000000e-01 : f32
    %117 = vector.broadcast %cst_34 : f32 to vector<64x64xf32>
    %118 = arith.mulf %117, %116 : vector<64x64xf32>
    %cst_35 = arith.constant 0.707106769 : f32
    %119 = vector.broadcast %cst_35 : f32 to vector<64x64xf32>
    %120 = arith.mulf %116, %119 : vector<64x64xf32>
    %121 = math.erf %120 : vector<64x64xf32>
    %cst_36 = arith.constant 1.000000e+00 : f32
    %122 = vector.broadcast %cst_36 : f32 to vector<64x64xf32>
    %123 = arith.addf %122, %121 : vector<64x64xf32>
    %124 = arith.mulf %118, %123 : vector<64x64xf32>
    %c0_37 = arith.constant 0 : index
    %c0_38 = arith.constant 0 : index
    %c0_39 = arith.constant 0 : index
    %125 = vector.load %arg6[%c0_37, %c0_38, %c0_39] : memref<2x64x32xbf16, #tpu.memory_space<vmem>>, vector<1x64x32xbf16>
    %126 = vector.shape_cast %125 : vector<1x64x32xbf16> to vector<64x32xbf16>
    %127 = arith.truncf %124 : vector<64x64xf32> to vector<64x64xbf16>
    %cst_40 = arith.constant dense<0.000000e+00> : vector<64x32xf32>
    %128 = tpu.matmul %127, %126, %cst_40 {dimension_numbers = #tpu.dot_dimension_numbers<[1], [0], [0], [1], [0, 0, 1, 1], [], []>} : vector<64x64xbf16>, vector<64x32xbf16>, vector<64x32xf32> -> vector<64x32xf32>
    %129 = vector.broadcast %32 : vector<1x32xf32> to vector<64x32xf32>
    %130 = arith.addf %128, %129 : vector<64x32xf32>
    %131 = arith.addf %130, %110 : vector<64x32xf32>
    %cst_41 = arith.constant dense<0.000000e+00> : vector<64xf32>
    %132 = vector.multi_reduction <add>, %131, %cst_41 [1] : vector<64x32xf32> to vector<64xf32>
    %133 = vector.shape_cast %132 : vector<64xf32> to vector<64x1xf32>
    %cst_42 = arith.constant 3.200000e+01 : f32
    %134 = vector.broadcast %cst_42 : f32 to vector<64x1xf32>
    %135 = arith.divf %133, %134 : vector<64x1xf32>
    %136 = vector.broadcast %135 : vector<64x1xf32> to vector<64x32xf32>
    %137 = arith.subf %131, %136 : vector<64x32xf32>
    %138 = arith.mulf %137, %137 : vector<64x32xf32>
    %cst_43 = arith.constant dense<0.000000e+00> : vector<64xf32>
    %139 = vector.multi_reduction <add>, %138, %cst_43 [1] : vector<64x32xf32> to vector<64xf32>
    %140 = vector.shape_cast %139 : vector<64xf32> to vector<64x1xf32>
    %cst_44 = arith.constant 3.200000e+01 : f32
    %141 = vector.broadcast %cst_44 : f32 to vector<64x1xf32>
    %142 = arith.divf %140, %141 : vector<64x1xf32>
    %143 = vector.broadcast %135 : vector<64x1xf32> to vector<64x32xf32>
    %144 = arith.subf %131, %143 : vector<64x32xf32>
    %cst_45 = arith.constant 9.99999996E-13 : f32
    %145 = vector.broadcast %cst_45 : f32 to vector<64x1xf32>
    %146 = arith.addf %142, %145 : vector<64x1xf32>
    %147 = math.rsqrt %146 : vector<64x1xf32>
    %148 = vector.broadcast %147 : vector<64x1xf32> to vector<64x32xf32>
    %149 = arith.mulf %144, %148 : vector<64x32xf32>
    %150 = vector.broadcast %33 : vector<1x32xf32> to vector<64x32xf32>
    %151 = arith.mulf %149, %150 : vector<64x32xf32>
    %152 = vector.broadcast %34 : vector<1x32xf32> to vector<64x32xf32>
    %153 = arith.addf %151, %152 : vector<64x32xf32>
    %154 = vector.extract_strided_slice %0 {offsets = [10, 0], sizes = [1, 96], strides = [1, 1]} : vector<19x128xf32> to vector<1x96xf32>
    %155 = vector.extract_strided_slice %0 {offsets = [11, 0], sizes = [1, 32], strides = [1, 1]} : vector<19x128xf32> to vector<1x32xf32>
    %156 = vector.extract_strided_slice %0 {offsets = [12, 0], sizes = [1, 32], strides = [1, 1]} : vector<19x128xf32> to vector<1x32xf32>
    %157 = vector.extract_strided_slice %0 {offsets = [13, 0], sizes = [1, 32], strides = [1, 1]} : vector<19x128xf32> to vector<1x32xf32>
    %158 = vector.extract_strided_slice %0 {offsets = [14, 0], sizes = [1, 64], strides = [1, 1]} : vector<19x128xf32> to vector<1x64xf32>
    %159 = vector.extract_strided_slice %0 {offsets = [15, 0], sizes = [1, 32], strides = [1, 1]} : vector<19x128xf32> to vector<1x32xf32>
    %160 = vector.extract_strided_slice %0 {offsets = [16, 0], sizes = [1, 32], strides = [1, 1]} : vector<19x128xf32> to vector<1x32xf32>
    %161 = vector.extract_strided_slice %0 {offsets = [17, 0], sizes = [1, 32], strides = [1, 1]} : vector<19x128xf32> to vector<1x32xf32>
    %c1 = arith.constant 1 : index
    %c0_46 = arith.constant 0 : index
    %c0_47 = arith.constant 0 : index
    %162 = vector.load %arg3[%c1, %c0_46, %c0_47] : memref<2x32x96xbf16, #tpu.memory_space<vmem>>, vector<1x32x96xbf16>
    %163 = vector.shape_cast %162 : vector<1x32x96xbf16> to vector<32x96xbf16>
    %164 = arith.truncf %153 : vector<64x32xf32> to vector<64x32xbf16>
    %cst_48 = arith.constant dense<0.000000e+00> : vector<64x96xf32>
    %165 = tpu.matmul %164, %163, %cst_48 {dimension_numbers = #tpu.dot_dimension_numbers<[1], [0], [0], [1], [0, 0, 1, 1], [], []>} : vector<64x32xbf16>, vector<32x96xbf16>, vector<64x96xf32> -> vector<64x96xf32>
    %166 = vector.broadcast %154 : vector<1x96xf32> to vector<64x96xf32>
    %167 = arith.addf %165, %166 : vector<64x96xf32>
    %168 = vector.extract_strided_slice %167 {offsets = [0, 0], sizes = [64, 16], strides = [1, 1]} : vector<64x96xf32> to vector<64x16xf32>
    %169 = vector.extract_strided_slice %167 {offsets = [0, 32], sizes = [64, 16], strides = [1, 1]} : vector<64x96xf32> to vector<64x16xf32>
    %170 = vector.extract_strided_slice %167 {offsets = [0, 64], sizes = [64, 16], strides = [1, 1]} : vector<64x96xf32> to vector<64x16xf32>
    %171 = arith.truncf %168 : vector<64x16xf32> to vector<64x16xbf16>
    %172 = arith.truncf %169 : vector<64x16xf32> to vector<64x16xbf16>
    %cst_49 = arith.constant dense<0.000000e+00> : vector<64x64xf32>
    %173 = tpu.matmul %171, %172, %cst_49 {dimension_numbers = #tpu.dot_dimension_numbers<[1], [1], [0], [0], [0, 0, 1, 0], [], []>} : vector<64x16xbf16>, vector<64x16xbf16>, vector<64x64xf32> -> vector<64x64xf32>
    %174 = arith.addf %173, %26 : vector<64x64xf32>
    %cst_50 = arith.constant dense<0xFF800000> : vector<64xf32>
    %175 = vector.multi_reduction <maximumf>, %174, %cst_50 [1] : vector<64x64xf32> to vector<64xf32>
    %176 = vector.shape_cast %175 : vector<64xf32> to vector<64x1xf32>
    %177 = vector.broadcast %176 : vector<64x1xf32> to vector<64x64xf32>
    %178 = arith.subf %174, %177 : vector<64x64xf32>
    %179 = math.exp %178 : vector<64x64xf32>
    %cst_51 = arith.constant dense<0.000000e+00> : vector<64xf32>
    %180 = vector.multi_reduction <add>, %179, %cst_51 [1] : vector<64x64xf32> to vector<64xf32>
    %181 = vector.shape_cast %180 : vector<64xf32> to vector<64x1xf32>
    %182 = tpu.reciprocal %181 {approx = true} : vector<64x1xf32> -> vector<64x1xf32>
    %183 = vector.broadcast %182 : vector<64x1xf32> to vector<64x64xf32>
    %184 = arith.mulf %179, %183 : vector<64x64xf32>
    %185 = arith.truncf %184 : vector<64x64xf32> to vector<64x64xbf16>
    %186 = arith.truncf %170 : vector<64x16xf32> to vector<64x16xbf16>
    %cst_52 = arith.constant dense<0.000000e+00> : vector<64x16xf32>
    %187 = tpu.matmul %185, %186, %cst_52 {dimension_numbers = #tpu.dot_dimension_numbers<[1], [0], [0], [1], [0, 0, 1, 1], [], []>} : vector<64x64xbf16>, vector<64x16xbf16>, vector<64x16xf32> -> vector<64x16xf32>
    %188 = vector.extract_strided_slice %167 {offsets = [0, 16], sizes = [64, 16], strides = [1, 1]} : vector<64x96xf32> to vector<64x16xf32>
    %189 = vector.extract_strided_slice %167 {offsets = [0, 48], sizes = [64, 16], strides = [1, 1]} : vector<64x96xf32> to vector<64x16xf32>
    %190 = vector.extract_strided_slice %167 {offsets = [0, 80], sizes = [64, 16], strides = [1, 1]} : vector<64x96xf32> to vector<64x16xf32>
    %191 = arith.truncf %188 : vector<64x16xf32> to vector<64x16xbf16>
    %192 = arith.truncf %189 : vector<64x16xf32> to vector<64x16xbf16>
    %cst_53 = arith.constant dense<0.000000e+00> : vector<64x64xf32>
    %193 = tpu.matmul %191, %192, %cst_53 {dimension_numbers = #tpu.dot_dimension_numbers<[1], [1], [0], [0], [0, 0, 1, 0], [], []>} : vector<64x16xbf16>, vector<64x16xbf16>, vector<64x64xf32> -> vector<64x64xf32>
    %194 = arith.addf %193, %26 : vector<64x64xf32>
    %cst_54 = arith.constant dense<0xFF800000> : vector<64xf32>
    %195 = vector.multi_reduction <maximumf>, %194, %cst_54 [1] : vector<64x64xf32> to vector<64xf32>
    %196 = vector.shape_cast %195 : vector<64xf32> to vector<64x1xf32>
    %197 = vector.broadcast %196 : vector<64x1xf32> to vector<64x64xf32>
    %198 = arith.subf %194, %197 : vector<64x64xf32>
    %199 = math.exp %198 : vector<64x64xf32>
    %cst_55 = arith.constant dense<0.000000e+00> : vector<64xf32>
    %200 = vector.multi_reduction <add>, %199, %cst_55 [1] : vector<64x64xf32> to vector<64xf32>
    %201 = vector.shape_cast %200 : vector<64xf32> to vector<64x1xf32>
    %202 = tpu.reciprocal %201 {approx = true} : vector<64x1xf32> -> vector<64x1xf32>
    %203 = vector.broadcast %202 : vector<64x1xf32> to vector<64x64xf32>
    %204 = arith.mulf %199, %203 : vector<64x64xf32>
    %205 = arith.truncf %204 : vector<64x64xf32> to vector<64x64xbf16>
    %206 = arith.truncf %190 : vector<64x16xf32> to vector<64x16xbf16>
    %cst_56 = arith.constant dense<0.000000e+00> : vector<64x16xf32>
    %207 = tpu.matmul %205, %206, %cst_56 {dimension_numbers = #tpu.dot_dimension_numbers<[1], [0], [0], [1], [0, 0, 1, 1], [], []>} : vector<64x64xbf16>, vector<64x16xbf16>, vector<64x16xf32> -> vector<64x16xf32>
    %208 = tpu.concatenate %187, %207 in 1 : vector<64x16xf32>, vector<64x16xf32> -> vector<64x32xf32>
    %c1_57 = arith.constant 1 : index
    %c0_58 = arith.constant 0 : index
    %c0_59 = arith.constant 0 : index
    %209 = vector.load %arg4[%c1_57, %c0_58, %c0_59] : memref<2x32x32xbf16, #tpu.memory_space<vmem>>, vector<1x32x32xbf16>
    %210 = vector.shape_cast %209 : vector<1x32x32xbf16> to vector<32x32xbf16>
    %211 = arith.truncf %208 : vector<64x32xf32> to vector<64x32xbf16>
    %cst_60 = arith.constant dense<0.000000e+00> : vector<64x32xf32>
    %212 = tpu.matmul %211, %210, %cst_60 {dimension_numbers = #tpu.dot_dimension_numbers<[1], [0], [0], [1], [0, 0, 1, 1], [], []>} : vector<64x32xbf16>, vector<32x32xbf16>, vector<64x32xf32> -> vector<64x32xf32>
    %213 = vector.broadcast %155 : vector<1x32xf32> to vector<64x32xf32>
    %214 = arith.addf %212, %213 : vector<64x32xf32>
    %215 = arith.addf %214, %153 : vector<64x32xf32>
    %cst_61 = arith.constant dense<0.000000e+00> : vector<64xf32>
    %216 = vector.multi_reduction <add>, %215, %cst_61 [1] : vector<64x32xf32> to vector<64xf32>
    %217 = vector.shape_cast %216 : vector<64xf32> to vector<64x1xf32>
    %cst_62 = arith.constant 3.200000e+01 : f32
    %218 = vector.broadcast %cst_62 : f32 to vector<64x1xf32>
    %219 = arith.divf %217, %218 : vector<64x1xf32>
    %220 = vector.broadcast %219 : vector<64x1xf32> to vector<64x32xf32>
    %221 = arith.subf %215, %220 : vector<64x32xf32>
    %222 = arith.mulf %221, %221 : vector<64x32xf32>
    %cst_63 = arith.constant dense<0.000000e+00> : vector<64xf32>
    %223 = vector.multi_reduction <add>, %222, %cst_63 [1] : vector<64x32xf32> to vector<64xf32>
    %224 = vector.shape_cast %223 : vector<64xf32> to vector<64x1xf32>
    %cst_64 = arith.constant 3.200000e+01 : f32
    %225 = vector.broadcast %cst_64 : f32 to vector<64x1xf32>
    %226 = arith.divf %224, %225 : vector<64x1xf32>
    %227 = vector.broadcast %219 : vector<64x1xf32> to vector<64x32xf32>
    %228 = arith.subf %215, %227 : vector<64x32xf32>
    %cst_65 = arith.constant 9.99999996E-13 : f32
    %229 = vector.broadcast %cst_65 : f32 to vector<64x1xf32>
    %230 = arith.addf %226, %229 : vector<64x1xf32>
    %231 = math.rsqrt %230 : vector<64x1xf32>
    %232 = vector.broadcast %231 : vector<64x1xf32> to vector<64x32xf32>
    %233 = arith.mulf %228, %232 : vector<64x32xf32>
    %234 = vector.broadcast %156 : vector<1x32xf32> to vector<64x32xf32>
    %235 = arith.mulf %233, %234 : vector<64x32xf32>
    %236 = vector.broadcast %157 : vector<1x32xf32> to vector<64x32xf32>
    %237 = arith.addf %235, %236 : vector<64x32xf32>
    %c1_66 = arith.constant 1 : index
    %c0_67 = arith.constant 0 : index
    %c0_68 = arith.constant 0 : index
    %238 = vector.load %arg5[%c1_66, %c0_67, %c0_68] : memref<2x32x64xbf16, #tpu.memory_space<vmem>>, vector<1x32x64xbf16>
    %239 = vector.shape_cast %238 : vector<1x32x64xbf16> to vector<32x64xbf16>
    %240 = arith.truncf %237 : vector<64x32xf32> to vector<64x32xbf16>
    %cst_69 = arith.constant dense<0.000000e+00> : vector<64x64xf32>
    %241 = tpu.matmul %240, %239, %cst_69 {dimension_numbers = #tpu.dot_dimension_numbers<[1], [0], [0], [1], [0, 0, 1, 1], [], []>} : vector<64x32xbf16>, vector<32x64xbf16>, vector<64x64xf32> -> vector<64x64xf32>
    %242 = vector.broadcast %158 : vector<1x64xf32> to vector<64x64xf32>
    %243 = arith.addf %241, %242 : vector<64x64xf32>
    %cst_70 = arith.constant 5.000000e-01 : f32
    %244 = vector.broadcast %cst_70 : f32 to vector<64x64xf32>
    %245 = arith.mulf %244, %243 : vector<64x64xf32>
    %cst_71 = arith.constant 0.707106769 : f32
    %246 = vector.broadcast %cst_71 : f32 to vector<64x64xf32>
    %247 = arith.mulf %243, %246 : vector<64x64xf32>
    %248 = math.erf %247 : vector<64x64xf32>
    %cst_72 = arith.constant 1.000000e+00 : f32
    %249 = vector.broadcast %cst_72 : f32 to vector<64x64xf32>
    %250 = arith.addf %249, %248 : vector<64x64xf32>
    %251 = arith.mulf %245, %250 : vector<64x64xf32>
    %c1_73 = arith.constant 1 : index
    %c0_74 = arith.constant 0 : index
    %c0_75 = arith.constant 0 : index
    %252 = vector.load %arg6[%c1_73, %c0_74, %c0_75] : memref<2x64x32xbf16, #tpu.memory_space<vmem>>, vector<1x64x32xbf16>
    %253 = vector.shape_cast %252 : vector<1x64x32xbf16> to vector<64x32xbf16>
    %254 = arith.truncf %251 : vector<64x64xf32> to vector<64x64xbf16>
    %cst_76 = arith.constant dense<0.000000e+00> : vector<64x32xf32>
    %255 = tpu.matmul %254, %253, %cst_76 {dimension_numbers = #tpu.dot_dimension_numbers<[1], [0], [0], [1], [0, 0, 1, 1], [], []>} : vector<64x64xbf16>, vector<64x32xbf16>, vector<64x32xf32> -> vector<64x32xf32>
    %256 = vector.broadcast %159 : vector<1x32xf32> to vector<64x32xf32>
    %257 = arith.addf %255, %256 : vector<64x32xf32>
    %258 = arith.addf %257, %237 : vector<64x32xf32>
    %cst_77 = arith.constant dense<0.000000e+00> : vector<64xf32>
    %259 = vector.multi_reduction <add>, %258, %cst_77 [1] : vector<64x32xf32> to vector<64xf32>
    %260 = vector.shape_cast %259 : vector<64xf32> to vector<64x1xf32>
    %cst_78 = arith.constant 3.200000e+01 : f32
    %261 = vector.broadcast %cst_78 : f32 to vector<64x1xf32>
    %262 = arith.divf %260, %261 : vector<64x1xf32>
    %263 = vector.broadcast %262 : vector<64x1xf32> to vector<64x32xf32>
    %264 = arith.subf %258, %263 : vector<64x32xf32>
    %265 = arith.mulf %264, %264 : vector<64x32xf32>
    %cst_79 = arith.constant dense<0.000000e+00> : vector<64xf32>
    %266 = vector.multi_reduction <add>, %265, %cst_79 [1] : vector<64x32xf32> to vector<64xf32>
    %267 = vector.shape_cast %266 : vector<64xf32> to vector<64x1xf32>
    %cst_80 = arith.constant 3.200000e+01 : f32
    %268 = vector.broadcast %cst_80 : f32 to vector<64x1xf32>
    %269 = arith.divf %267, %268 : vector<64x1xf32>
    %270 = vector.broadcast %262 : vector<64x1xf32> to vector<64x32xf32>
    %271 = arith.subf %258, %270 : vector<64x32xf32>
    %cst_81 = arith.constant 9.99999996E-13 : f32
    %272 = vector.broadcast %cst_81 : f32 to vector<64x1xf32>
    %273 = arith.addf %269, %272 : vector<64x1xf32>
    %274 = math.rsqrt %273 : vector<64x1xf32>
    %275 = vector.broadcast %274 : vector<64x1xf32> to vector<64x32xf32>
    %276 = arith.mulf %271, %275 : vector<64x32xf32>
    %277 = vector.broadcast %160 : vector<1x32xf32> to vector<64x32xf32>
    %278 = arith.mulf %276, %277 : vector<64x32xf32>
    %279 = vector.broadcast %161 : vector<1x32xf32> to vector<64x32xf32>
    %280 = arith.addf %278, %279 : vector<64x32xf32>
    %c0_82 = arith.constant 0 : index
    %c0_83 = arith.constant 0 : index
    %281 = vector.load %arg7[%c0_82, %c0_83] : memref<32x128xbf16, #tpu.memory_space<vmem>>, vector<32x128xbf16>
    %282 = arith.truncf %280 : vector<64x32xf32> to vector<64x32xbf16>
    %cst_84 = arith.constant dense<0.000000e+00> : vector<64x128xf32>
    %283 = tpu.matmul %282, %281, %cst_84 {dimension_numbers = #tpu.dot_dimension_numbers<[1], [0], [0], [1], [0, 0, 1, 1], [], []>} : vector<64x32xbf16>, vector<32x128xbf16>, vector<64x128xf32> -> vector<64x128xf32>
    %284 = vector.extract_strided_slice %0 {offsets = [18, 0], sizes = [1, 128], strides = [1, 1]} : vector<19x128xf32> to vector<1x128xf32>
    %285 = vector.broadcast %284 : vector<1x128xf32> to vector<64x128xf32>
    %286 = arith.addf %283, %285 : vector<64x128xf32>
    %cst_85 = arith.constant dense<0xFF800000> : vector<64xf32>
    %287 = vector.multi_reduction <maximumf>, %286, %cst_85 [1] : vector<64x128xf32> to vector<64xf32>
    %288 = vector.shape_cast %287 : vector<64xf32> to vector<64x1xf32>
    %289 = vector.broadcast %288 : vector<64x1xf32> to vector<64x128xf32>
    %290 = arith.subf %286, %289 : vector<64x128xf32>
    %291 = math.exp %290 : vector<64x128xf32>
    %cst_86 = arith.constant dense<0.000000e+00> : vector<64xf32>
    %292 = vector.multi_reduction <add>, %291, %cst_86 [1] : vector<64x128xf32> to vector<64xf32>
    %293 = vector.shape_cast %292 : vector<64xf32> to vector<64x1xf32>
    %294 = vector.broadcast %293 : vector<64x1xf32> to vector<64x128xf32>
    %295 = arith.divf %291, %294 : vector<64x128xf32>
    %c0_87 = arith.constant 0 : index
    %c0_88 = arith.constant 0 : index
    %296 = vector.load %arg8[%c0_87, %c0_88] : memref<64x128xf32, #tpu.memory_space<vmem>>, vector<64x128xf32>
    tpu.vector_store %arg8[%c0_87, %c0_88], %295 {strides = array<i32>} : memref<64x128xf32, #tpu.memory_space<vmem>>, vector<64x128xf32>,
    return
  }
}

</mosaic_0001>

<llo_original>
// kernel: _lambda_.1
$region0: #{_lambda_.1}
  #allocation0 [shape = 'u32[]', space=smem, size = 0x4, offset = 0x4, fixed_abs, tag = 'smem constant byte address 0x4 - core index']
  #allocation1 [shape = 'u32[72,128]{1,0:T(1,128)}', space=vmem, size = 0x9000, scoped, tag = 'internal scratch']
  %s0 = inlined_call_operand.vmem [shape: f32[64,32], index: 0, kind: input, shape index: {}]
  %s1 = inlined_call_operand.vmem [shape: f32[64,64], index: 1, kind: input, shape index: {}]
  %s2 = inlined_call_operand.vmem [shape: f32[19,128], index: 2, kind: input, shape index: {}]
  %s3 = inlined_call_operand.vmem [shape: bf16[2,32,96], index: 3, kind: input, shape index: {}]
  %s4 = inlined_call_operand.vmem [shape: bf16[2,32,32], index: 4, kind: input, shape index: {}]
  %s5 = inlined_call_operand.vmem [shape: bf16[2,32,64], index: 5, kind: input, shape index: {}]
  %s6 = inlined_call_operand.vmem [shape: bf16[2,64,32], index: 6, kind: input, shape index: {}]
  %s7 = inlined_call_operand.vmem [shape: bf16[32,128], index: 7, kind: input, shape index: {}]
  %s8 = inlined_call_operand.hbm [shape: f32[64,128], index: 8, kind: output, shape index: {}]
  %s9 = sld [smem:[#allocation0]]
  $region42: #{_lambda_.1} parent=0
    _
  %s11 = ssub.s32 1, %s9
  %s12 = scalar_select 0, %s11, %s9
  $region1: #{_lambda_.1} parent=0
    #allocation2 [shape = 'u8[32768]{0}', space=vmem, size = 0x8000, scoped, tag = 'output window, operand 0, single buffered']
    #allocation3 [shape = 's32[1]{0}', space=sflag, size = 0x4, scoped, tag = 'scoped memory for _lambda_.1']
    %13 = vsyncpa [#allocation3], 0
    // Predicated region
    $region2: #{_lambda_.1} parent=1 // pred_check
      _
    $region3: #{_lambda_.1} parent=1 // pred_check_branch
      %15 = sbr.rel (0) target = $region5
    $region4: #{_lambda_.1} parent=1 // pred_region
      _
    $region5: #{_lambda_.1} parent=1 // pred_fallthru
      _
    // Predicated region
    $region6: #{_lambda_.1} parent=1 // pred_check
      _
    $region7: #{_lambda_.1} parent=1 // pred_check_branch
      %17 = sbr.rel (0) target = $region9
    $region8: #{_lambda_.1} parent=1 // pred_region
      _
    $region9: #{_lambda_.1} parent=1 // pred_fallthru
      _
    // Predicated region
    $region10: #{_lambda_.1} parent=1 // pred_check
      _
    $region11: #{_lambda_.1} parent=1 // pred_check_branch
      %19 = sbr.rel (0) target = $region13
    $region12: #{_lambda_.1} parent=1 // pred_region
      _
    $region13: #{_lambda_.1} parent=1 // pred_fallthru
      _
    // Predicated region
    $region14: #{_lambda_.1} parent=1 // pred_check
      _
    $region15: #{_lambda_.1} parent=1 // pred_check_branch
      %21 = sbr.rel (0) target = $region17
    $region16: #{_lambda_.1} parent=1 // pred_region
      _
    $region17: #{_lambda_.1} parent=1 // pred_fallthru
      _
    // Predicated region
    $region18: #{_lambda_.1} parent=1 // pred_check
      _
    $region19: #{_lambda_.1} parent=1 // pred_check_branch
      %23 = sbr.rel (0) target = $region21
    $region20: #{_lambda_.1} parent=1 // pred_region
      _
    $region21: #{_lambda_.1} parent=1 // pred_fallthru
      _
    // Predicated region
    $region22: #{_lambda_.1} parent=1 // pred_check
      _
    $region23: #{_lambda_.1} parent=1 // pred_check_branch
      %25 = sbr.rel (0) target = $region25
    $region24: #{_lambda_.1} parent=1 // pred_region
      _
    $region25: #{_lambda_.1} parent=1 // pred_fallthru
      _
    // Predicated region
    $region26: #{_lambda_.1} parent=1 // pred_check
      _
    $region27: #{_lambda_.1} parent=1 // pred_check_branch
      %27 = sbr.rel (0) target = $region29
    $region28: #{_lambda_.1} parent=1 // pred_region
      _
    $region29: #{_lambda_.1} parent=1 // pred_fallthru
      _
    // Predicated region
    $region30: #{_lambda_.1} parent=1 // pred_check
      _
    $region31: #{_lambda_.1} parent=1 // pred_check_branch
      %29 = sbr.rel (0) target = $region33
    $region32: #{_lambda_.1} parent=1 // pred_region
      _
    $region33: #{_lambda_.1} parent=1 // pred_fallthru
      _
    %v31 = vld [vmem:[%s2] sm:$0xff]
    %v32 = vld [vmem:[%s2 + $0x8] sm:$0xff]
    %v33 = vld [vmem:[%s2 + $0x10] sm:$0x7]
    %v34 = vld [vmem:[%s0] sm:$0xff]
    %v35 = vld [vmem:[%s0 + $0x8] sm:$0xff]
    %v36 = vld [vmem:[%s0 + $0x10] sm:$0xff]
    %v37 = vld [vmem:[%s0 + $0x18] sm:$0xff]
    %v38 = vld [vmem:[%s0 + $0x20] sm:$0xff]
    %v39 = vld [vmem:[%s0 + $0x28] sm:$0xff]
    %v40 = vld [vmem:[%s0 + $0x30] sm:$0xff]
    %v41 = vld [vmem:[%s0 + $0x38] sm:$0xff]
    %vm42 = vcmask 261120
    %v43 = vsel %vm42, %v34, 0.0
    %44 = vadd.xlane.f32.xlu0 %v43
    %v45 = vpop.xlane.xlu0 %44
    %v46 = vsel %vm42, %v35, 0.0
    %47 = vadd.xlane.f32.xlu0 %v46
    %v48 = vpop.xlane.xlu0 %47
    %v49 = vsel %vm42, %v36, 0.0
    %50 = vadd.xlane.f32.xlu0 %v49
    %v51 = vpop.xlane.xlu0 %50
    %v52 = vsel %vm42, %v37, 0.0
    %53 = vadd.xlane.f32.xlu0 %v52
    %v54 = vpop.xlane.xlu0 %53
    %v55 = vsel %vm42, %v38, 0.0
    %56 = vadd.xlane.f32.xlu0 %v55
    %v57 = vpop.xlane.xlu0 %56
    %v58 = vsel %vm42, %v39, 0.0
    %59 = vadd.xlane.f32.xlu0 %v58
    %v60 = vpop.xlane.xlu0 %59
    %v61 = vsel %vm42, %v40, 0.0
    %62 = vadd.xlane.f32.xlu0 %v61
    %v63 = vpop.xlane.xlu0 %62
    %v64 = vsel %vm42, %v41, 0.0
    %65 = vadd.xlane.f32.xlu0 %v64
    %v66 = vpop.xlane.xlu0 %65
    %v67 = vrcp.pop 32.0
    %v68 = vmul.f32 32.0, %v67
    %v69 = vsub.f32 1.0, %v68
    %v70 = vmul.f32 %v67, %v69
    %v71 = vadd.f32 %v67, %v70
    %vm72 = vweird.f32 %v67
    %v73 = vsel %vm72, %v67, %v71
    %v74 = vmul.f32 %v45, %v73
    %v75 = vmul.f32 %v48, %v73
    %v76 = vmul.f32 %v51, %v73
    %v77 = vmul.f32 %v54, %v73
    %v78 = vmul.f32 %v57, %v73
    %v79 = vmul.f32 %v60, %v73
    %v80 = vmul.f32 %v63, %v73
    %v81 = vmul.f32 %v66, %v73
    %v82 = vsub.f32 %v34, %v74
    %v83 = vsub.f32 %v35, %v75
    %v84 = vsub.f32 %v36, %v76
    %v85 = vsub.f32 %v37, %v77
    %v86 = vsub.f32 %v38, %v78
    %v87 = vsub.f32 %v39, %v79
    %v88 = vsub.f32 %v40, %v80
    %v89 = vsub.f32 %v41, %v81
    %v90 = vmul.f32 %v82, %v82
    %v91 = vmul.f32 %v83, %v83
    %v92 = vmul.f32 %v84, %v84
    %v93 = vmul.f32 %v85, %v85
    %v94 = vmul.f32 %v86, %v86
    %v95 = vmul.f32 %v87, %v87
    %v96 = vmul.f32 %v88, %v88
    %v97 = vmul.f32 %v89, %v89
    %v98 = vsel %vm42, %v90, 0.0
    %99 = vadd.xlane.f32.xlu0 %v98
    %v100 = vpop.xlane.xlu0 %99
    %v101 = vsel %vm42, %v91, 0.0
    %102 = vadd.xlane.f32.xlu0 %v101
    %v103 = vpop.xlane.xlu0 %102
    %v104 = vsel %vm42, %v92, 0.0
    %105 = vadd.xlane.f32.xlu0 %v104
    %v106 = vpop.xlane.xlu0 %105
    %v107 = vsel %vm42, %v93, 0.0
    %108 = vadd.xlane.f32.xlu0 %v107
    %v109 = vpop.xlane.xlu0 %108
    %v110 = vsel %vm42, %v94, 0.0
    %111 = vadd.xlane.f32.xlu0 %v110
    %v112 = vpop.xlane.xlu0 %111
    %v113 = vsel %vm42, %v95, 0.0
    %114 = vadd.xlane.f32.xlu0 %v113
    %v115 = vpop.xlane.xlu0 %114
    %v116 = vsel %vm42, %v96, 0.0
    %117 = vadd.xlane.f32.xlu0 %v116
    %v118 = vpop.xlane.xlu0 %117
    %v119 = vsel %vm42, %v97, 0.0
    %120 = vadd.xlane.f32.xlu0 %v119
    %v121 = vpop.xlane.xlu0 %120
    %v122 = vmul.f32 %v100, %v73
    %v123 = vmul.f32 %v103, %v73
    %v124 = vmul.f32 %v106, %v73
    %v125 = vmul.f32 %v109, %v73
    %v126 = vmul.f32 %v112, %v73
    %v127 = vmul.f32 %v115, %v73
    %v128 = vmul.f32 %v118, %v73
    %v129 = vmul.f32 %v121, %v73
    %v130 = vadd.f32 %v122, 1e-12
    %v131 = vadd.f32 %v123, 1e-12
    %v132 = vadd.f32 %v124, 1e-12
    %v133 = vadd.f32 %v125, 1e-12
    %v134 = vadd.f32 %v126, 1e-12
    %v135 = vadd.f32 %v127, 1e-12
    %v136 = vadd.f32 %v128, 1e-12
    %v137 = vadd.f32 %v129, 1e-12
    %v138 = vrsqrt.pop %v130
    %v139 = vmul.f32 %v138, %v130
    %v140 = vmul.f32 %v139, %v138
    %v141 = vmul.f32 0.5, %v140
    %v142 = vsub.f32 1.5, %v141
    %v143 = vmul.f32 %v138, %v142
    %vm144 = vweird.f32 %v130
    %vm145 = vweird.f32 %v138
    %vm146 = vmor %vm144, %vm145
    %v147 = vsel %vm146, %v138, %v143
    %v148 = vrsqrt.pop %v131
    %v149 = vmul.f32 %v148, %v131
    %v150 = vmul.f32 %v149, %v148
    %v151 = vmul.f32 0.5, %v150
    %v152 = vsub.f32 1.5, %v151
    %v153 = vmul.f32 %v148, %v152
    %vm154 = vweird.f32 %v131
    %vm155 = vweird.f32 %v148
    %vm156 = vmor %vm154, %vm155
    %v157 = vsel %vm156, %v148, %v153
    %v158 = vrsqrt.pop %v132
    %v159 = vmul.f32 %v158, %v132
    %v160 = vmul.f32 %v159, %v158
    %v161 = vmul.f32 0.5, %v160
    %v162 = vsub.f32 1.5, %v161
    %v163 = vmul.f32 %v158, %v162
    %vm164 = vweird.f32 %v132
    %vm165 = vweird.f32 %v158
    %vm166 = vmor %vm164, %vm165
    %v167 = vsel %vm166, %v158, %v163
    %v168 = vrsqrt.pop %v133
    %v169 = vmul.f32 %v168, %v133
    %v170 = vmul.f32 %v169, %v168
    %v171 = vmul.f32 0.5, %v170
    %v172 = vsub.f32 1.5, %v171
    %v173 = vmul.f32 %v168, %v172
    %vm174 = vweird.f32 %v133
    %vm175 = vweird.f32 %v168
    %vm176 = vmor %vm174, %vm175
    %v177 = vsel %vm176, %v168, %v173
    %v178 = vrsqrt.pop %v134
    %v179 = vmul.f32 %v178, %v134
    %v180 = vmul.f32 %v179, %v178
    %v181 = vmul.f32 0.5, %v180
    %v182 = vsub.f32 1.5, %v181
    %v183 = vmul.f32 %v178, %v182
    %vm184 = vweird.f32 %v134
    %vm185 = vweird.f32 %v178
    %vm186 = vmor %vm184, %vm185
    %v187 = vsel %vm186, %v178, %v183
    %v188 = vrsqrt.pop %v135
    %v189 = vmul.f32 %v188, %v135
    %v190 = vmul.f32 %v189, %v188
    %v191 = vmul.f32 0.5, %v190
    %v192 = vsub.f32 1.5, %v191
    %v193 = vmul.f32 %v188, %v192
    %vm194 = vweird.f32 %v135
    %vm195 = vweird.f32 %v188
    %vm196 = vmor %vm194, %vm195
    %v197 = vsel %vm196, %v188, %v193
    %v198 = vrsqrt.pop %v136
    %v199 = vmul.f32 %v198, %v136
    %v200 = vmul.f32 %v199, %v198
    %v201 = vmul.f32 0.5, %v200
    %v202 = vsub.f32 1.5, %v201
    %v203 = vmul.f32 %v198, %v202
    %vm204 = vweird.f32 %v136
    %vm205 = vweird.f32 %v198
    %vm206 = vmor %vm204, %vm205
    %v207 = vsel %vm206, %v198, %v203
    %v208 = vrsqrt.pop %v137
    %v209 = vmul.f32 %v208, %v137
    %v210 = vmul.f32 %v209, %v208
    %v211 = vmul.f32 0.5, %v210
    %v212 = vsub.f32 1.5, %v211
    %v213 = vmul.f32 %v208, %v212
    %vm214 = vweird.f32 %v137
    %vm215 = vweird.f32 %v208
    %vm216 = vmor %vm214, %vm215
    %v217 = vsel %vm216, %v208, %v213
    %v218 = vmul.f32 %v82, %v147
    %v219 = vmul.f32 %v83, %v157
    %v220 = vmul.f32 %v84, %v167
    %v221 = vmul.f32 %v85, %v177
    %v222 = vmul.f32 %v86, %v187
    %v223 = vmul.f32 %v87, %v197
    %v224 = vmul.f32 %v88, %v207
    %v225 = vmul.f32 %v89, %v217
    %v226 = vperm.slane %v31, 0
    %v227 = vmul.f32 %v218, %v226
    %v228 = vmul.f32 %v219, %v226
    %v229 = vmul.f32 %v220, %v226
    %v230 = vmul.f32 %v221, %v226
    %v231 = vmul.f32 %v222, %v226
    %v232 = vmul.f32 %v223, %v226
    %v233 = vmul.f32 %v224, %v226
    %v234 = vmul.f32 %v225, %v226
    %v235 = vperm.slane %v31, 1
    %v236 = vadd.f32 %v227, %v235
    %v237 = vadd.f32 %v228, %v235
    %v238 = vadd.f32 %v229, %v235
    %v239 = vadd.f32 %v230, %v235
    %v240 = vadd.f32 %v231, %v235
    %v241 = vadd.f32 %v232, %v235
    %v242 = vadd.f32 %v233, %v235
    %v243 = vadd.f32 %v234, %v235
    %v244 = vld [vmem:[%s1] sm:$0xff]
    %v245 = vld [vmem:[%s1 + $0x8] sm:$0xff]
    %v246 = vld [vmem:[%s1 + $0x10] sm:$0xff]
    %v247 = vld [vmem:[%s1 + $0x18] sm:$0xff]
    %v248 = vld [vmem:[%s1 + $0x20] sm:$0xff]
    %v249 = vld [vmem:[%s1 + $0x28] sm:$0xff]
    %v250 = vld [vmem:[%s1 + $0x30] sm:$0xff]
    %v251 = vld [vmem:[%s1 + $0x38] sm:$0xff]
    %v252 = vld [vmem:[%s3] sm:$0xf]
    %v253 = vld [vmem:[%s3 + $0x4] sm:$0xf]
    %v254 = vld [vmem:[%s3 + $0x8] sm:$0xf]
    %v255 = vld [vmem:[%s3 + $0xc] sm:$0xf]
    %v256 = vpack.c.bf16 %v237, %v236
    %v257 = vpack.c.bf16 %v239, %v238
    %v258 = vpack.c.bf16 %v241, %v240
    %v259 = vpack.c.bf16 %v243, %v242
    %v260 = vperm.slane %v31, 2
    %v265 = vunpack.c.l.b16 %v252
    %v266 = vunpack.c.l.b16 %v253
    %v267 = vunpack.c.l.b16 %v254
    %v268 = vunpack.c.l.b16 %v255
    %v269 = vpack.c.b16 %v266, %v265
    %v270 = vpack.c.b16 %v268, %v267
    %v274 = vsel %vm42, %v256, 0
    %v277 = vsel %vm42, %v257, 0
    %v280 = vsel %vm42, %v258, 0
    %v283 = vsel %vm42, %v259, 0
    %285 = vmatpush.bf16.msra.mxu0 0
    %286 = vmatpush.bf16.msra.mxu0 0
    %287 = vmatpush.bf16.msra.mxu0 0
    %288 = vmatpush.bf16.msra.mxu0 0
    %289 = vmatpush.bf16.msra.mxu0 0
    %290 = vmatpush.bf16.msra.mxu0 0
    %291 = vmatpush.bf16.msra.mxu0 %v270
    %292 = vmatpush.bf16.msra.mxu0 %v269
    %293 = vmatmul.bf16.gmra.mxu0 %v274
    %v294 = vpop.f32.mrf.mxu0
    %v295 = vadd.f32 %v260, %v294
    %v296 = vpop.f32.mrf.mxu0
    %v297 = vadd.f32 %v260, %v296
    %298 = vmatmul.bf16.gmra.mxu0 %v277
    %v299 = vpop.f32.mrf.mxu0
    %v300 = vadd.f32 %v260, %v299
    %v301 = vpop.f32.mrf.mxu0
    %v302 = vadd.f32 %v260, %v301
    %303 = vmatmul.bf16.gmra.mxu0 %v280
    %v304 = vpop.f32.mrf.mxu0
    %v305 = vadd.f32 %v260, %v304
    %v306 = vpop.f32.mrf.mxu0
    %v307 = vadd.f32 %v260, %v306
    %308 = vmatmul.bf16.gmra.mxu0 %v283
    %v309 = vpop.f32.mrf.mxu0
    %v310 = vadd.f32 %v260, %v309
    %v311 = vpop.f32.mrf.mxu0
    %v312 = vadd.f32 %v260, %v311
    %313 = vdwg.mxu0
    %v314 = vpack.c.bf16 %v297, %v295
    %v315 = vpack.c.bf16 %v302, %v300
    %v316 = vpack.c.bf16 %v307, %v305
    %v317 = vpack.c.bf16 %v312, %v310
    %322 = vrot.lane.b32.xlu0 %v314, 96
    %v323 = vpop.permute.xlu0 %322
    %324 = vrot.lane.b32.xlu0 %v315, 96
    %v325 = vpop.permute.xlu0 %324
    %326 = vrot.lane.b32.xlu0 %v316, 96
    %v327 = vpop.permute.xlu0 %326
    %328 = vrot.lane.b32.xlu0 %v317, 96
    %v329 = vpop.permute.xlu0 %328
    %vm330 = vcmask 130048
    %v332 = vsel %vm330, %v314, 0
    %v335 = vsel %vm330, %v315, 0
    %v338 = vsel %vm330, %v316, 0
    %v341 = vsel %vm330, %v317, 0
    %v344 = vsel %vm330, %v323, 0
    %v347 = vsel %vm330, %v325, 0
    %v350 = vsel %vm330, %v327, 0
    %v353 = vsel %vm330, %v329, 0
    %355 = vmatpush.bf16.xpose.msra.mxu0 0
    %356 = vmatpush.bf16.xpose.msra.mxu0 0
    %357 = vmatpush.bf16.xpose.msra.mxu0 0
    %358 = vmatpush.bf16.xpose.msra.mxu0 0
    %359 = vmatpush.bf16.xpose.msra.mxu0 %v353
    %360 = vmatpush.bf16.xpose.msra.mxu0 %v350
    %361 = vmatpush.bf16.xpose.msra.mxu0 %v347
    %362 = vmatpush.bf16.xpose.msra.mxu0 %v344
    %363 = vmatmul.bf16.gmra.mxu0 %v332
    %v364 = vpop.f32.mrf.mxu0
    %v365 = vadd.f32 %v244, %v364
    %v366 = vpop.f32.mrf.mxu0
    %v367 = vadd.f32 %v245, %v366
    %368 = vmatmul.bf16.gmra.mxu0 %v335
    %v369 = vpop.f32.mrf.mxu0
    %v370 = vadd.f32 %v246, %v369
    %v371 = vpop.f32.mrf.mxu0
    %v372 = vadd.f32 %v247, %v371
    %373 = vmatmul.bf16.gmra.mxu0 %v338
    %v374 = vpop.f32.mrf.mxu0
    %v375 = vadd.f32 %v248, %v374
    %v376 = vpop.f32.mrf.mxu0
    %v377 = vadd.f32 %v249, %v376
    %378 = vmatmul.bf16.gmra.mxu0 %v341
    %v379 = vpop.f32.mrf.mxu0
    %v380 = vadd.f32 %v250, %v379
    %v381 = vpop.f32.mrf.mxu0
    %v382 = vadd.f32 %v251, %v381
    %383 = vdwg.mxu0
    %vm384 = vcmask 523264
    %v385 = vsel %vm384, %v365, -inf
    %386 = vmax.xlane.f32.xlu0 %v385
    %v387 = vpop.xlane.xlu0 %386
    %v388 = vsel %vm384, %v367, -inf
    %389 = vmax.xlane.f32.xlu0 %v388
    %v390 = vpop.xlane.xlu0 %389
    %v391 = vsel %vm384, %v370, -inf
    %392 = vmax.xlane.f32.xlu0 %v391
    %v393 = vpop.xlane.xlu0 %392
    %v394 = vsel %vm384, %v372, -inf
    %395 = vmax.xlane.f32.xlu0 %v394
    %v396 = vpop.xlane.xlu0 %395
    %v397 = vsel %vm384, %v375, -inf
    %398 = vmax.xlane.f32.xlu0 %v397
    %v399 = vpop.xlane.xlu0 %398
    %v400 = vsel %vm384, %v377, -inf
    %401 = vmax.xlane.f32.xlu0 %v400
    %v402 = vpop.xlane.xlu0 %401
    %v403 = vsel %vm384, %v380, -inf
    %404 = vmax.xlane.f32.xlu0 %v403
    %v405 = vpop.xlane.xlu0 %404
    %v406 = vsel %vm384, %v382, -inf
    %407 = vmax.xlane.f32.xlu0 %v406
    %v408 = vpop.xlane.xlu0 %407
    %v409 = vsub.f32 %v365, %v387
    %v410 = vsub.f32 %v367, %v390
    %v411 = vsub.f32 %v370, %v393
    %v412 = vsub.f32 %v372, %v396
    %v413 = vsub.f32 %v375, %v399
    %v414 = vsub.f32 %v377, %v402
    %v415 = vsub.f32 %v380, %v405
    %v416 = vsub.f32 %v382, %v408
    %v417 = vmul.f32 %v409, 1.442695
    %v418 = vpow.pop %v417
    %v419 = vmul.f32 %v410, 1.442695
    %v420 = vpow.pop %v419
    %v421 = vmul.f32 %v411, 1.442695
    %v422 = vpow.pop %v421
    %v423 = vmul.f32 %v412, 1.442695
    %v424 = vpow.pop %v423
    %v425 = vmul.f32 %v413, 1.442695
    %v426 = vpow.pop %v425
    %v427 = vmul.f32 %v414, 1.442695
    %v428 = vpow.pop %v427
    %v429 = vmul.f32 %v415, 1.442695
    %v430 = vpow.pop %v429
    %v431 = vmul.f32 %v416, 1.442695
    %v432 = vpow.pop %v431
    %v433 = vsel %vm384, %v418, 0.0
    %434 = vadd.xlane.f32.xlu0 %v433
    %v435 = vpop.xlane.xlu0 %434
    %v436 = vsel %vm384, %v420, 0.0
    %437 = vadd.xlane.f32.xlu0 %v436
    %v438 = vpop.xlane.xlu0 %437
    %v439 = vsel %vm384, %v422, 0.0
    %440 = vadd.xlane.f32.xlu0 %v439
    %v441 = vpop.xlane.xlu0 %440
    %v442 = vsel %vm384, %v424, 0.0
    %443 = vadd.xlane.f32.xlu0 %v442
    %v444 = vpop.xlane.xlu0 %443
    %v445 = vsel %vm384, %v426, 0.0
    %446 = vadd.xlane.f32.xlu0 %v445
    %v447 = vpop.xlane.xlu0 %446
    %v448 = vsel %vm384, %v428, 0.0
    %449 = vadd.xlane.f32.xlu0 %v448
    %v450 = vpop.xlane.xlu0 %449
    %v451 = vsel %vm384, %v430, 0.0
    %452 = vadd.xlane.f32.xlu0 %v451
    %v453 = vpop.xlane.xlu0 %452
    %v454 = vsel %vm384, %v432, 0.0
    %455 = vadd.xlane.f32.xlu0 %v454
    %v456 = vpop.xlane.xlu0 %455
    %v457 = vrcp.pop %v435
    %v458 = vrcp.pop %v438
    %v459 = vrcp.pop %v441
    %v460 = vrcp.pop %v444
    %v461 = vrcp.pop %v447
    %v462 = vrcp.pop %v450
    %v463 = vrcp.pop %v453
    %v464 = vrcp.pop %v456
    %v465 = vmul.f32 %v418, %v457
    %v466 = vmul.f32 %v420, %v458
    %v467 = vmul.f32 %v422, %v459
    %v468 = vmul.f32 %v424, %v460
    %v469 = vmul.f32 %v426, %v461
    %v470 = vmul.f32 %v428, %v462
    %v471 = vmul.f32 %v430, %v463
    %v472 = vmul.f32 %v432, %v464
    %v473 = vpack.c.bf16 %v466, %v465
    %v474 = vpack.c.bf16 %v468, %v467
    %v475 = vpack.c.bf16 %v470, %v469
    %v476 = vpack.c.bf16 %v472, %v471
    %477 = vrot.lane.b32.xlu0 %v314, 64
    %v478 = vpop.permute.xlu0 %477
    %479 = vrot.lane.b32.xlu0 %v315, 64
    %v480 = vpop.permute.xlu0 %479
    %481 = vrot.lane.b32.xlu0 %v316, 64
    %v482 = vpop.permute.xlu0 %481
    %483 = vrot.lane.b32.xlu0 %v317, 64
    %v484 = vpop.permute.xlu0 %483
    %v490 = vsel %vm384, %v473, 0
    %v493 = vsel %vm384, %v474, 0
    %v496 = vsel %vm384, %v475, 0
    %v499 = vsel %vm384, %v476, 0
    %501 = vmatpush.bf16.msra.mxu0 0
    %502 = vmatpush.bf16.msra.mxu0 0
    %503 = vmatpush.bf16.msra.mxu0 0
    %504 = vmatpush.bf16.msra.mxu0 0
    %505 = vmatpush.bf16.msra.mxu0 %v484
    %506 = vmatpush.bf16.msra.mxu0 %v482
    %507 = vmatpush.bf16.msra.mxu0 %v480
    %508 = vmatpush.bf16.msra.mxu0 %v478
    %509 = vmatmul.bf16.gmra.mxu0 %v490
    %v510 = vpop.f32.mrf.mxu0
    %v511 = vadd.f32 0.0, %v510
    %v512 = vpop.f32.mrf.mxu0
    %v513 = vadd.f32 0.0, %v512
    %514 = vmatmul.bf16.gmra.mxu0 %v493
    %v515 = vpop.f32.mrf.mxu0
    %v516 = vadd.f32 0.0, %v515
    %v517 = vpop.f32.mrf.mxu0
    %v518 = vadd.f32 0.0, %v517
    %519 = vmatmul.bf16.gmra.mxu0 %v496
    %v520 = vpop.f32.mrf.mxu0
    %v521 = vadd.f32 0.0, %v520
    %v522 = vpop.f32.mrf.mxu0
    %v523 = vadd.f32 0.0, %v522
    %524 = vmatmul.bf16.gmra.mxu0 %v499
    %v525 = vpop.f32.mrf.mxu0
    %v526 = vadd.f32 0.0, %v525
    %v527 = vpop.f32.mrf.mxu0
    %v528 = vadd.f32 0.0, %v527
    %529 = vdwg.mxu0
    %530 = vrot.lane.b32.xlu0 %v314, 112
    %v531 = vpop.permute.xlu0 %530
    %532 = vrot.lane.b32.xlu0 %v315, 112
    %v533 = vpop.permute.xlu0 %532
    %534 = vrot.lane.b32.xlu0 %v316, 112
    %v535 = vpop.permute.xlu0 %534
    %536 = vrot.lane.b32.xlu0 %v317, 112
    %v537 = vpop.permute.xlu0 %536
    %538 = vrot.lane.b32.xlu0 %v314, 80
    %v539 = vpop.permute.xlu0 %538
    %540 = vrot.lane.b32.xlu0 %v315, 80
    %v541 = vpop.permute.xlu0 %540
    %542 = vrot.lane.b32.xlu0 %v316, 80
    %v543 = vpop.permute.xlu0 %542
    %544 = vrot.lane.b32.xlu0 %v317, 80
    %v545 = vpop.permute.xlu0 %544
    %v547 = vsel %vm330, %v531, 0
    %v550 = vsel %vm330, %v533, 0
    %v553 = vsel %vm330, %v535, 0
    %v556 = vsel %vm330, %v537, 0
    %v559 = vsel %vm330, %v539, 0
    %v562 = vsel %vm330, %v541, 0
    %v565 = vsel %vm330, %v543, 0
    %v568 = vsel %vm330, %v545, 0
    %570 = vmatpush.bf16.xpose.msra.mxu0 0
    %571 = vmatpush.bf16.xpose.msra.mxu0 0
    %572 = vmatpush.bf16.xpose.msra.mxu0 0
    %573 = vmatpush.bf16.xpose.msra.mxu0 0
    %574 = vmatpush.bf16.xpose.msra.mxu0 %v568
    %575 = vmatpush.bf16.xpose.msra.mxu0 %v565
    %576 = vmatpush.bf16.xpose.msra.mxu0 %v562
    %577 = vmatpush.bf16.xpose.msra.mxu0 %v559
    %578 = vmatmul.bf16.gmra.mxu0 %v547
    %v579 = vpop.f32.mrf.mxu0
    %v580 = vadd.f32 %v244, %v579
    %v581 = vpop.f32.mrf.mxu0
    %v582 = vadd.f32 %v245, %v581
    %583 = vmatmul.bf16.gmra.mxu0 %v550
    %v584 = vpop.f32.mrf.mxu0
    %v585 = vadd.f32 %v246, %v584
    %v586 = vpop.f32.mrf.mxu0
    %v587 = vadd.f32 %v247, %v586
    %588 = vmatmul.bf16.gmra.mxu0 %v553
    %v589 = vpop.f32.mrf.mxu0
    %v590 = vadd.f32 %v248, %v589
    %v591 = vpop.f32.mrf.mxu0
    %v592 = vadd.f32 %v249, %v591
    %593 = vmatmul.bf16.gmra.mxu0 %v556
    %v594 = vpop.f32.mrf.mxu0
    %v595 = vadd.f32 %v250, %v594
    %v596 = vpop.f32.mrf.mxu0
    %v597 = vadd.f32 %v251, %v596
    %598 = vdwg.mxu0
    %v599 = vsel %vm384, %v580, -inf
    %600 = vmax.xlane.f32.xlu0 %v599
    %v601 = vpop.xlane.xlu0 %600
    %v602 = vsel %vm384, %v582, -inf
    %603 = vmax.xlane.f32.xlu0 %v602
    %v604 = vpop.xlane.xlu0 %603
    %v605 = vsel %vm384, %v585, -inf
    %606 = vmax.xlane.f32.xlu0 %v605
    %v607 = vpop.xlane.xlu0 %606
    %v608 = vsel %vm384, %v587, -inf
    %609 = vmax.xlane.f32.xlu0 %v608
    %v610 = vpop.xlane.xlu0 %609
    %v611 = vsel %vm384, %v590, -inf
    %612 = vmax.xlane.f32.xlu0 %v611
    %v613 = vpop.xlane.xlu0 %612
    %v614 = vsel %vm384, %v592, -inf
    %615 = vmax.xlane.f32.xlu0 %v614
    %v616 = vpop.xlane.xlu0 %615
    %v617 = vsel %vm384, %v595, -inf
    %618 = vmax.xlane.f32.xlu0 %v617
    %v619 = vpop.xlane.xlu0 %618
    %v620 = vsel %vm384, %v597, -inf
    %621 = vmax.xlane.f32.xlu0 %v620
    %v622 = vpop.xlane.xlu0 %621
    %v623 = vsub.f32 %v580, %v601
    %v624 = vsub.f32 %v582, %v604
    %v625 = vsub.f32 %v585, %v607
    %v626 = vsub.f32 %v587, %v610
    %v627 = vsub.f32 %v590, %v613
    %v628 = vsub.f32 %v592, %v616
    %v629 = vsub.f32 %v595, %v619
    %v630 = vsub.f32 %v597, %v622
    %v631 = vmul.f32 %v623, 1.442695
    %v632 = vpow.pop %v631
    %v633 = vmul.f32 %v624, 1.442695
    %v634 = vpow.pop %v633
    %v635 = vmul.f32 %v625, 1.442695
    %v636 = vpow.pop %v635
    %v637 = vmul.f32 %v626, 1.442695
    %v638 = vpow.pop %v637
    %v639 = vmul.f32 %v627, 1.442695
    %v640 = vpow.pop %v639
    %v641 = vmul.f32 %v628, 1.442695
    %v642 = vpow.pop %v641
    %v643 = vmul.f32 %v629, 1.442695
    %v644 = vpow.pop %v643
    %v645 = vmul.f32 %v630, 1.442695
    %v646 = vpow.pop %v645
    %v647 = vsel %vm384, %v632, 0.0
    %648 = vadd.xlane.f32.xlu0 %v647
    %v649 = vpop.xlane.xlu0 %648
    %v650 = vsel %vm384, %v634, 0.0
    %651 = vadd.xlane.f32.xlu0 %v650
    %v652 = vpop.xlane.xlu0 %651
    %v653 = vsel %vm384, %v636, 0.0
    %654 = vadd.xlane.f32.xlu0 %v653
    %v655 = vpop.xlane.xlu0 %654
    %v656 = vsel %vm384, %v638, 0.0
    %657 = vadd.xlane.f32.xlu0 %v656
    %v658 = vpop.xlane.xlu0 %657
    %v659 = vsel %vm384, %v640, 0.0
    %660 = vadd.xlane.f32.xlu0 %v659
    %v661 = vpop.xlane.xlu0 %660
    %v662 = vsel %vm384, %v642, 0.0
    %663 = vadd.xlane.f32.xlu0 %v662
    %v664 = vpop.xlane.xlu0 %663
    %v665 = vsel %vm384, %v644, 0.0
    %666 = vadd.xlane.f32.xlu0 %v665
    %v667 = vpop.xlane.xlu0 %666
    %v668 = vsel %vm384, %v646, 0.0
    %669 = vadd.xlane.f32.xlu0 %v668
    %v670 = vpop.xlane.xlu0 %669
    %v671 = vrcp.pop %v649
    %v672 = vrcp.pop %v652
    %v673 = vrcp.pop %v655
    %v674 = vrcp.pop %v658
    %v675 = vrcp.pop %v661
    %v676 = vrcp.pop %v664
    %v677 = vrcp.pop %v667
    %v678 = vrcp.pop %v670
    %v679 = vmul.f32 %v632, %v671
    %v680 = vmul.f32 %v634, %v672
    %v681 = vmul.f32 %v636, %v673
    %v682 = vmul.f32 %v638, %v674
    %v683 = vmul.f32 %v640, %v675
    %v684 = vmul.f32 %v642, %v676
    %v685 = vmul.f32 %v644, %v677
    %v686 = vmul.f32 %v646, %v678
    %v687 = vpack.c.bf16 %v680, %v679
    %v688 = vpack.c.bf16 %v682, %v681
    %v689 = vpack.c.bf16 %v684, %v683
    %v690 = vpack.c.bf16 %v686, %v685
    %691 = vrot.lane.b32.xlu0 %v314, 48
    %v692 = vpop.permute.xlu0 %691
    %693 = vrot.lane.b32.xlu0 %v315, 48
    %v694 = vpop.permute.xlu0 %693
    %695 = vrot.lane.b32.xlu0 %v316, 48
    %v696 = vpop.permute.xlu0 %695
    %697 = vrot.lane.b32.xlu0 %v317, 48
    %v698 = vpop.permute.xlu0 %697
    %v704 = vsel %vm384, %v687, 0
    %v707 = vsel %vm384, %v688, 0
    %v710 = vsel %vm384, %v689, 0
    %v713 = vsel %vm384, %v690, 0
    %715 = vmatpush.bf16.msra.mxu0 0
    %716 = vmatpush.bf16.msra.mxu0 0
    %717 = vmatpush.bf16.msra.mxu0 0
    %718 = vmatpush.bf16.msra.mxu0 0
    %719 = vmatpush.bf16.msra.mxu0 %v698
    %720 = vmatpush.bf16.msra.mxu0 %v696
    %721 = vmatpush.bf16.msra.mxu0 %v694
    %722 = vmatpush.bf16.msra.mxu0 %v692
    %723 = vmatmul.bf16.gmra.mxu0 %v704
    %v724 = vpop.f32.mrf.mxu0
    %v725 = vadd.f32 0.0, %v724
    %v726 = vpop.f32.mrf.mxu0
    %v727 = vadd.f32 0.0, %v726
    %728 = vmatmul.bf16.gmra.mxu0 %v707
    %v729 = vpop.f32.mrf.mxu0
    %v730 = vadd.f32 0.0, %v729
    %v731 = vpop.f32.mrf.mxu0
    %v732 = vadd.f32 0.0, %v731
    %733 = vmatmul.bf16.gmra.mxu0 %v710
    %v734 = vpop.f32.mrf.mxu0
    %v735 = vadd.f32 0.0, %v734
    %v736 = vpop.f32.mrf.mxu0
    %v737 = vadd.f32 0.0, %v736
    %738 = vmatmul.bf16.gmra.mxu0 %v713
    %v739 = vpop.f32.mrf.mxu0
    %v740 = vadd.f32 0.0, %v739
    %v741 = vpop.f32.mrf.mxu0
    %v742 = vadd.f32 0.0, %v741
    %743 = vdwg.mxu0
    %752 = vrot.lane.b32.xlu0 %v725, 16
    %v753 = vpop.permute.xlu0 %752
    %754 = vrot.lane.b32.xlu0 %v727, 16
    %v755 = vpop.permute.xlu0 %754
    %756 = vrot.lane.b32.xlu0 %v730, 16
    %v757 = vpop.permute.xlu0 %756
    %758 = vrot.lane.b32.xlu0 %v732, 16
    %v759 = vpop.permute.xlu0 %758
    %760 = vrot.lane.b32.xlu0 %v735, 16
    %v761 = vpop.permute.xlu0 %760
    %762 = vrot.lane.b32.xlu0 %v737, 16
    %v763 = vpop.permute.xlu0 %762
    %764 = vrot.lane.b32.xlu0 %v740, 16
    %v765 = vpop.permute.xlu0 %764
    %766 = vrot.lane.b32.xlu0 %v742, 16
    %v767 = vpop.permute.xlu0 %766
    %v776 = vsel %vm330, %v511, %v753
    %v777 = vsel %vm330, %v513, %v755
    %v778 = vsel %vm330, %v516, %v757
    %v779 = vsel %vm330, %v518, %v759
    %v780 = vsel %vm330, %v521, %v761
    %v781 = vsel %vm330, %v523, %v763
    %v782 = vsel %vm330, %v526, %v765
    %v783 = vsel %vm330, %v528, %v767
    %v784 = vld [vmem:[%s4] sm:$0xf]
    %v785 = vld [vmem:[%s4 + $0x4] sm:$0xf]
    %v786 = vld [vmem:[%s4 + $0x8] sm:$0xf]
    %v787 = vld [vmem:[%s4 + $0xc] sm:$0xf]
    %v788 = vpack.c.bf16 %v777, %v776
    %v789 = vpack.c.bf16 %v779, %v778
    %v790 = vpack.c.bf16 %v781, %v780
    %v791 = vpack.c.bf16 %v783, %v782
    %v792 = vperm.slane %v31, 3
    %v797 = vunpack.c.l.b16 %v784
    %v798 = vunpack.c.l.b16 %v785
    %v799 = vunpack.c.l.b16 %v786
    %v800 = vunpack.c.l.b16 %v787
    %v801 = vpack.c.b16 %v798, %v797
    %v802 = vpack.c.b16 %v800, %v799
    %v806 = vsel %vm42, %v788, 0
    %v809 = vsel %vm42, %v789, 0
    %v812 = vsel %vm42, %v790, 0
    %v815 = vsel %vm42, %v791, 0
    %817 = vmatpush.bf16.msra.mxu0 0
    %818 = vmatpush.bf16.msra.mxu0 0
    %819 = vmatpush.bf16.msra.mxu0 0
    %820 = vmatpush.bf16.msra.mxu0 0
    %821 = vmatpush.bf16.msra.mxu0 0
    %822 = vmatpush.bf16.msra.mxu0 0
    %823 = vmatpush.bf16.msra.mxu0 %v802
    %824 = vmatpush.bf16.msra.mxu0 %v801
    %825 = vmatmul.bf16.gmra.mxu0 %v806
    %v826 = vpop.f32.mrf.mxu0
    %v827 = vadd.f32 %v792, %v826
    %v828 = vpop.f32.mrf.mxu0
    %v829 = vadd.f32 %v792, %v828
    %830 = vmatmul.bf16.gmra.mxu0 %v809
    %v831 = vpop.f32.mrf.mxu0
    %v832 = vadd.f32 %v792, %v831
    %v833 = vpop.f32.mrf.mxu0
    %v834 = vadd.f32 %v792, %v833
    %835 = vmatmul.bf16.gmra.mxu0 %v812
    %v836 = vpop.f32.mrf.mxu0
    %v837 = vadd.f32 %v792, %v836
    %v838 = vpop.f32.mrf.mxu0
    %v839 = vadd.f32 %v792, %v838
    %840 = vmatmul.bf16.gmra.mxu0 %v815
    %v841 = vpop.f32.mrf.mxu0
    %v842 = vadd.f32 %v792, %v841
    %v843 = vpop.f32.mrf.mxu0
    %v844 = vadd.f32 %v792, %v843
    %845 = vdwg.mxu0
    %v846 = vadd.f32 %v827, %v236
    %v847 = vadd.f32 %v829, %v237
    %v848 = vadd.f32 %v832, %v238
    %v849 = vadd.f32 %v834, %v239
    %v850 = vadd.f32 %v837, %v240
    %v851 = vadd.f32 %v839, %v241
    %v852 = vadd.f32 %v842, %v242
    %v853 = vadd.f32 %v844, %v243
    %v854 = vsel %vm42, %v846, 0.0
    %855 = vadd.xlane.f32.xlu0 %v854
    %v856 = vpop.xlane.xlu0 %855
    %v857 = vsel %vm42, %v847, 0.0
    %858 = vadd.xlane.f32.xlu0 %v857
    %v859 = vpop.xlane.xlu0 %858
    %v860 = vsel %vm42, %v848, 0.0
    %861 = vadd.xlane.f32.xlu0 %v860
    %v862 = vpop.xlane.xlu0 %861
    %v863 = vsel %vm42, %v849, 0.0
    %864 = vadd.xlane.f32.xlu0 %v863
    %v865 = vpop.xlane.xlu0 %864
    %v866 = vsel %vm42, %v850, 0.0
    %867 = vadd.xlane.f32.xlu0 %v866
    %v868 = vpop.xlane.xlu0 %867
    %v869 = vsel %vm42, %v851, 0.0
    %870 = vadd.xlane.f32.xlu0 %v869
    %v871 = vpop.xlane.xlu0 %870
    %v872 = vsel %vm42, %v852, 0.0
    %873 = vadd.xlane.f32.xlu0 %v872
    %v874 = vpop.xlane.xlu0 %873
    %v875 = vsel %vm42, %v853, 0.0
    %876 = vadd.xlane.f32.xlu0 %v875
    %v877 = vpop.xlane.xlu0 %876
    %v878 = vmul.f32 %v856, %v73
    %v879 = vmul.f32 %v859, %v73
    %v880 = vmul.f32 %v862, %v73
    %v881 = vmul.f32 %v865, %v73
    %v882 = vmul.f32 %v868, %v73
    %v883 = vmul.f32 %v871, %v73
    %v884 = vmul.f32 %v874, %v73
    %v885 = vmul.f32 %v877, %v73
    %v886 = vsub.f32 %v846, %v878
    %v887 = vsub.f32 %v847, %v879
    %v888 = vsub.f32 %v848, %v880
    %v889 = vsub.f32 %v849, %v881
    %v890 = vsub.f32 %v850, %v882
    %v891 = vsub.f32 %v851, %v883
    %v892 = vsub.f32 %v852, %v884
    %v893 = vsub.f32 %v853, %v885
    %v894 = vmul.f32 %v886, %v886
    %v895 = vmul.f32 %v887, %v887
    %v896 = vmul.f32 %v888, %v888
    %v897 = vmul.f32 %v889, %v889
    %v898 = vmul.f32 %v890, %v890
    %v899 = vmul.f32 %v891, %v891
    %v900 = vmul.f32 %v892, %v892
    %v901 = vmul.f32 %v893, %v893
    %v902 = vsel %vm42, %v894, 0.0
    %903 = vadd.xlane.f32.xlu0 %v902
    %v904 = vpop.xlane.xlu0 %903
    %v905 = vsel %vm42, %v895, 0.0
    %906 = vadd.xlane.f32.xlu0 %v905
    %v907 = vpop.xlane.xlu0 %906
    %v908 = vsel %vm42, %v896, 0.0
    %909 = vadd.xlane.f32.xlu0 %v908
    %v910 = vpop.xlane.xlu0 %909
    %v911 = vsel %vm42, %v897, 0.0
    %912 = vadd.xlane.f32.xlu0 %v911
    %v913 = vpop.xlane.xlu0 %912
    %v914 = vsel %vm42, %v898, 0.0
    %915 = vadd.xlane.f32.xlu0 %v914
    %v916 = vpop.xlane.xlu0 %915
    %v917 = vsel %vm42, %v899, 0.0
    %918 = vadd.xlane.f32.xlu0 %v917
    %v919 = vpop.xlane.xlu0 %918
    %v920 = vsel %vm42, %v900, 0.0
    %921 = vadd.xlane.f32.xlu0 %v920
    %v922 = vpop.xlane.xlu0 %921
    %v923 = vsel %vm42, %v901, 0.0
    %924 = vadd.xlane.f32.xlu0 %v923
    %v925 = vpop.xlane.xlu0 %924
    %v926 = vmul.f32 %v904, %v73
    %v927 = vmul.f32 %v907, %v73
    %v928 = vmul.f32 %v910, %v73
    %v929 = vmul.f32 %v913, %v73
    %v930 = vmul.f32 %v916, %v73
    %v931 = vmul.f32 %v919, %v73
    %v932 = vmul.f32 %v922, %v73
    %v933 = vmul.f32 %v925, %v73
    %v934 = vadd.f32 %v926, 1e-12
    %v935 = vadd.f32 %v927, 1e-12
    %v936 = vadd.f32 %v928, 1e-12
    %v937 = vadd.f32 %v929, 1e-12
    %v938 = vadd.f32 %v930, 1e-12
    %v939 = vadd.f32 %v931, 1e-12
    %v940 = vadd.f32 %v932, 1e-12
    %v941 = vadd.f32 %v933, 1e-12
    %v942 = vrsqrt.pop %v934
    %v943 = vmul.f32 %v942, %v934
    %v944 = vmul.f32 %v943, %v942
    %v945 = vmul.f32 0.5, %v944
    %v946 = vsub.f32 1.5, %v945
    %v947 = vmul.f32 %v942, %v946
    %vm948 = vweird.f32 %v934
    %vm949 = vweird.f32 %v942
    %vm950 = vmor %vm948, %vm949
    %v951 = vsel %vm950, %v942, %v947
    %v952 = vrsqrt.pop %v935
    %v953 = vmul.f32 %v952, %v935
    %v954 = vmul.f32 %v953, %v952
    %v955 = vmul.f32 0.5, %v954
    %v956 = vsub.f32 1.5, %v955
    %v957 = vmul.f32 %v952, %v956
    %vm958 = vweird.f32 %v935
    %vm959 = vweird.f32 %v952
    %vm960 = vmor %vm958, %vm959
    %v961 = vsel %vm960, %v952, %v957
    %v962 = vrsqrt.pop %v936
    %v963 = vmul.f32 %v962, %v936
    %v964 = vmul.f32 %v963, %v962
    %v965 = vmul.f32 0.5, %v964
    %v966 = vsub.f32 1.5, %v965
    %v967 = vmul.f32 %v962, %v966
    %vm968 = vweird.f32 %v936
    %vm969 = vweird.f32 %v962
    %vm970 = vmor %vm968, %vm969
    %v971 = vsel %vm970, %v962, %v967
    %v972 = vrsqrt.pop %v937
    %v973 = vmul.f32 %v972, %v937
    %v974 = vmul.f32 %v973, %v972
    %v975 = vmul.f32 0.5, %v974
    %v976 = vsub.f32 1.5, %v975
    %v977 = vmul.f32 %v972, %v976
    %vm978 = vweird.f32 %v937
    %vm979 = vweird.f32 %v972
    %vm980 = vmor %vm978, %vm979
    %v981 = vsel %vm980, %v972, %v977
    %v982 = vrsqrt.pop %v938
    %v983 = vmul.f32 %v982, %v938
    %v984 = vmul.f32 %v983, %v982
    %v985 = vmul.f32 0.5, %v984
    %v986 = vsub.f32 1.5, %v985
    %v987 = vmul.f32 %v982, %v986
    %vm988 = vweird.f32 %v938
    %vm989 = vweird.f32 %v982
    %vm990 = vmor %vm988, %vm989
    %v991 = vsel %vm990, %v982, %v987
    %v992 = vrsqrt.pop %v939
    %v993 = vmul.f32 %v992, %v939
    %v994 = vmul.f32 %v993, %v992
    %v995 = vmul.f32 0.5, %v994
    %v996 = vsub.f32 1.5, %v995
    %v997 = vmul.f32 %v992, %v996
    %vm998 = vweird.f32 %v939
    %vm999 = vweird.f32 %v992
    %vm1000 = vmor %vm998, %vm999
    %v1001 = vsel %vm1000, %v992, %v997
    %v1002 = vrsqrt.pop %v940
    %v1003 = vmul.f32 %v1002, %v940
    %v1004 = vmul.f32 %v1003, %v1002
    %v1005 = vmul.f32 0.5, %v1004
    %v1006 = vsub.f32 1.5, %v1005
    %v1007 = vmul.f32 %v1002, %v1006
    %vm1008 = vweird.f32 %v940
    %vm1009 = vweird.f32 %v1002
    %vm1010 = vmor %vm1008, %vm1009
    %v1011 = vsel %vm1010, %v1002, %v1007
    %v1012 = vrsqrt.pop %v941
    %v1013 = vmul.f32 %v1012, %v941
    %v1014 = vmul.f32 %v1013, %v1012
    %v1015 = vmul.f32 0.5, %v1014
    %v1016 = vsub.f32 1.5, %v1015
    %v1017 = vmul.f32 %v1012, %v1016
    %vm1018 = vweird.f32 %v941
    %vm1019 = vweird.f32 %v1012
    %vm1020 = vmor %vm1018, %vm1019
    %v1021 = vsel %vm1020, %v1012, %v1017
    %v1022 = vmul.f32 %v886, %v951
    %v1023 = vmul.f32 %v887, %v961
    %v1024 = vmul.f32 %v888, %v971
    %v1025 = vmul.f32 %v889, %v981
    %v1026 = vmul.f32 %v890, %v991
    %v1027 = vmul.f32 %v891, %v1001
    %v1028 = vmul.f32 %v892, %v1011
    %v1029 = vmul.f32 %v893, %v1021
    %v1030 = vperm.slane %v31, 4
    %v1031 = vmul.f32 %v1022, %v1030
    %v1032 = vmul.f32 %v1023, %v1030
    %v1033 = vmul.f32 %v1024, %v1030
    %v1034 = vmul.f32 %v1025, %v1030
    %v1035 = vmul.f32 %v1026, %v1030
    %v1036 = vmul.f32 %v1027, %v1030
    %v1037 = vmul.f32 %v1028, %v1030
    %v1038 = vmul.f32 %v1029, %v1030
    %v1039 = vperm.slane %v31, 5
    %v1040 = vadd.f32 %v1031, %v1039
    %v1041 = vadd.f32 %v1032, %v1039
    %v1042 = vadd.f32 %v1033, %v1039
    %v1043 = vadd.f32 %v1034, %v1039
    %v1044 = vadd.f32 %v1035, %v1039
    %v1045 = vadd.f32 %v1036, %v1039
    %v1046 = vadd.f32 %v1037, %v1039
    %v1047 = vadd.f32 %v1038, %v1039
    %v1048 = vld [vmem:[%s5] sm:$0xf]
    %v1049 = vld [vmem:[%s5 + $0x4] sm:$0xf]
    %v1050 = vld [vmem:[%s5 + $0x8] sm:$0xf]
    %v1051 = vld [vmem:[%s5 + $0xc] sm:$0xf]
    %v1052 = vpack.c.bf16 %v1041, %v1040
    %v1053 = vpack.c.bf16 %v1043, %v1042
    %v1054 = vpack.c.bf16 %v1045, %v1044
    %v1055 = vpack.c.bf16 %v1047, %v1046
    %v1056 = vperm.slane %v31, 6
    %v1061 = vunpack.c.l.b16 %v1048
    %v1062 = vunpack.c.l.b16 %v1049
    %v1063 = vunpack.c.l.b16 %v1050
    %v1064 = vunpack.c.l.b16 %v1051
    %v1065 = vpack.c.b16 %v1062, %v1061
    %v1066 = vpack.c.b16 %v1064, %v1063
    %v1070 = vsel %vm42, %v1052, 0
    %v1073 = vsel %vm42, %v1053, 0
    %v1076 = vsel %vm42, %v1054, 0
    %v1079 = vsel %vm42, %v1055, 0
    %1081 = vmatpush.bf16.msra.mxu0 0
    %1082 = vmatpush.bf16.msra.mxu0 0
    %1083 = vmatpush.bf16.msra.mxu0 0
    %1084 = vmatpush.bf16.msra.mxu0 0
    %1085 = vmatpush.bf16.msra.mxu0 0
    %1086 = vmatpush.bf16.msra.mxu0 0
    %1087 = vmatpush.bf16.msra.mxu0 %v1066
    %1088 = vmatpush.bf16.msra.mxu0 %v1065
    %1089 = vmatmul.bf16.gmra.mxu0 %v1070
    %v1090 = vpop.f32.mrf.mxu0
    %v1091 = vadd.f32 %v1056, %v1090
    %v1092 = vpop.f32.mrf.mxu0
    %v1093 = vadd.f32 %v1056, %v1092
    %1094 = vmatmul.bf16.gmra.mxu0 %v1073
    %v1095 = vpop.f32.mrf.mxu0
    %v1096 = vadd.f32 %v1056, %v1095
    %v1097 = vpop.f32.mrf.mxu0
    %v1098 = vadd.f32 %v1056, %v1097
    %1099 = vmatmul.bf16.gmra.mxu0 %v1076
    %v1100 = vpop.f32.mrf.mxu0
    %v1101 = vadd.f32 %v1056, %v1100
    %v1102 = vpop.f32.mrf.mxu0
    %v1103 = vadd.f32 %v1056, %v1102
    %1104 = vmatmul.bf16.gmra.mxu0 %v1079
    %v1105 = vpop.f32.mrf.mxu0
    %v1106 = vadd.f32 %v1056, %v1105
    %v1107 = vpop.f32.mrf.mxu0
    %v1108 = vadd.f32 %v1056, %v1107
    %1109 = vdwg.mxu0
    %v1110 = vmul.f32 %v1091, 0.5
    %v1111 = vmul.f32 %v1093, 0.5
    %v1112 = vmul.f32 %v1096, 0.5
    %v1113 = vmul.f32 %v1098, 0.5
    %v1114 = vmul.f32 %v1101, 0.5
    %v1115 = vmul.f32 %v1103, 0.5
    %v1116 = vmul.f32 %v1106, 0.5
    %v1117 = vmul.f32 %v1108, 0.5
    %v1118 = vmul.f32 %v1091, 0.70710677
    %v1119 = vmul.f32 %v1093, 0.70710677
    %v1120 = vmul.f32 %v1096, 0.70710677
    %v1121 = vmul.f32 %v1098, 0.70710677
    %v1122 = vmul.f32 %v1101, 0.70710677
    %v1123 = vmul.f32 %v1103, 0.70710677
    %v1124 = vmul.f32 %v1106, 0.70710677
    %v1125 = vmul.f32 %v1108, 0.70710677
    %v1126 = vmul.f32 %v1118, %v1118
    %v1127 = vmin.f32 16.0, %v1126
    %v1128 = vmul.f32 %v1127, 2.1237322e-06
    %v1129 = vadd.f32 %v1128, 0.00028619796
    %v1130 = vmul.f32 %v1127, %v1129
    %v1131 = vadd.f32 %v1130, 0.0036580483
    %v1132 = vmul.f32 %v1127, %v1131
    %v1133 = vadd.f32 %v1132, 0.05243302
    %v1134 = vmul.f32 %v1127, %v1133
    %v1135 = vadd.f32 %v1134, 0.18741608
    %v1136 = vmul.f32 %v1127, %v1135
    %v1137 = vadd.f32 %v1136, 1.1283791
    %v1138 = vmul.f32 %v1118, %v1137
    %v1139 = vmul.f32 %v1127, 3.8918573e-05
    %v1140 = vadd.f32 %v1139, 0.001143296
    %v1141 = vmul.f32 %v1127, %v1140
    %v1142 = vadd.f32 %v1141, 0.014752088
    %v1143 = vmul.f32 %v1127, %v1142
    %v1144 = vadd.f32 %v1143, 0.112945676
    %v1145 = vmul.f32 %v1127, %v1144
    %v1146 = vadd.f32 %v1145, 0.4994258
    %v1147 = vmul.f32 %v1127, %v1146
    %v1148 = vadd.f32 %v1147, 1.0
    %v1149 = vrcp.pop %v1148
    %v1150 = vmul.f32 %v1148, %v1149
    %v1151 = vsub.f32 1.0, %v1150
    %v1152 = vmul.f32 %v1149, %v1151
    %v1153 = vadd.f32 %v1149, %v1152
    %vm1154 = vweird.f32 %v1148
    %vm1155 = vweird.f32 %v1149
    %vm1156 = vmor %vm1154, %vm1155
    %v1157 = vsel %vm1156, %v1149, %v1153
    %v1158 = vand.u32 2147483647, %v1148
    %vm1159 = vcmp.eq.f32.partialorder %v1158, 8.507059e+37
    %v1160 = vand.u32 %v1148, 2147483648
    %v1161 = vor.u32 1.1754944e-38, %v1160
    %v1162 = vsel %vm1159, %v1161, %v1157
    %v1163 = vmul.f32 %v1138, %v1162
    %v1164 = vmin.f32 %v1163, 1.0
    %v1165 = vmax.f32 %v1164, -1.0
    %v1166 = vmul.f32 %v1119, %v1119
    %v1167 = vmin.f32 16.0, %v1166
    %v1168 = vmul.f32 %v1167, 2.1237322e-06
    %v1169 = vadd.f32 %v1168, 0.00028619796
    %v1170 = vmul.f32 %v1167, %v1169
    %v1171 = vadd.f32 %v1170, 0.0036580483
    %v1172 = vmul.f32 %v1167, %v1171
    %v1173 = vadd.f32 %v1172, 0.05243302
    %v1174 = vmul.f32 %v1167, %v1173
    %v1175 = vadd.f32 %v1174, 0.18741608
    %v1176 = vmul.f32 %v1167, %v1175
    %v1177 = vadd.f32 %v1176, 1.1283791
    %v1178 = vmul.f32 %v1119, %v1177
    %v1179 = vmul.f32 %v1167, 3.8918573e-05
    %v1180 = vadd.f32 %v1179, 0.001143296
    %v1181 = vmul.f32 %v1167, %v1180
    %v1182 = vadd.f32 %v1181, 0.014752088
    %v1183 = vmul.f32 %v1167, %v1182
    %v1184 = vadd.f32 %v1183, 0.112945676
    %v1185 = vmul.f32 %v1167, %v1184
    %v1186 = vadd.f32 %v1185, 0.4994258
    %v1187 = vmul.f32 %v1167, %v1186
    %v1188 = vadd.f32 %v1187, 1.0
    %v1189 = vrcp.pop %v1188
    %v1190 = vmul.f32 %v1188, %v1189
    %v1191 = vsub.f32 1.0, %v1190
    %v1192 = vmul.f32 %v1189, %v1191
    %v1193 = vadd.f32 %v1189, %v1192
    %vm1194 = vweird.f32 %v1188
    %vm1195 = vweird.f32 %v1189
    %vm1196 = vmor %vm1194, %vm1195
    %v1197 = vsel %vm1196, %v1189, %v1193
    %v1198 = vand.u32 2147483647, %v1188
    %vm1199 = vcmp.eq.f32.partialorder %v1198, 8.507059e+37
    %v1200 = vand.u32 %v1188, 2147483648
    %v1201 = vor.u32 1.1754944e-38, %v1200
    %v1202 = vsel %vm1199, %v1201, %v1197
    %v1203 = vmul.f32 %v1178, %v1202
    %v1204 = vmin.f32 %v1203, 1.0
    %v1205 = vmax.f32 %v1204, -1.0
    %v1206 = vmul.f32 %v1120, %v1120
    %v1207 = vmin.f32 16.0, %v1206
    %v1208 = vmul.f32 %v1207, 2.1237322e-06
    %v1209 = vadd.f32 %v1208, 0.00028619796
    %v1210 = vmul.f32 %v1207, %v1209
    %v1211 = vadd.f32 %v1210, 0.0036580483
    %v1212 = vmul.f32 %v1207, %v1211
    %v1213 = vadd.f32 %v1212, 0.05243302
    %v1214 = vmul.f32 %v1207, %v1213
    %v1215 = vadd.f32 %v1214, 0.18741608
    %v1216 = vmul.f32 %v1207, %v1215
    %v1217 = vadd.f32 %v1216, 1.1283791
    %v1218 = vmul.f32 %v1120, %v1217
    %v1219 = vmul.f32 %v1207, 3.8918573e-05
    %v1220 = vadd.f32 %v1219, 0.001143296
    %v1221 = vmul.f32 %v1207, %v1220
    %v1222 = vadd.f32 %v1221, 0.014752088
    %v1223 = vmul.f32 %v1207, %v1222
    %v1224 = vadd.f32 %v1223, 0.112945676
    %v1225 = vmul.f32 %v1207, %v1224
    %v1226 = vadd.f32 %v1225, 0.4994258
    %v1227 = vmul.f32 %v1207, %v1226
    %v1228 = vadd.f32 %v1227, 1.0
    %v1229 = vrcp.pop %v1228
    %v1230 = vmul.f32 %v1228, %v1229
    %v1231 = vsub.f32 1.0, %v1230
    %v1232 = vmul.f32 %v1229, %v1231
    %v1233 = vadd.f32 %v1229, %v1232
    %vm1234 = vweird.f32 %v1228
    %vm1235 = vweird.f32 %v1229
    %vm1236 = vmor %vm1234, %vm1235
    %v1237 = vsel %vm1236, %v1229, %v1233
    %v1238 = vand.u32 2147483647, %v1228
    %vm1239 = vcmp.eq.f32.partialorder %v1238, 8.507059e+37
    %v1240 = vand.u32 %v1228, 2147483648
    %v1241 = vor.u32 1.1754944e-38, %v1240
    %v1242 = vsel %vm1239, %v1241, %v1237
    %v1243 = vmul.f32 %v1218, %v1242
    %v1244 = vmin.f32 %v1243, 1.0
    %v1245 = vmax.f32 %v1244, -1.0
    %v1246 = vmul.f32 %v1121, %v1121
    %v1247 = vmin.f32 16.0, %v1246
    %v1248 = vmul.f32 %v1247, 2.1237322e-06
    %v1249 = vadd.f32 %v1248, 0.00028619796
    %v1250 = vmul.f32 %v1247, %v1249
    %v1251 = vadd.f32 %v1250, 0.0036580483
    %v1252 = vmul.f32 %v1247, %v1251
    %v1253 = vadd.f32 %v1252, 0.05243302
    %v1254 = vmul.f32 %v1247, %v1253
    %v1255 = vadd.f32 %v1254, 0.18741608
    %v1256 = vmul.f32 %v1247, %v1255
    %v1257 = vadd.f32 %v1256, 1.1283791
    %v1258 = vmul.f32 %v1121, %v1257
    %v1259 = vmul.f32 %v1247, 3.8918573e-05
    %v1260 = vadd.f32 %v1259, 0.001143296
    %v1261 = vmul.f32 %v1247, %v1260
    %v1262 = vadd.f32 %v1261, 0.014752088
    %v1263 = vmul.f32 %v1247, %v1262
    %v1264 = vadd.f32 %v1263, 0.112945676
    %v1265 = vmul.f32 %v1247, %v1264
    %v1266 = vadd.f32 %v1265, 0.4994258
    %v1267 = vmul.f32 %v1247, %v1266
    %v1268 = vadd.f32 %v1267, 1.0
    %v1269 = vrcp.pop %v1268
    %v1270 = vmul.f32 %v1268, %v1269
    %v1271 = vsub.f32 1.0, %v1270
    %v1272 = vmul.f32 %v1269, %v1271
    %v1273 = vadd.f32 %v1269, %v1272
    %vm1274 = vweird.f32 %v1268
    %vm1275 = vweird.f32 %v1269
    %vm1276 = vmor %vm1274, %vm1275
    %v1277 = vsel %vm1276, %v1269, %v1273
    %v1278 = vand.u32 2147483647, %v1268
    %vm1279 = vcmp.eq.f32.partialorder %v1278, 8.507059e+37
    %v1280 = vand.u32 %v1268, 2147483648
    %v1281 = vor.u32 1.1754944e-38, %v1280
    %v1282 = vsel %vm1279, %v1281, %v1277
    %v1283 = vmul.f32 %v1258, %v1282
    %v1284 = vmin.f32 %v1283, 1.0
    %v1285 = vmax.f32 %v1284, -1.0
    %v1286 = vmul.f32 %v1122, %v1122
    %v1287 = vmin.f32 16.0, %v1286
    %v1288 = vmul.f32 %v1287, 2.1237322e-06
    %v1289 = vadd.f32 %v1288, 0.00028619796
    %v1290 = vmul.f32 %v1287, %v1289
    %v1291 = vadd.f32 %v1290, 0.0036580483
    %v1292 = vmul.f32 %v1287, %v1291
    %v1293 = vadd.f32 %v1292, 0.05243302
    %v1294 = vmul.f32 %v1287, %v1293
    %v1295 = vadd.f32 %v1294, 0.18741608
    %v1296 = vmul.f32 %v1287, %v1295
    %v1297 = vadd.f32 %v1296, 1.1283791
    %v1298 = vmul.f32 %v1122, %v1297
    %v1299 = vmul.f32 %v1287, 3.8918573e-05
    %v1300 = vadd.f32 %v1299, 0.001143296
    %v1301 = vmul.f32 %v1287, %v1300
    %v1302 = vadd.f32 %v1301, 0.014752088
    %v1303 = vmul.f32 %v1287, %v1302
    %v1304 = vadd.f32 %v1303, 0.112945676
    %v1305 = vmul.f32 %v1287, %v1304
    %v1306 = vadd.f32 %v1305, 0.4994258
    %v1307 = vmul.f32 %v1287, %v1306
    %v1308 = vadd.f32 %v1307, 1.0
    %v1309 = vrcp.pop %v1308
    %v1310 = vmul.f32 %v1308, %v1309
    %v1311 = vsub.f32 1.0, %v1310
    %v1312 = vmul.f32 %v1309, %v1311
    %v1313 = vadd.f32 %v1309, %v1312
    %vm1314 = vweird.f32 %v1308
    %vm1315 = vweird.f32 %v1309
    %vm1316 = vmor %vm1314, %vm1315
    %v1317 = vsel %vm1316, %v1309, %v1313
    %v1318 = vand.u32 2147483647, %v1308
    %vm1319 = vcmp.eq.f32.partialorder %v1318, 8.507059e+37
    %v1320 = vand.u32 %v1308, 2147483648
    %v1321 = vor.u32 1.1754944e-38, %v1320
    %v1322 = vsel %vm1319, %v1321, %v1317
    %v1323 = vmul.f32 %v1298, %v1322
    %v1324 = vmin.f32 %v1323, 1.0
    %v1325 = vmax.f32 %v1324, -1.0
    %v1326 = vmul.f32 %v1123, %v1123
    %v1327 = vmin.f32 16.0, %v1326
    %v1328 = vmul.f32 %v1327, 2.1237322e-06
    %v1329 = vadd.f32 %v1328, 0.00028619796
    %v1330 = vmul.f32 %v1327, %v1329
    %v1331 = vadd.f32 %v1330, 0.0036580483
    %v1332 = vmul.f32 %v1327, %v1331
    %v1333 = vadd.f32 %v1332, 0.05243302
    %v1334 = vmul.f32 %v1327, %v1333
    %v1335 = vadd.f32 %v1334, 0.18741608
    %v1336 = vmul.f32 %v1327, %v1335
    %v1337 = vadd.f32 %v1336, 1.1283791
    %v1338 = vmul.f32 %v1123, %v1337
    %v1339 = vmul.f32 %v1327, 3.8918573e-05
    %v1340 = vadd.f32 %v1339, 0.001143296
    %v1341 = vmul.f32 %v1327, %v1340
    %v1342 = vadd.f32 %v1341, 0.014752088
    %v1343 = vmul.f32 %v1327, %v1342
    %v1344 = vadd.f32 %v1343, 0.112945676
    %v1345 = vmul.f32 %v1327, %v1344
    %v1346 = vadd.f32 %v1345, 0.4994258
    %v1347 = vmul.f32 %v1327, %v1346
    %v1348 = vadd.f32 %v1347, 1.0
    %v1349 = vrcp.pop %v1348
    %v1350 = vmul.f32 %v1348, %v1349
    %v1351 = vsub.f32 1.0, %v1350
    %v1352 = vmul.f32 %v1349, %v1351
    %v1353 = vadd.f32 %v1349, %v1352
    %vm1354 = vweird.f32 %v1348
    %vm1355 = vweird.f32 %v1349
    %vm1356 = vmor %vm1354, %vm1355
    %v1357 = vsel %vm1356, %v1349, %v1353
    %v1358 = vand.u32 2147483647, %v1348
    %vm1359 = vcmp.eq.f32.partialorder %v1358, 8.507059e+37
    %v1360 = vand.u32 %v1348, 2147483648
    %v1361 = vor.u32 1.1754944e-38, %v1360
    %v1362 = vsel %vm1359, %v1361, %v1357
    %v1363 = vmul.f32 %v1338, %v1362
    %v1364 = vmin.f32 %v1363, 1.0
    %v1365 = vmax.f32 %v1364, -1.0
    %v1366 = vmul.f32 %v1124, %v1124
    %v1367 = vmin.f32 16.0, %v1366
    %v1368 = vmul.f32 %v1367, 2.1237322e-06
    %v1369 = vadd.f32 %v1368, 0.00028619796
    %v1370 = vmul.f32 %v1367, %v1369
    %v1371 = vadd.f32 %v1370, 0.0036580483
    %v1372 = vmul.f32 %v1367, %v1371
    %v1373 = vadd.f32 %v1372, 0.05243302
    %v1374 = vmul.f32 %v1367, %v1373
    %v1375 = vadd.f32 %v1374, 0.18741608
    %v1376 = vmul.f32 %v1367, %v1375
    %v1377 = vadd.f32 %v1376, 1.1283791
    %v1378 = vmul.f32 %v1124, %v1377
    %v1379 = vmul.f32 %v1367, 3.8918573e-05
    %v1380 = vadd.f32 %v1379, 0.001143296
    %v1381 = vmul.f32 %v1367, %v1380
    %v1382 = vadd.f32 %v1381, 0.014752088
    %v1383 = vmul.f32 %v1367, %v1382
    %v1384 = vadd.f32 %v1383, 0.112945676
    %v1385 = vmul.f32 %v1367, %v1384
    %v1386 = vadd.f32 %v1385, 0.4994258
    %v1387 = vmul.f32 %v1367, %v1386
    %v1388 = vadd.f32 %v1387, 1.0
    %v1389 = vrcp.pop %v1388
    %v1390 = vmul.f32 %v1388, %v1389
    %v1391 = vsub.f32 1.0, %v1390
    %v1392 = vmul.f32 %v1389, %v1391
    %v1393 = vadd.f32 %v1389, %v1392
    %vm1394 = vweird.f32 %v1388
    %vm1395 = vweird.f32 %v1389
    %vm1396 = vmor %vm1394, %vm1395
    %v1397 = vsel %vm1396, %v1389, %v1393
    %v1398 = vand.u32 2147483647, %v1388
    %vm1399 = vcmp.eq.f32.partialorder %v1398, 8.507059e+37
    %v1400 = vand.u32 %v1388, 2147483648
    %v1401 = vor.u32 1.1754944e-38, %v1400
    %v1402 = vsel %vm1399, %v1401, %v1397
    %v1403 = vmul.f32 %v1378, %v1402
    %v1404 = vmin.f32 %v1403, 1.0
    %v1405 = vmax.f32 %v1404, -1.0
    %v1406 = vmul.f32 %v1125, %v1125
    %v1407 = vmin.f32 16.0, %v1406
    %v1408 = vmul.f32 %v1407, 2.1237322e-06
    %v1409 = vadd.f32 %v1408, 0.00028619796
    %v1410 = vmul.f32 %v1407, %v1409
    %v1411 = vadd.f32 %v1410, 0.0036580483
    %v1412 = vmul.f32 %v1407, %v1411
    %v1413 = vadd.f32 %v1412, 0.05243302
    %v1414 = vmul.f32 %v1407, %v1413
    %v1415 = vadd.f32 %v1414, 0.18741608
    %v1416 = vmul.f32 %v1407, %v1415
    %v1417 = vadd.f32 %v1416, 1.1283791
    %v1418 = vmul.f32 %v1125, %v1417
    %v1419 = vmul.f32 %v1407, 3.8918573e-05
    %v1420 = vadd.f32 %v1419, 0.001143296
    %v1421 = vmul.f32 %v1407, %v1420
    %v1422 = vadd.f32 %v1421, 0.014752088
    %v1423 = vmul.f32 %v1407, %v1422
    %v1424 = vadd.f32 %v1423, 0.112945676
    %v1425 = vmul.f32 %v1407, %v1424
    %v1426 = vadd.f32 %v1425, 0.4994258
    %v1427 = vmul.f32 %v1407, %v1426
    %v1428 = vadd.f32 %v1427, 1.0
    %v1429 = vrcp.pop %v1428
    %v1430 = vmul.f32 %v1428, %v1429
    %v1431 = vsub.f32 1.0, %v1430
    %v1432 = vmul.f32 %v1429, %v1431
    %v1433 = vadd.f32 %v1429, %v1432
    %vm1434 = vweird.f32 %v1428
    %vm1435 = vweird.f32 %v1429
    %vm1436 = vmor %vm1434, %vm1435
    %v1437 = vsel %vm1436, %v1429, %v1433
    %v1438 = vand.u32 2147483647, %v1428
    %vm1439 = vcmp.eq.f32.partialorder %v1438, 8.507059e+37
    %v1440 = vand.u32 %v1428, 2147483648
    %v1441 = vor.u32 1.1754944e-38, %v1440
    %v1442 = vsel %vm1439, %v1441, %v1437
    %v1443 = vmul.f32 %v1418, %v1442
    %v1444 = vmin.f32 %v1443, 1.0
    %v1445 = vmax.f32 %v1444, -1.0
    %v1446 = vadd.f32 %v1165, 1.0
    %v1447 = vadd.f32 %v1205, 1.0
    %v1448 = vadd.f32 %v1245, 1.0
    %v1449 = vadd.f32 %v1285, 1.0
    %v1450 = vadd.f32 %v1325, 1.0
    %v1451 = vadd.f32 %v1365, 1.0
    %v1452 = vadd.f32 %v1405, 1.0
    %v1453 = vadd.f32 %v1445, 1.0
    %v1454 = vmul.f32 %v1110, %v1446
    %v1455 = vmul.f32 %v1111, %v1447
    %v1456 = vmul.f32 %v1112, %v1448
    %v1457 = vmul.f32 %v1113, %v1449
    %v1458 = vmul.f32 %v1114, %v1450
    %v1459 = vmul.f32 %v1115, %v1451
    %v1460 = vmul.f32 %v1116, %v1452
    %v1461 = vmul.f32 %v1117, %v1453
    %v1462 = vld [vmem:[%s6] sm:$0xf]
    %v1463 = vld [vmem:[%s6 + $0x4] sm:$0xf]
    %v1464 = vld [vmem:[%s6 + $0x8] sm:$0xf]
    %v1465 = vld [vmem:[%s6 + $0xc] sm:$0xf]
    %v1466 = vld [vmem:[%s6 + $0x10] sm:$0xf]
    %v1467 = vld [vmem:[%s6 + $0x14] sm:$0xf]
    %v1468 = vld [vmem:[%s6 + $0x18] sm:$0xf]
    %v1469 = vld [vmem:[%s6 + $0x1c] sm:$0xf]
    %v1470 = vpack.c.bf16 %v1455, %v1454
    %v1471 = vpack.c.bf16 %v1457, %v1456
    %v1472 = vpack.c.bf16 %v1459, %v1458
    %v1473 = vpack.c.bf16 %v1461, %v1460
    %v1474 = vperm.slane %v31, 7
    %v1483 = vunpack.c.l.b16 %v1462
    %v1484 = vunpack.c.l.b16 %v1463
    %v1485 = vunpack.c.l.b16 %v1464
    %v1486 = vunpack.c.l.b16 %v1465
    %v1487 = vunpack.c.l.b16 %v1466
    %v1488 = vunpack.c.l.b16 %v1467
    %v1489 = vunpack.c.l.b16 %v1468
    %v1490 = vunpack.c.l.b16 %v1469
    %v1491 = vpack.c.b16 %v1484, %v1483
    %v1492 = vpack.c.b16 %v1486, %v1485
    %v1493 = vpack.c.b16 %v1488, %v1487
    %v1494 = vpack.c.b16 %v1490, %v1489
    %v1500 = vsel %vm384, %v1470, 0
    %v1503 = vsel %vm384, %v1471, 0
    %v1506 = vsel %vm384, %v1472, 0
    %v1509 = vsel %vm384, %v1473, 0
    %1511 = vmatpush.bf16.msra.mxu0 0
    %1512 = vmatpush.bf16.msra.mxu0 0
    %1513 = vmatpush.bf16.msra.mxu0 0
    %1514 = vmatpush.bf16.msra.mxu0 0
    %1515 = vmatpush.bf16.msra.mxu0 %v1494
    %1516 = vmatpush.bf16.msra.mxu0 %v1493
    %1517 = vmatpush.bf16.msra.mxu0 %v1492
    %1518 = vmatpush.bf16.msra.mxu0 %v1491
    %1519 = vmatmul.bf16.gmra.mxu0 %v1500
    %v1520 = vpop.f32.mrf.mxu0
    %v1521 = vadd.f32 %v1474, %v1520
    %v1522 = vpop.f32.mrf.mxu0
    %v1523 = vadd.f32 %v1474, %v1522
    %1524 = vmatmul.bf16.gmra.mxu0 %v1503
    %v1525 = vpop.f32.mrf.mxu0
    %v1526 = vadd.f32 %v1474, %v1525
    %v1527 = vpop.f32.mrf.mxu0
    %v1528 = vadd.f32 %v1474, %v1527
    %1529 = vmatmul.bf16.gmra.mxu0 %v1506
    %v1530 = vpop.f32.mrf.mxu0
    %v1531 = vadd.f32 %v1474, %v1530
    %v1532 = vpop.f32.mrf.mxu0
    %v1533 = vadd.f32 %v1474, %v1532
    %1534 = vmatmul.bf16.gmra.mxu0 %v1509
    %v1535 = vpop.f32.mrf.mxu0
    %v1536 = vadd.f32 %v1474, %v1535
    %v1537 = vpop.f32.mrf.mxu0
    %v1538 = vadd.f32 %v1474, %v1537
    %1539 = vdwg.mxu0
    %v1540 = vadd.f32 %v1521, %v1040
    %v1541 = vadd.f32 %v1523, %v1041
    %v1542 = vadd.f32 %v1526, %v1042
    %v1543 = vadd.f32 %v1528, %v1043
    %v1544 = vadd.f32 %v1531, %v1044
    %v1545 = vadd.f32 %v1533, %v1045
    %v1546 = vadd.f32 %v1536, %v1046
    %v1547 = vadd.f32 %v1538, %v1047
    %v1548 = vsel %vm42, %v1540, 0.0
    %1549 = vadd.xlane.f32.xlu0 %v1548
    %v1550 = vpop.xlane.xlu0 %1549
    %v1551 = vsel %vm42, %v1541, 0.0
    %1552 = vadd.xlane.f32.xlu0 %v1551
    %v1553 = vpop.xlane.xlu0 %1552
    %v1554 = vsel %vm42, %v1542, 0.0
    %1555 = vadd.xlane.f32.xlu0 %v1554
    %v1556 = vpop.xlane.xlu0 %1555
    %v1557 = vsel %vm42, %v1543, 0.0
    %1558 = vadd.xlane.f32.xlu0 %v1557
    %v1559 = vpop.xlane.xlu0 %1558
    %v1560 = vsel %vm42, %v1544, 0.0
    %1561 = vadd.xlane.f32.xlu0 %v1560
    %v1562 = vpop.xlane.xlu0 %1561
    %v1563 = vsel %vm42, %v1545, 0.0
    %1564 = vadd.xlane.f32.xlu0 %v1563
    %v1565 = vpop.xlane.xlu0 %1564
    %v1566 = vsel %vm42, %v1546, 0.0
    %1567 = vadd.xlane.f32.xlu0 %v1566
    %v1568 = vpop.xlane.xlu0 %1567
    %v1569 = vsel %vm42, %v1547, 0.0
    %1570 = vadd.xlane.f32.xlu0 %v1569
    %v1571 = vpop.xlane.xlu0 %1570
    %v1572 = vmul.f32 %v1550, %v73
    %v1573 = vmul.f32 %v1553, %v73
    %v1574 = vmul.f32 %v1556, %v73
    %v1575 = vmul.f32 %v1559, %v73
    %v1576 = vmul.f32 %v1562, %v73
    %v1577 = vmul.f32 %v1565, %v73
    %v1578 = vmul.f32 %v1568, %v73
    %v1579 = vmul.f32 %v1571, %v73
    %v1580 = vsub.f32 %v1540, %v1572
    %v1581 = vsub.f32 %v1541, %v1573
    %v1582 = vsub.f32 %v1542, %v1574
    %v1583 = vsub.f32 %v1543, %v1575
    %v1584 = vsub.f32 %v1544, %v1576
    %v1585 = vsub.f32 %v1545, %v1577
    %v1586 = vsub.f32 %v1546, %v1578
    %v1587 = vsub.f32 %v1547, %v1579
    %v1588 = vmul.f32 %v1580, %v1580
    %v1589 = vmul.f32 %v1581, %v1581
    %v1590 = vmul.f32 %v1582, %v1582
    %v1591 = vmul.f32 %v1583, %v1583
    %v1592 = vmul.f32 %v1584, %v1584
    %v1593 = vmul.f32 %v1585, %v1585
    %v1594 = vmul.f32 %v1586, %v1586
    %v1595 = vmul.f32 %v1587, %v1587
    %v1596 = vsel %vm42, %v1588, 0.0
    %1597 = vadd.xlane.f32.xlu0 %v1596
    %v1598 = vpop.xlane.xlu0 %1597
    %v1599 = vsel %vm42, %v1589, 0.0
    %1600 = vadd.xlane.f32.xlu0 %v1599
    %v1601 = vpop.xlane.xlu0 %1600
    %v1602 = vsel %vm42, %v1590, 0.0
    %1603 = vadd.xlane.f32.xlu0 %v1602
    %v1604 = vpop.xlane.xlu0 %1603
    %v1605 = vsel %vm42, %v1591, 0.0
    %1606 = vadd.xlane.f32.xlu0 %v1605
    %v1607 = vpop.xlane.xlu0 %1606
    %v1608 = vsel %vm42, %v1592, 0.0
    %1609 = vadd.xlane.f32.xlu0 %v1608
    %v1610 = vpop.xlane.xlu0 %1609
    %v1611 = vsel %vm42, %v1593, 0.0
    %1612 = vadd.xlane.f32.xlu0 %v1611
    %v1613 = vpop.xlane.xlu0 %1612
    %v1614 = vsel %vm42, %v1594, 0.0
    %1615 = vadd.xlane.f32.xlu0 %v1614
    %v1616 = vpop.xlane.xlu0 %1615
    %v1617 = vsel %vm42, %v1595, 0.0
    %1618 = vadd.xlane.f32.xlu0 %v1617
    %v1619 = vpop.xlane.xlu0 %1618
    %v1620 = vmul.f32 %v1598, %v73
    %v1621 = vmul.f32 %v1601, %v73
    %v1622 = vmul.f32 %v1604, %v73
    %v1623 = vmul.f32 %v1607, %v73
    %v1624 = vmul.f32 %v1610, %v73
    %v1625 = vmul.f32 %v1613, %v73
    %v1626 = vmul.f32 %v1616, %v73
    %v1627 = vmul.f32 %v1619, %v73
    %v1628 = vadd.f32 %v1620, 1e-12
    %v1629 = vadd.f32 %v1621, 1e-12
    %v1630 = vadd.f32 %v1622, 1e-12
    %v1631 = vadd.f32 %v1623, 1e-12
    %v1632 = vadd.f32 %v1624, 1e-12
    %v1633 = vadd.f32 %v1625, 1e-12
    %v1634 = vadd.f32 %v1626, 1e-12
    %v1635 = vadd.f32 %v1627, 1e-12
    %v1636 = vrsqrt.pop %v1628
    %v1637 = vmul.f32 %v1636, %v1628
    %v1638 = vmul.f32 %v1637, %v1636
    %v1639 = vmul.f32 0.5, %v1638
    %v1640 = vsub.f32 1.5, %v1639
    %v1641 = vmul.f32 %v1636, %v1640
    %vm1642 = vweird.f32 %v1628
    %vm1643 = vweird.f32 %v1636
    %vm1644 = vmor %vm1642, %vm1643
    %v1645 = vsel %vm1644, %v1636, %v1641
    %v1646 = vrsqrt.pop %v1629
    %v1647 = vmul.f32 %v1646, %v1629
    %v1648 = vmul.f32 %v1647, %v1646
    %v1649 = vmul.f32 0.5, %v1648
    %v1650 = vsub.f32 1.5, %v1649
    %v1651 = vmul.f32 %v1646, %v1650
    %vm1652 = vweird.f32 %v1629
    %vm1653 = vweird.f32 %v1646
    %vm1654 = vmor %vm1652, %vm1653
    %v1655 = vsel %vm1654, %v1646, %v1651
    %v1656 = vrsqrt.pop %v1630
    %v1657 = vmul.f32 %v1656, %v1630
    %v1658 = vmul.f32 %v1657, %v1656
    %v1659 = vmul.f32 0.5, %v1658
    %v1660 = vsub.f32 1.5, %v1659
    %v1661 = vmul.f32 %v1656, %v1660
    %vm1662 = vweird.f32 %v1630
    %vm1663 = vweird.f32 %v1656
    %vm1664 = vmor %vm1662, %vm1663
    %v1665 = vsel %vm1664, %v1656, %v1661
    %v1666 = vrsqrt.pop %v1631
    %v1667 = vmul.f32 %v1666, %v1631
    %v1668 = vmul.f32 %v1667, %v1666
    %v1669 = vmul.f32 0.5, %v1668
    %v1670 = vsub.f32 1.5, %v1669
    %v1671 = vmul.f32 %v1666, %v1670
    %vm1672 = vweird.f32 %v1631
    %vm1673 = vweird.f32 %v1666
    %vm1674 = vmor %vm1672, %vm1673
    %v1675 = vsel %vm1674, %v1666, %v1671
    %v1676 = vrsqrt.pop %v1632
    %v1677 = vmul.f32 %v1676, %v1632
    %v1678 = vmul.f32 %v1677, %v1676
    %v1679 = vmul.f32 0.5, %v1678
    %v1680 = vsub.f32 1.5, %v1679
    %v1681 = vmul.f32 %v1676, %v1680
    %vm1682 = vweird.f32 %v1632
    %vm1683 = vweird.f32 %v1676
    %vm1684 = vmor %vm1682, %vm1683
    %v1685 = vsel %vm1684, %v1676, %v1681
    %v1686 = vrsqrt.pop %v1633
    %v1687 = vmul.f32 %v1686, %v1633
    %v1688 = vmul.f32 %v1687, %v1686
    %v1689 = vmul.f32 0.5, %v1688
    %v1690 = vsub.f32 1.5, %v1689
    %v1691 = vmul.f32 %v1686, %v1690
    %vm1692 = vweird.f32 %v1633
    %vm1693 = vweird.f32 %v1686
    %vm1694 = vmor %vm1692, %vm1693
    %v1695 = vsel %vm1694, %v1686, %v1691
    %v1696 = vrsqrt.pop %v1634
    %v1697 = vmul.f32 %v1696, %v1634
    %v1698 = vmul.f32 %v1697, %v1696
    %v1699 = vmul.f32 0.5, %v1698
    %v1700 = vsub.f32 1.5, %v1699
    %v1701 = vmul.f32 %v1696, %v1700
    %vm1702 = vweird.f32 %v1634
    %vm1703 = vweird.f32 %v1696
    %vm1704 = vmor %vm1702, %vm1703
    %v1705 = vsel %vm1704, %v1696, %v1701
    %v1706 = vrsqrt.pop %v1635
    %v1707 = vmul.f32 %v1706, %v1635
    %v1708 = vmul.f32 %v1707, %v1706
    %v1709 = vmul.f32 0.5, %v1708
    %v1710 = vsub.f32 1.5, %v1709
    %v1711 = vmul.f32 %v1706, %v1710
    %vm1712 = vweird.f32 %v1635
    %vm1713 = vweird.f32 %v1706
    %vm1714 = vmor %vm1712, %vm1713
    %v1715 = vsel %vm1714, %v1706, %v1711
    %v1716 = vmul.f32 %v1580, %v1645
    %v1717 = vmul.f32 %v1581, %v1655
    %v1718 = vmul.f32 %v1582, %v1665
    %v1719 = vmul.f32 %v1583, %v1675
    %v1720 = vmul.f32 %v1584, %v1685
    %v1721 = vmul.f32 %v1585, %v1695
    %v1722 = vmul.f32 %v1586, %v1705
    %v1723 = vmul.f32 %v1587, %v1715
    %v1724 = vperm.slane %v32, 0
    %v1725 = vmul.f32 %v1716, %v1724
    %v1726 = vmul.f32 %v1717, %v1724
    %v1727 = vmul.f32 %v1718, %v1724
    %v1728 = vmul.f32 %v1719, %v1724
    %v1729 = vmul.f32 %v1720, %v1724
    %v1730 = vmul.f32 %v1721, %v1724
    %v1731 = vmul.f32 %v1722, %v1724
    %v1732 = vmul.f32 %v1723, %v1724
    %v1733 = vperm.slane %v32, 1
    %v1734 = vadd.f32 %v1725, %v1733
    %v1735 = vadd.f32 %v1726, %v1733
    %v1736 = vadd.f32 %v1727, %v1733
    %v1737 = vadd.f32 %v1728, %v1733
    %v1738 = vadd.f32 %v1729, %v1733
    %v1739 = vadd.f32 %v1730, %v1733
    %v1740 = vadd.f32 %v1731, %v1733
    %v1741 = vadd.f32 %v1732, %v1733
    %s1742 = scalar_lea.vmem %s3, 16
    %v1743 = vld [vmem:[%s1742] sm:$0xf]
    %v1744 = vld [vmem:[%s1742 + $0x4] sm:$0xf]
    %v1745 = vld [vmem:[%s1742 + $0x8] sm:$0xf]
    %v1746 = vld [vmem:[%s1742 + $0xc] sm:$0xf]
    %v1747 = vpack.c.bf16 %v1735, %v1734
    %v1748 = vpack.c.bf16 %v1737, %v1736
    %v1749 = vpack.c.bf16 %v1739, %v1738
    %v1750 = vpack.c.bf16 %v1741, %v1740
    %v1751 = vperm.slane %v32, 2
    %v1756 = vunpack.c.l.b16 %v1743
    %v1757 = vunpack.c.l.b16 %v1744
    %v1758 = vunpack.c.l.b16 %v1745
    %v1759 = vunpack.c.l.b16 %v1746
    %v1760 = vpack.c.b16 %v1757, %v1756
    %v1761 = vpack.c.b16 %v1759, %v1758
    %v1765 = vsel %vm42, %v1747, 0
    %v1768 = vsel %vm42, %v1748, 0
    %v1771 = vsel %vm42, %v1749, 0
    %v1774 = vsel %vm42, %v1750, 0
    %1776 = vmatpush.bf16.msra.mxu0 0
    %1777 = vmatpush.bf16.msra.mxu0 0
    %1778 = vmatpush.bf16.msra.mxu0 0
    %1779 = vmatpush.bf16.msra.mxu0 0
    %1780 = vmatpush.bf16.msra.mxu0 0
    %1781 = vmatpush.bf16.msra.mxu0 0
    %1782 = vmatpush.bf16.msra.mxu0 %v1761
    %1783 = vmatpush.bf16.msra.mxu0 %v1760
    %1784 = vmatmul.bf16.gmra.mxu0 %v1765
    %v1785 = vpop.f32.mrf.mxu0
    %v1786 = vadd.f32 %v1751, %v1785
    %v1787 = vpop.f32.mrf.mxu0
    %v1788 = vadd.f32 %v1751, %v1787
    %1789 = vmatmul.bf16.gmra.mxu0 %v1768
    %v1790 = vpop.f32.mrf.mxu0
    %v1791 = vadd.f32 %v1751, %v1790
    %v1792 = vpop.f32.mrf.mxu0
    %v1793 = vadd.f32 %v1751, %v1792
    %1794 = vmatmul.bf16.gmra.mxu0 %v1771
    %v1795 = vpop.f32.mrf.mxu0
    %v1796 = vadd.f32 %v1751, %v1795
    %v1797 = vpop.f32.mrf.mxu0
    %v1798 = vadd.f32 %v1751, %v1797
    %1799 = vmatmul.bf16.gmra.mxu0 %v1774
    %v1800 = vpop.f32.mrf.mxu0
    %v1801 = vadd.f32 %v1751, %v1800
    %v1802 = vpop.f32.mrf.mxu0
    %v1803 = vadd.f32 %v1751, %v1802
    %1804 = vdwg.mxu0
    %v1805 = vpack.c.bf16 %v1788, %v1786
    %v1806 = vpack.c.bf16 %v1793, %v1791
    %v1807 = vpack.c.bf16 %v1798, %v1796
    %v1808 = vpack.c.bf16 %v1803, %v1801
    %1813 = vrot.lane.b32.xlu0 %v1805, 96
    %v1814 = vpop.permute.xlu0 %1813
    %1815 = vrot.lane.b32.xlu0 %v1806, 96
    %v1816 = vpop.permute.xlu0 %1815
    %1817 = vrot.lane.b32.xlu0 %v1807, 96
    %v1818 = vpop.permute.xlu0 %1817
    %1819 = vrot.lane.b32.xlu0 %v1808, 96
    %v1820 = vpop.permute.xlu0 %1819
    %v1822 = vsel %vm330, %v1805, 0
    %v1825 = vsel %vm330, %v1806, 0
    %v1828 = vsel %vm330, %v1807, 0
    %v1831 = vsel %vm330, %v1808, 0
    %v1834 = vsel %vm330, %v1814, 0
    %v1837 = vsel %vm330, %v1816, 0
    %v1840 = vsel %vm330, %v1818, 0
    %v1843 = vsel %vm330, %v1820, 0
    %1845 = vmatpush.bf16.xpose.msra.mxu0 0
    %1846 = vmatpush.bf16.xpose.msra.mxu0 0
    %1847 = vmatpush.bf16.xpose.msra.mxu0 0
    %1848 = vmatpush.bf16.xpose.msra.mxu0 0
    %1849 = vmatpush.bf16.xpose.msra.mxu0 %v1843
    %1850 = vmatpush.bf16.xpose.msra.mxu0 %v1840
    %1851 = vmatpush.bf16.xpose.msra.mxu0 %v1837
    %1852 = vmatpush.bf16.xpose.msra.mxu0 %v1834
    %1853 = vmatmul.bf16.gmra.mxu0 %v1822
    %v1854 = vpop.f32.mrf.mxu0
    %v1855 = vadd.f32 %v244, %v1854
    %v1856 = vpop.f32.mrf.mxu0
    %v1857 = vadd.f32 %v245, %v1856
    %1858 = vmatmul.bf16.gmra.mxu0 %v1825
    %v1859 = vpop.f32.mrf.mxu0
    %v1860 = vadd.f32 %v246, %v1859
    %v1861 = vpop.f32.mrf.mxu0
    %v1862 = vadd.f32 %v247, %v1861
    %1863 = vmatmul.bf16.gmra.mxu0 %v1828
    %v1864 = vpop.f32.mrf.mxu0
    %v1865 = vadd.f32 %v248, %v1864
    %v1866 = vpop.f32.mrf.mxu0
    %v1867 = vadd.f32 %v249, %v1866
    %1868 = vmatmul.bf16.gmra.mxu0 %v1831
    %v1869 = vpop.f32.mrf.mxu0
    %v1870 = vadd.f32 %v250, %v1869
    %v1871 = vpop.f32.mrf.mxu0
    %v1872 = vadd.f32 %v251, %v1871
    %1873 = vdwg.mxu0
    %v1874 = vsel %vm384, %v1855, -inf
    %1875 = vmax.xlane.f32.xlu0 %v1874
    %v1876 = vpop.xlane.xlu0 %1875
    %v1877 = vsel %vm384, %v1857, -inf
    %1878 = vmax.xlane.f32.xlu0 %v1877
    %v1879 = vpop.xlane.xlu0 %1878
    %v1880 = vsel %vm384, %v1860, -inf
    %1881 = vmax.xlane.f32.xlu0 %v1880
    %v1882 = vpop.xlane.xlu0 %1881
    %v1883 = vsel %vm384, %v1862, -inf
    %1884 = vmax.xlane.f32.xlu0 %v1883
    %v1885 = vpop.xlane.xlu0 %1884
    %v1886 = vsel %vm384, %v1865, -inf
    %1887 = vmax.xlane.f32.xlu0 %v1886
    %v1888 = vpop.xlane.xlu0 %1887
    %v1889 = vsel %vm384, %v1867, -inf
    %1890 = vmax.xlane.f32.xlu0 %v1889
    %v1891 = vpop.xlane.xlu0 %1890
    %v1892 = vsel %vm384, %v1870, -inf
    %1893 = vmax.xlane.f32.xlu0 %v1892
    %v1894 = vpop.xlane.xlu0 %1893
    %v1895 = vsel %vm384, %v1872, -inf
    %1896 = vmax.xlane.f32.xlu0 %v1895
    %v1897 = vpop.xlane.xlu0 %1896
    %v1898 = vsub.f32 %v1855, %v1876
    %v1899 = vsub.f32 %v1857, %v1879
    %v1900 = vsub.f32 %v1860, %v1882
    %v1901 = vsub.f32 %v1862, %v1885
    %v1902 = vsub.f32 %v1865, %v1888
    %v1903 = vsub.f32 %v1867, %v1891
    %v1904 = vsub.f32 %v1870, %v1894
    %v1905 = vsub.f32 %v1872, %v1897
    %v1906 = vmul.f32 %v1898, 1.442695
    %v1907 = vpow.pop %v1906
    %v1908 = vmul.f32 %v1899, 1.442695
    %v1909 = vpow.pop %v1908
    %v1910 = vmul.f32 %v1900, 1.442695
    %v1911 = vpow.pop %v1910
    %v1912 = vmul.f32 %v1901, 1.442695
    %v1913 = vpow.pop %v1912
    %v1914 = vmul.f32 %v1902, 1.442695
    %v1915 = vpow.pop %v1914
    %v1916 = vmul.f32 %v1903, 1.442695
    %v1917 = vpow.pop %v1916
    %v1918 = vmul.f32 %v1904, 1.442695
    %v1919 = vpow.pop %v1918
    %v1920 = vmul.f32 %v1905, 1.442695
    %v1921 = vpow.pop %v1920
    %v1922 = vsel %vm384, %v1907, 0.0
    %1923 = vadd.xlane.f32.xlu0 %v1922
    %v1924 = vpop.xlane.xlu0 %1923
    %v1925 = vsel %vm384, %v1909, 0.0
    %1926 = vadd.xlane.f32.xlu0 %v1925
    %v1927 = vpop.xlane.xlu0 %1926
    %v1928 = vsel %vm384, %v1911, 0.0
    %1929 = vadd.xlane.f32.xlu0 %v1928
    %v1930 = vpop.xlane.xlu0 %1929
    %v1931 = vsel %vm384, %v1913, 0.0
    %1932 = vadd.xlane.f32.xlu0 %v1931
    %v1933 = vpop.xlane.xlu0 %1932
    %v1934 = vsel %vm384, %v1915, 0.0
    %1935 = vadd.xlane.f32.xlu0 %v1934
    %v1936 = vpop.xlane.xlu0 %1935
    %v1937 = vsel %vm384, %v1917, 0.0
    %1938 = vadd.xlane.f32.xlu0 %v1937
    %v1939 = vpop.xlane.xlu0 %1938
    %v1940 = vsel %vm384, %v1919, 0.0
    %1941 = vadd.xlane.f32.xlu0 %v1940
    %v1942 = vpop.xlane.xlu0 %1941
    %v1943 = vsel %vm384, %v1921, 0.0
    %1944 = vadd.xlane.f32.xlu0 %v1943
    %v1945 = vpop.xlane.xlu0 %1944
    %v1946 = vrcp.pop %v1924
    %v1947 = vrcp.pop %v1927
    %v1948 = vrcp.pop %v1930
    %v1949 = vrcp.pop %v1933
    %v1950 = vrcp.pop %v1936
    %v1951 = vrcp.pop %v1939
    %v1952 = vrcp.pop %v1942
    %v1953 = vrcp.pop %v1945
    %v1954 = vmul.f32 %v1907, %v1946
    %v1955 = vmul.f32 %v1909, %v1947
    %v1956 = vmul.f32 %v1911, %v1948
    %v1957 = vmul.f32 %v1913, %v1949
    %v1958 = vmul.f32 %v1915, %v1950
    %v1959 = vmul.f32 %v1917, %v1951
    %v1960 = vmul.f32 %v1919, %v1952
    %v1961 = vmul.f32 %v1921, %v1953
    %v1962 = vpack.c.bf16 %v1955, %v1954
    %v1963 = vpack.c.bf16 %v1957, %v1956
    %v1964 = vpack.c.bf16 %v1959, %v1958
    %v1965 = vpack.c.bf16 %v1961, %v1960
    %1966 = vrot.lane.b32.xlu0 %v1805, 64
    %v1967 = vpop.permute.xlu0 %1966
    %1968 = vrot.lane.b32.xlu0 %v1806, 64
    %v1969 = vpop.permute.xlu0 %1968
    %1970 = vrot.lane.b32.xlu0 %v1807, 64
    %v1971 = vpop.permute.xlu0 %1970
    %1972 = vrot.lane.b32.xlu0 %v1808, 64
    %v1973 = vpop.permute.xlu0 %1972
    %v1979 = vsel %vm384, %v1962, 0
    %v1982 = vsel %vm384, %v1963, 0
    %v1985 = vsel %vm384, %v1964, 0
    %v1988 = vsel %vm384, %v1965, 0
    %1990 = vmatpush.bf16.msra.mxu0 0
    %1991 = vmatpush.bf16.msra.mxu0 0
    %1992 = vmatpush.bf16.msra.mxu0 0
    %1993 = vmatpush.bf16.msra.mxu0 0
    %1994 = vmatpush.bf16.msra.mxu0 %v1973
    %1995 = vmatpush.bf16.msra.mxu0 %v1971
    %1996 = vmatpush.bf16.msra.mxu0 %v1969
    %1997 = vmatpush.bf16.msra.mxu0 %v1967
    %1998 = vmatmul.bf16.gmra.mxu0 %v1979
    %v1999 = vpop.f32.mrf.mxu0
    %v2000 = vadd.f32 0.0, %v1999
    %v2001 = vpop.f32.mrf.mxu0
    %v2002 = vadd.f32 0.0, %v2001
    %2003 = vmatmul.bf16.gmra.mxu0 %v1982
    %v2004 = vpop.f32.mrf.mxu0
    %v2005 = vadd.f32 0.0, %v2004
    %v2006 = vpop.f32.mrf.mxu0
    %v2007 = vadd.f32 0.0, %v2006
    %2008 = vmatmul.bf16.gmra.mxu0 %v1985
    %v2009 = vpop.f32.mrf.mxu0
    %v2010 = vadd.f32 0.0, %v2009
    %v2011 = vpop.f32.mrf.mxu0
    %v2012 = vadd.f32 0.0, %v2011
    %2013 = vmatmul.bf16.gmra.mxu0 %v1988
    %v2014 = vpop.f32.mrf.mxu0
    %v2015 = vadd.f32 0.0, %v2014
    %v2016 = vpop.f32.mrf.mxu0
    %v2017 = vadd.f32 0.0, %v2016
    %2018 = vdwg.mxu0
    %2019 = vrot.lane.b32.xlu0 %v1805, 112
    %v2020 = vpop.permute.xlu0 %2019
    %2021 = vrot.lane.b32.xlu0 %v1806, 112
    %v2022 = vpop.permute.xlu0 %2021
    %2023 = vrot.lane.b32.xlu0 %v1807, 112
    %v2024 = vpop.permute.xlu0 %2023
    %2025 = vrot.lane.b32.xlu0 %v1808, 112
    %v2026 = vpop.permute.xlu0 %2025
    %2027 = vrot.lane.b32.xlu0 %v1805, 80
    %v2028 = vpop.permute.xlu0 %2027
    %2029 = vrot.lane.b32.xlu0 %v1806, 80
    %v2030 = vpop.permute.xlu0 %2029
    %2031 = vrot.lane.b32.xlu0 %v1807, 80
    %v2032 = vpop.permute.xlu0 %2031
    %2033 = vrot.lane.b32.xlu0 %v1808, 80
    %v2034 = vpop.permute.xlu0 %2033
    %v2036 = vsel %vm330, %v2020, 0
    %v2039 = vsel %vm330, %v2022, 0
    %v2042 = vsel %vm330, %v2024, 0
    %v2045 = vsel %vm330, %v2026, 0
    %v2048 = vsel %vm330, %v2028, 0
    %v2051 = vsel %vm330, %v2030, 0
    %v2054 = vsel %vm330, %v2032, 0
    %v2057 = vsel %vm330, %v2034, 0
    %2059 = vmatpush.bf16.xpose.msra.mxu0 0
    %2060 = vmatpush.bf16.xpose.msra.mxu0 0
    %2061 = vmatpush.bf16.xpose.msra.mxu0 0
    %2062 = vmatpush.bf16.xpose.msra.mxu0 0
    %2063 = vmatpush.bf16.xpose.msra.mxu0 %v2057
    %2064 = vmatpush.bf16.xpose.msra.mxu0 %v2054
    %2065 = vmatpush.bf16.xpose.msra.mxu0 %v2051
    %2066 = vmatpush.bf16.xpose.msra.mxu0 %v2048
    %2067 = vmatmul.bf16.gmra.mxu0 %v2036
    %v2068 = vpop.f32.mrf.mxu0
    %v2069 = vadd.f32 %v244, %v2068
    %v2070 = vpop.f32.mrf.mxu0
    %v2071 = vadd.f32 %v245, %v2070
    %2072 = vmatmul.bf16.gmra.mxu0 %v2039
    %v2073 = vpop.f32.mrf.mxu0
    %v2074 = vadd.f32 %v246, %v2073
    %v2075 = vpop.f32.mrf.mxu0
    %v2076 = vadd.f32 %v247, %v2075
    %2077 = vmatmul.bf16.gmra.mxu0 %v2042
    %v2078 = vpop.f32.mrf.mxu0
    %v2079 = vadd.f32 %v248, %v2078
    %v2080 = vpop.f32.mrf.mxu0
    %v2081 = vadd.f32 %v249, %v2080
    %2082 = vmatmul.bf16.gmra.mxu0 %v2045
    %v2083 = vpop.f32.mrf.mxu0
    %v2084 = vadd.f32 %v250, %v2083
    %v2085 = vpop.f32.mrf.mxu0
    %v2086 = vadd.f32 %v251, %v2085
    %2087 = vdwg.mxu0
    %v2088 = vsel %vm384, %v2069, -inf
    %2089 = vmax.xlane.f32.xlu0 %v2088
    %v2090 = vpop.xlane.xlu0 %2089
    %v2091 = vsel %vm384, %v2071, -inf
    %2092 = vmax.xlane.f32.xlu0 %v2091
    %v2093 = vpop.xlane.xlu0 %2092
    %v2094 = vsel %vm384, %v2074, -inf
    %2095 = vmax.xlane.f32.xlu0 %v2094
    %v2096 = vpop.xlane.xlu0 %2095
    %v2097 = vsel %vm384, %v2076, -inf
    %2098 = vmax.xlane.f32.xlu0 %v2097
    %v2099 = vpop.xlane.xlu0 %2098
    %v2100 = vsel %vm384, %v2079, -inf
    %2101 = vmax.xlane.f32.xlu0 %v2100
    %v2102 = vpop.xlane.xlu0 %2101
    %v2103 = vsel %vm384, %v2081, -inf
    %2104 = vmax.xlane.f32.xlu0 %v2103
    %v2105 = vpop.xlane.xlu0 %2104
    %v2106 = vsel %vm384, %v2084, -inf
    %2107 = vmax.xlane.f32.xlu0 %v2106
    %v2108 = vpop.xlane.xlu0 %2107
    %v2109 = vsel %vm384, %v2086, -inf
    %2110 = vmax.xlane.f32.xlu0 %v2109
    %v2111 = vpop.xlane.xlu0 %2110
    %v2112 = vsub.f32 %v2069, %v2090
    %v2113 = vsub.f32 %v2071, %v2093
    %v2114 = vsub.f32 %v2074, %v2096
    %v2115 = vsub.f32 %v2076, %v2099
    %v2116 = vsub.f32 %v2079, %v2102
    %v2117 = vsub.f32 %v2081, %v2105
    %v2118 = vsub.f32 %v2084, %v2108
    %v2119 = vsub.f32 %v2086, %v2111
    %v2120 = vmul.f32 %v2112, 1.442695
    %v2121 = vpow.pop %v2120
    %v2122 = vmul.f32 %v2113, 1.442695
    %v2123 = vpow.pop %v2122
    %v2124 = vmul.f32 %v2114, 1.442695
    %v2125 = vpow.pop %v2124
    %v2126 = vmul.f32 %v2115, 1.442695
    %v2127 = vpow.pop %v2126
    %v2128 = vmul.f32 %v2116, 1.442695
    %v2129 = vpow.pop %v2128
    %v2130 = vmul.f32 %v2117, 1.442695
    %v2131 = vpow.pop %v2130
    %v2132 = vmul.f32 %v2118, 1.442695
    %v2133 = vpow.pop %v2132
    %v2134 = vmul.f32 %v2119, 1.442695
    %v2135 = vpow.pop %v2134
    %v2136 = vsel %vm384, %v2121, 0.0
    %2137 = vadd.xlane.f32.xlu0 %v2136
    %v2138 = vpop.xlane.xlu0 %2137
    %v2139 = vsel %vm384, %v2123, 0.0
    %2140 = vadd.xlane.f32.xlu0 %v2139
    %v2141 = vpop.xlane.xlu0 %2140
    %v2142 = vsel %vm384, %v2125, 0.0
    %2143 = vadd.xlane.f32.xlu0 %v2142
    %v2144 = vpop.xlane.xlu0 %2143
    %v2145 = vsel %vm384, %v2127, 0.0
    %2146 = vadd.xlane.f32.xlu0 %v2145
    %v2147 = vpop.xlane.xlu0 %2146
    %v2148 = vsel %vm384, %v2129, 0.0
    %2149 = vadd.xlane.f32.xlu0 %v2148
    %v2150 = vpop.xlane.xlu0 %2149
    %v2151 = vsel %vm384, %v2131, 0.0
    %2152 = vadd.xlane.f32.xlu0 %v2151
    %v2153 = vpop.xlane.xlu0 %2152
    %v2154 = vsel %vm384, %v2133, 0.0
    %2155 = vadd.xlane.f32.xlu0 %v2154
    %v2156 = vpop.xlane.xlu0 %2155
    %v2157 = vsel %vm384, %v2135, 0.0
    %2158 = vadd.xlane.f32.xlu0 %v2157
    %v2159 = vpop.xlane.xlu0 %2158
    %v2160 = vrcp.pop %v2138
    %v2161 = vrcp.pop %v2141
    %v2162 = vrcp.pop %v2144
    %v2163 = vrcp.pop %v2147
    %v2164 = vrcp.pop %v2150
    %v2165 = vrcp.pop %v2153
    %v2166 = vrcp.pop %v2156
    %v2167 = vrcp.pop %v2159
    %v2168 = vmul.f32 %v2121, %v2160
    %v2169 = vmul.f32 %v2123, %v2161
    %v2170 = vmul.f32 %v2125, %v2162
    %v2171 = vmul.f32 %v2127, %v2163
    %v2172 = vmul.f32 %v2129, %v2164
    %v2173 = vmul.f32 %v2131, %v2165
    %v2174 = vmul.f32 %v2133, %v2166
    %v2175 = vmul.f32 %v2135, %v2167
    %v2176 = vpack.c.bf16 %v2169, %v2168
    %v2177 = vpack.c.bf16 %v2171, %v2170
    %v2178 = vpack.c.bf16 %v2173, %v2172
    %v2179 = vpack.c.bf16 %v2175, %v2174
    %2180 = vrot.lane.b32.xlu0 %v1805, 48
    %v2181 = vpop.permute.xlu0 %2180
    %2182 = vrot.lane.b32.xlu0 %v1806, 48
    %v2183 = vpop.permute.xlu0 %2182
    %2184 = vrot.lane.b32.xlu0 %v1807, 48
    %v2185 = vpop.permute.xlu0 %2184
    %2186 = vrot.lane.b32.xlu0 %v1808, 48
    %v2187 = vpop.permute.xlu0 %2186
    %v2193 = vsel %vm384, %v2176, 0
    %v2196 = vsel %vm384, %v2177, 0
    %v2199 = vsel %vm384, %v2178, 0
    %v2202 = vsel %vm384, %v2179, 0
    %2204 = vmatpush.bf16.msra.mxu0 0
    %2205 = vmatpush.bf16.msra.mxu0 0
    %2206 = vmatpush.bf16.msra.mxu0 0
    %2207 = vmatpush.bf16.msra.mxu0 0
    %2208 = vmatpush.bf16.msra.mxu0 %v2187
    %2209 = vmatpush.bf16.msra.mxu0 %v2185
    %2210 = vmatpush.bf16.msra.mxu0 %v2183
    %2211 = vmatpush.bf16.msra.mxu0 %v2181
    %2212 = vmatmul.bf16.gmra.mxu0 %v2193
    %v2213 = vpop.f32.mrf.mxu0
    %v2214 = vadd.f32 0.0, %v2213
    %v2215 = vpop.f32.mrf.mxu0
    %v2216 = vadd.f32 0.0, %v2215
    %2217 = vmatmul.bf16.gmra.mxu0 %v2196
    %v2218 = vpop.f32.mrf.mxu0
    %v2219 = vadd.f32 0.0, %v2218
    %v2220 = vpop.f32.mrf.mxu0
    %v2221 = vadd.f32 0.0, %v2220
    %2222 = vmatmul.bf16.gmra.mxu0 %v2199
    %v2223 = vpop.f32.mrf.mxu0
    %v2224 = vadd.f32 0.0, %v2223
    %v2225 = vpop.f32.mrf.mxu0
    %v2226 = vadd.f32 0.0, %v2225
    %2227 = vmatmul.bf16.gmra.mxu0 %v2202
    %v2228 = vpop.f32.mrf.mxu0
    %v2229 = vadd.f32 0.0, %v2228
    %v2230 = vpop.f32.mrf.mxu0
    %v2231 = vadd.f32 0.0, %v2230
    %2232 = vdwg.mxu0
    %2241 = vrot.lane.b32.xlu0 %v2214, 16
    %v2242 = vpop.permute.xlu0 %2241
    %2243 = vrot.lane.b32.xlu0 %v2216, 16
    %v2244 = vpop.permute.xlu0 %2243
    %2245 = vrot.lane.b32.xlu0 %v2219, 16
    %v2246 = vpop.permute.xlu0 %2245
    %2247 = vrot.lane.b32.xlu0 %v2221, 16
    %v2248 = vpop.permute.xlu0 %2247
    %2249 = vrot.lane.b32.xlu0 %v2224, 16
    %v2250 = vpop.permute.xlu0 %2249
    %2251 = vrot.lane.b32.xlu0 %v2226, 16
    %v2252 = vpop.permute.xlu0 %2251
    %2253 = vrot.lane.b32.xlu0 %v2229, 16
    %v2254 = vpop.permute.xlu0 %2253
    %2255 = vrot.lane.b32.xlu0 %v2231, 16
    %v2256 = vpop.permute.xlu0 %2255
    %v2265 = vsel %vm330, %v2000, %v2242
    %v2266 = vsel %vm330, %v2002, %v2244
    %v2267 = vsel %vm330, %v2005, %v2246
    %v2268 = vsel %vm330, %v2007, %v2248
    %v2269 = vsel %vm330, %v2010, %v2250
    %v2270 = vsel %vm330, %v2012, %v2252
    %v2271 = vsel %vm330, %v2015, %v2254
    %v2272 = vsel %vm330, %v2017, %v2256
    %s2273 = scalar_lea.vmem %s4, 16
    %v2274 = vld [vmem:[%s2273] sm:$0xf]
    %v2275 = vld [vmem:[%s2273 + $0x4] sm:$0xf]
    %v2276 = vld [vmem:[%s2273 + $0x8] sm:$0xf]
    %v2277 = vld [vmem:[%s2273 + $0xc] sm:$0xf]
    %v2278 = vpack.c.bf16 %v2266, %v2265
    %v2279 = vpack.c.bf16 %v2268, %v2267
    %v2280 = vpack.c.bf16 %v2270, %v2269
    %v2281 = vpack.c.bf16 %v2272, %v2271
    %v2282 = vperm.slane %v32, 3
    %v2287 = vunpack.c.l.b16 %v2274
    %v2288 = vunpack.c.l.b16 %v2275
    %v2289 = vunpack.c.l.b16 %v2276
    %v2290 = vunpack.c.l.b16 %v2277
    %v2291 = vpack.c.b16 %v2288, %v2287
    %v2292 = vpack.c.b16 %v2290, %v2289
    %v2296 = vsel %vm42, %v2278, 0
    %v2299 = vsel %vm42, %v2279, 0
    %v2302 = vsel %vm42, %v2280, 0
    %v2305 = vsel %vm42, %v2281, 0
    %2307 = vmatpush.bf16.msra.mxu0 0
    %2308 = vmatpush.bf16.msra.mxu0 0
    %2309 = vmatpush.bf16.msra.mxu0 0
    %2310 = vmatpush.bf16.msra.mxu0 0
    %2311 = vmatpush.bf16.msra.mxu0 0
    %2312 = vmatpush.bf16.msra.mxu0 0
    %2313 = vmatpush.bf16.msra.mxu0 %v2292
    %2314 = vmatpush.bf16.msra.mxu0 %v2291
    %2315 = vmatmul.bf16.gmra.mxu0 %v2296
    %v2316 = vpop.f32.mrf.mxu0
    %v2317 = vadd.f32 %v2282, %v2316
    %v2318 = vpop.f32.mrf.mxu0
    %v2319 = vadd.f32 %v2282, %v2318
    %2320 = vmatmul.bf16.gmra.mxu0 %v2299
    %v2321 = vpop.f32.mrf.mxu0
    %v2322 = vadd.f32 %v2282, %v2321
    %v2323 = vpop.f32.mrf.mxu0
    %v2324 = vadd.f32 %v2282, %v2323
    %2325 = vmatmul.bf16.gmra.mxu0 %v2302
    %v2326 = vpop.f32.mrf.mxu0
    %v2327 = vadd.f32 %v2282, %v2326
    %v2328 = vpop.f32.mrf.mxu0
    %v2329 = vadd.f32 %v2282, %v2328
    %2330 = vmatmul.bf16.gmra.mxu0 %v2305
    %v2331 = vpop.f32.mrf.mxu0
    %v2332 = vadd.f32 %v2282, %v2331
    %v2333 = vpop.f32.mrf.mxu0
    %v2334 = vadd.f32 %v2282, %v2333
    %2335 = vdwg.mxu0
    %v2336 = vadd.f32 %v2317, %v1734
    %v2337 = vadd.f32 %v2319, %v1735
    %v2338 = vadd.f32 %v2322, %v1736
    %v2339 = vadd.f32 %v2324, %v1737
    %v2340 = vadd.f32 %v2327, %v1738
    %v2341 = vadd.f32 %v2329, %v1739
    %v2342 = vadd.f32 %v2332, %v1740
    %v2343 = vadd.f32 %v2334, %v1741
    %v2344 = vsel %vm42, %v2336, 0.0
    %2345 = vadd.xlane.f32.xlu0 %v2344
    %v2346 = vpop.xlane.xlu0 %2345
    %v2347 = vsel %vm42, %v2337, 0.0
    %2348 = vadd.xlane.f32.xlu0 %v2347
    %v2349 = vpop.xlane.xlu0 %2348
    %v2350 = vsel %vm42, %v2338, 0.0
    %2351 = vadd.xlane.f32.xlu0 %v2350
    %v2352 = vpop.xlane.xlu0 %2351
    %v2353 = vsel %vm42, %v2339, 0.0
    %2354 = vadd.xlane.f32.xlu0 %v2353
    %v2355 = vpop.xlane.xlu0 %2354
    %v2356 = vsel %vm42, %v2340, 0.0
    %2357 = vadd.xlane.f32.xlu0 %v2356
    %v2358 = vpop.xlane.xlu0 %2357
    %v2359 = vsel %vm42, %v2341, 0.0
    %2360 = vadd.xlane.f32.xlu0 %v2359
    %v2361 = vpop.xlane.xlu0 %2360
    %v2362 = vsel %vm42, %v2342, 0.0
    %2363 = vadd.xlane.f32.xlu0 %v2362
    %v2364 = vpop.xlane.xlu0 %2363
    %v2365 = vsel %vm42, %v2343, 0.0
    %2366 = vadd.xlane.f32.xlu0 %v2365
    %v2367 = vpop.xlane.xlu0 %2366
    %v2368 = vmul.f32 %v2346, %v73
    %v2369 = vmul.f32 %v2349, %v73
    %v2370 = vmul.f32 %v2352, %v73
    %v2371 = vmul.f32 %v2355, %v73
    %v2372 = vmul.f32 %v2358, %v73
    %v2373 = vmul.f32 %v2361, %v73
    %v2374 = vmul.f32 %v2364, %v73
    %v2375 = vmul.f32 %v2367, %v73
    %v2376 = vsub.f32 %v2336, %v2368
    %v2377 = vsub.f32 %v2337, %v2369
    %v2378 = vsub.f32 %v2338, %v2370
    %v2379 = vsub.f32 %v2339, %v2371
    %v2380 = vsub.f32 %v2340, %v2372
    %v2381 = vsub.f32 %v2341, %v2373
    %v2382 = vsub.f32 %v2342, %v2374
    %v2383 = vsub.f32 %v2343, %v2375
    %v2384 = vmul.f32 %v2376, %v2376
    %v2385 = vmul.f32 %v2377, %v2377
    %v2386 = vmul.f32 %v2378, %v2378
    %v2387 = vmul.f32 %v2379, %v2379
    %v2388 = vmul.f32 %v2380, %v2380
    %v2389 = vmul.f32 %v2381, %v2381
    %v2390 = vmul.f32 %v2382, %v2382
    %v2391 = vmul.f32 %v2383, %v2383
    %v2392 = vsel %vm42, %v2384, 0.0
    %2393 = vadd.xlane.f32.xlu0 %v2392
    %v2394 = vpop.xlane.xlu0 %2393
    %v2395 = vsel %vm42, %v2385, 0.0
    %2396 = vadd.xlane.f32.xlu0 %v2395
    %v2397 = vpop.xlane.xlu0 %2396
    %v2398 = vsel %vm42, %v2386, 0.0
    %2399 = vadd.xlane.f32.xlu0 %v2398
    %v2400 = vpop.xlane.xlu0 %2399
    %v2401 = vsel %vm42, %v2387, 0.0
    %2402 = vadd.xlane.f32.xlu0 %v2401
    %v2403 = vpop.xlane.xlu0 %2402
    %v2404 = vsel %vm42, %v2388, 0.0
    %2405 = vadd.xlane.f32.xlu0 %v2404
    %v2406 = vpop.xlane.xlu0 %2405
    %v2407 = vsel %vm42, %v2389, 0.0
    %2408 = vadd.xlane.f32.xlu0 %v2407
    %v2409 = vpop.xlane.xlu0 %2408
    %v2410 = vsel %vm42, %v2390, 0.0
    %2411 = vadd.xlane.f32.xlu0 %v2410
    %v2412 = vpop.xlane.xlu0 %2411
    %v2413 = vsel %vm42, %v2391, 0.0
    %2414 = vadd.xlane.f32.xlu0 %v2413
    %v2415 = vpop.xlane.xlu0 %2414
    %v2416 = vmul.f32 %v2394, %v73
    %v2417 = vmul.f32 %v2397, %v73
    %v2418 = vmul.f32 %v2400, %v73
    %v2419 = vmul.f32 %v2403, %v73
    %v2420 = vmul.f32 %v2406, %v73
    %v2421 = vmul.f32 %v2409, %v73
    %v2422 = vmul.f32 %v2412, %v73
    %v2423 = vmul.f32 %v2415, %v73
    %v2424 = vadd.f32 %v2416, 1e-12
    %v2425 = vadd.f32 %v2417, 1e-12
    %v2426 = vadd.f32 %v2418, 1e-12
    %v2427 = vadd.f32 %v2419, 1e-12
    %v2428 = vadd.f32 %v2420, 1e-12
    %v2429 = vadd.f32 %v2421, 1e-12
    %v2430 = vadd.f32 %v2422, 1e-12
    %v2431 = vadd.f32 %v2423, 1e-12
    %v2432 = vrsqrt.pop %v2424
    %v2433 = vmul.f32 %v2432, %v2424
    %v2434 = vmul.f32 %v2433, %v2432
    %v2435 = vmul.f32 0.5, %v2434
    %v2436 = vsub.f32 1.5, %v2435
    %v2437 = vmul.f32 %v2432, %v2436
    %vm2438 = vweird.f32 %v2424
    %vm2439 = vweird.f32 %v2432
    %vm2440 = vmor %vm2438, %vm2439
    %v2441 = vsel %vm2440, %v2432, %v2437
    %v2442 = vrsqrt.pop %v2425
    %v2443 = vmul.f32 %v2442, %v2425
    %v2444 = vmul.f32 %v2443, %v2442
    %v2445 = vmul.f32 0.5, %v2444
    %v2446 = vsub.f32 1.5, %v2445
    %v2447 = vmul.f32 %v2442, %v2446
    %vm2448 = vweird.f32 %v2425
    %vm2449 = vweird.f32 %v2442
    %vm2450 = vmor %vm2448, %vm2449
    %v2451 = vsel %vm2450, %v2442, %v2447
    %v2452 = vrsqrt.pop %v2426
    %v2453 = vmul.f32 %v2452, %v2426
    %v2454 = vmul.f32 %v2453, %v2452
    %v2455 = vmul.f32 0.5, %v2454
    %v2456 = vsub.f32 1.5, %v2455
    %v2457 = vmul.f32 %v2452, %v2456
    %vm2458 = vweird.f32 %v2426
    %vm2459 = vweird.f32 %v2452
    %vm2460 = vmor %vm2458, %vm2459
    %v2461 = vsel %vm2460, %v2452, %v2457
    %v2462 = vrsqrt.pop %v2427
    %v2463 = vmul.f32 %v2462, %v2427
    %v2464 = vmul.f32 %v2463, %v2462
    %v2465 = vmul.f32 0.5, %v2464
    %v2466 = vsub.f32 1.5, %v2465
    %v2467 = vmul.f32 %v2462, %v2466
    %vm2468 = vweird.f32 %v2427
    %vm2469 = vweird.f32 %v2462
    %vm2470 = vmor %vm2468, %vm2469
    %v2471 = vsel %vm2470, %v2462, %v2467
    %v2472 = vrsqrt.pop %v2428
    %v2473 = vmul.f32 %v2472, %v2428
    %v2474 = vmul.f32 %v2473, %v2472
    %v2475 = vmul.f32 0.5, %v2474
    %v2476 = vsub.f32 1.5, %v2475
    %v2477 = vmul.f32 %v2472, %v2476
    %vm2478 = vweird.f32 %v2428
    %vm2479 = vweird.f32 %v2472
    %vm2480 = vmor %vm2478, %vm2479
    %v2481 = vsel %vm2480, %v2472, %v2477
    %v2482 = vrsqrt.pop %v2429
    %v2483 = vmul.f32 %v2482, %v2429
    %v2484 = vmul.f32 %v2483, %v2482
    %v2485 = vmul.f32 0.5, %v2484
    %v2486 = vsub.f32 1.5, %v2485
    %v2487 = vmul.f32 %v2482, %v2486
    %vm2488 = vweird.f32 %v2429
    %vm2489 = vweird.f32 %v2482
    %vm2490 = vmor %vm2488, %vm2489
    %v2491 = vsel %vm2490, %v2482, %v2487
    %v2492 = vrsqrt.pop %v2430
    %v2493 = vmul.f32 %v2492, %v2430
    %v2494 = vmul.f32 %v2493, %v2492
    %v2495 = vmul.f32 0.5, %v2494
    %v2496 = vsub.f32 1.5, %v2495
    %v2497 = vmul.f32 %v2492, %v2496
    %vm2498 = vweird.f32 %v2430
    %vm2499 = vweird.f32 %v2492
    %vm2500 = vmor %vm2498, %vm2499
    %v2501 = vsel %vm2500, %v2492, %v2497
    %v2502 = vrsqrt.pop %v2431
    %v2503 = vmul.f32 %v2502, %v2431
    %v2504 = vmul.f32 %v2503, %v2502
    %v2505 = vmul.f32 0.5, %v2504
    %v2506 = vsub.f32 1.5, %v2505
    %v2507 = vmul.f32 %v2502, %v2506
    %vm2508 = vweird.f32 %v2431
    %vm2509 = vweird.f32 %v2502
    %vm2510 = vmor %vm2508, %vm2509
    %v2511 = vsel %vm2510, %v2502, %v2507
    %v2512 = vmul.f32 %v2376, %v2441
    %v2513 = vmul.f32 %v2377, %v2451
    %v2514 = vmul.f32 %v2378, %v2461
    %v2515 = vmul.f32 %v2379, %v2471
    %v2516 = vmul.f32 %v2380, %v2481
    %v2517 = vmul.f32 %v2381, %v2491
    %v2518 = vmul.f32 %v2382, %v2501
    %v2519 = vmul.f32 %v2383, %v2511
    %v2520 = vperm.slane %v32, 4
    %v2521 = vmul.f32 %v2512, %v2520
    %v2522 = vmul.f32 %v2513, %v2520
    %v2523 = vmul.f32 %v2514, %v2520
    %v2524 = vmul.f32 %v2515, %v2520
    %v2525 = vmul.f32 %v2516, %v2520
    %v2526 = vmul.f32 %v2517, %v2520
    %v2527 = vmul.f32 %v2518, %v2520
    %v2528 = vmul.f32 %v2519, %v2520
    %v2529 = vperm.slane %v32, 5
    %v2530 = vadd.f32 %v2521, %v2529
    %v2531 = vadd.f32 %v2522, %v2529
    %v2532 = vadd.f32 %v2523, %v2529
    %v2533 = vadd.f32 %v2524, %v2529
    %v2534 = vadd.f32 %v2525, %v2529
    %v2535 = vadd.f32 %v2526, %v2529
    %v2536 = vadd.f32 %v2527, %v2529
    %v2537 = vadd.f32 %v2528, %v2529
    %s2538 = scalar_lea.vmem %s5, 16
    %v2539 = vld [vmem:[%s2538] sm:$0xf]
    %v2540 = vld [vmem:[%s2538 + $0x4] sm:$0xf]
    %v2541 = vld [vmem:[%s2538 + $0x8] sm:$0xf]
    %v2542 = vld [vmem:[%s2538 + $0xc] sm:$0xf]
    %v2543 = vpack.c.bf16 %v2531, %v2530
    %v2544 = vpack.c.bf16 %v2533, %v2532
    %v2545 = vpack.c.bf16 %v2535, %v2534
    %v2546 = vpack.c.bf16 %v2537, %v2536
    %v2547 = vperm.slane %v32, 6
    %v2552 = vunpack.c.l.b16 %v2539
    %v2553 = vunpack.c.l.b16 %v2540
    %v2554 = vunpack.c.l.b16 %v2541
    %v2555 = vunpack.c.l.b16 %v2542
    %v2556 = vpack.c.b16 %v2553, %v2552
    %v2557 = vpack.c.b16 %v2555, %v2554
    %v2561 = vsel %vm42, %v2543, 0
    %v2564 = vsel %vm42, %v2544, 0
    %v2567 = vsel %vm42, %v2545, 0
    %v2570 = vsel %vm42, %v2546, 0
    %2572 = vmatpush.bf16.msra.mxu0 0
    %2573 = vmatpush.bf16.msra.mxu0 0
    %2574 = vmatpush.bf16.msra.mxu0 0
    %2575 = vmatpush.bf16.msra.mxu0 0
    %2576 = vmatpush.bf16.msra.mxu0 0
    %2577 = vmatpush.bf16.msra.mxu0 0
    %2578 = vmatpush.bf16.msra.mxu0 %v2557
    %2579 = vmatpush.bf16.msra.mxu0 %v2556
    %2580 = vmatmul.bf16.gmra.mxu0 %v2561
    %v2581 = vpop.f32.mrf.mxu0
    %v2582 = vadd.f32 %v2547, %v2581
    %v2583 = vpop.f32.mrf.mxu0
    %v2584 = vadd.f32 %v2547, %v2583
    %2585 = vmatmul.bf16.gmra.mxu0 %v2564
    %v2586 = vpop.f32.mrf.mxu0
    %v2587 = vadd.f32 %v2547, %v2586
    %v2588 = vpop.f32.mrf.mxu0
    %v2589 = vadd.f32 %v2547, %v2588
    %2590 = vmatmul.bf16.gmra.mxu0 %v2567
    %v2591 = vpop.f32.mrf.mxu0
    %v2592 = vadd.f32 %v2547, %v2591
    %v2593 = vpop.f32.mrf.mxu0
    %v2594 = vadd.f32 %v2547, %v2593
    %2595 = vmatmul.bf16.gmra.mxu0 %v2570
    %v2596 = vpop.f32.mrf.mxu0
    %v2597 = vadd.f32 %v2547, %v2596
    %v2598 = vpop.f32.mrf.mxu0
    %v2599 = vadd.f32 %v2547, %v2598
    %2600 = vdwg.mxu0
    %v2601 = vmul.f32 %v2582, 0.5
    %v2602 = vmul.f32 %v2584, 0.5
    %v2603 = vmul.f32 %v2587, 0.5
    %v2604 = vmul.f32 %v2589, 0.5
    %v2605 = vmul.f32 %v2592, 0.5
    %v2606 = vmul.f32 %v2594, 0.5
    %v2607 = vmul.f32 %v2597, 0.5
    %v2608 = vmul.f32 %v2599, 0.5
    %v2609 = vmul.f32 %v2582, 0.70710677
    %v2610 = vmul.f32 %v2584, 0.70710677
    %v2611 = vmul.f32 %v2587, 0.70710677
    %v2612 = vmul.f32 %v2589, 0.70710677
    %v2613 = vmul.f32 %v2592, 0.70710677
    %v2614 = vmul.f32 %v2594, 0.70710677
    %v2615 = vmul.f32 %v2597, 0.70710677
    %v2616 = vmul.f32 %v2599, 0.70710677
    %v2617 = vmul.f32 %v2609, %v2609
    %v2618 = vmin.f32 16.0, %v2617
    %v2619 = vmul.f32 %v2618, 2.1237322e-06
    %v2620 = vadd.f32 %v2619, 0.00028619796
    %v2621 = vmul.f32 %v2618, %v2620
    %v2622 = vadd.f32 %v2621, 0.0036580483
    %v2623 = vmul.f32 %v2618, %v2622
    %v2624 = vadd.f32 %v2623, 0.05243302
    %v2625 = vmul.f32 %v2618, %v2624
    %v2626 = vadd.f32 %v2625, 0.18741608
    %v2627 = vmul.f32 %v2618, %v2626
    %v2628 = vadd.f32 %v2627, 1.1283791
    %v2629 = vmul.f32 %v2609, %v2628
    %v2630 = vmul.f32 %v2618, 3.8918573e-05
    %v2631 = vadd.f32 %v2630, 0.001143296
    %v2632 = vmul.f32 %v2618, %v2631
    %v2633 = vadd.f32 %v2632, 0.014752088
    %v2634 = vmul.f32 %v2618, %v2633
    %v2635 = vadd.f32 %v2634, 0.112945676
    %v2636 = vmul.f32 %v2618, %v2635
    %v2637 = vadd.f32 %v2636, 0.4994258
    %v2638 = vmul.f32 %v2618, %v2637
    %v2639 = vadd.f32 %v2638, 1.0
    %v2640 = vrcp.pop %v2639
    %v2641 = vmul.f32 %v2639, %v2640
    %v2642 = vsub.f32 1.0, %v2641
    %v2643 = vmul.f32 %v2640, %v2642
    %v2644 = vadd.f32 %v2640, %v2643
    %vm2645 = vweird.f32 %v2639
    %vm2646 = vweird.f32 %v2640
    %vm2647 = vmor %vm2645, %vm2646
    %v2648 = vsel %vm2647, %v2640, %v2644
    %v2649 = vand.u32 2147483647, %v2639
    %vm2650 = vcmp.eq.f32.partialorder %v2649, 8.507059e+37
    %v2651 = vand.u32 %v2639, 2147483648
    %v2652 = vor.u32 1.1754944e-38, %v2651
    %v2653 = vsel %vm2650, %v2652, %v2648
    %v2654 = vmul.f32 %v2629, %v2653
    %v2655 = vmin.f32 %v2654, 1.0
    %v2656 = vmax.f32 %v2655, -1.0
    %v2657 = vmul.f32 %v2610, %v2610
    %v2658 = vmin.f32 16.0, %v2657
    %v2659 = vmul.f32 %v2658, 2.1237322e-06
    %v2660 = vadd.f32 %v2659, 0.00028619796
    %v2661 = vmul.f32 %v2658, %v2660
    %v2662 = vadd.f32 %v2661, 0.0036580483
    %v2663 = vmul.f32 %v2658, %v2662
    %v2664 = vadd.f32 %v2663, 0.05243302
    %v2665 = vmul.f32 %v2658, %v2664
    %v2666 = vadd.f32 %v2665, 0.18741608
    %v2667 = vmul.f32 %v2658, %v2666
    %v2668 = vadd.f32 %v2667, 1.1283791
    %v2669 = vmul.f32 %v2610, %v2668
    %v2670 = vmul.f32 %v2658, 3.8918573e-05
    %v2671 = vadd.f32 %v2670, 0.001143296
    %v2672 = vmul.f32 %v2658, %v2671
    %v2673 = vadd.f32 %v2672, 0.014752088
    %v2674 = vmul.f32 %v2658, %v2673
    %v2675 = vadd.f32 %v2674, 0.112945676
    %v2676 = vmul.f32 %v2658, %v2675
    %v2677 = vadd.f32 %v2676, 0.4994258
    %v2678 = vmul.f32 %v2658, %v2677
    %v2679 = vadd.f32 %v2678, 1.0
    %v2680 = vrcp.pop %v2679
    %v2681 = vmul.f32 %v2679, %v2680
    %v2682 = vsub.f32 1.0, %v2681
    %v2683 = vmul.f32 %v2680, %v2682
    %v2684 = vadd.f32 %v2680, %v2683
    %vm2685 = vweird.f32 %v2679
    %vm2686 = vweird.f32 %v2680
    %vm2687 = vmor %vm2685, %vm2686
    %v2688 = vsel %vm2687, %v2680, %v2684
    %v2689 = vand.u32 2147483647, %v2679
    %vm2690 = vcmp.eq.f32.partialorder %v2689, 8.507059e+37
    %v2691 = vand.u32 %v2679, 2147483648
    %v2692 = vor.u32 1.1754944e-38, %v2691
    %v2693 = vsel %vm2690, %v2692, %v2688
    %v2694 = vmul.f32 %v2669, %v2693
    %v2695 = vmin.f32 %v2694, 1.0
    %v2696 = vmax.f32 %v2695, -1.0
    %v2697 = vmul.f32 %v2611, %v2611
    %v2698 = vmin.f32 16.0, %v2697
    %v2699 = vmul.f32 %v2698, 2.1237322e-06
    %v2700 = vadd.f32 %v2699, 0.00028619796
    %v2701 = vmul.f32 %v2698, %v2700
    %v2702 = vadd.f32 %v2701, 0.0036580483
    %v2703 = vmul.f32 %v2698, %v2702
    %v2704 = vadd.f32 %v2703, 0.05243302
    %v2705 = vmul.f32 %v2698, %v2704
    %v2706 = vadd.f32 %v2705, 0.18741608
    %v2707 = vmul.f32 %v2698, %v2706
    %v2708 = vadd.f32 %v2707, 1.1283791
    %v2709 = vmul.f32 %v2611, %v2708
    %v2710 = vmul.f32 %v2698, 3.8918573e-05
    %v2711 = vadd.f32 %v2710, 0.001143296
    %v2712 = vmul.f32 %v2698, %v2711
    %v2713 = vadd.f32 %v2712, 0.014752088
    %v2714 = vmul.f32 %v2698, %v2713
    %v2715 = vadd.f32 %v2714, 0.112945676
    %v2716 = vmul.f32 %v2698, %v2715
    %v2717 = vadd.f32 %v2716, 0.4994258
    %v2718 = vmul.f32 %v2698, %v2717
    %v2719 = vadd.f32 %v2718, 1.0
    %v2720 = vrcp.pop %v2719
    %v2721 = vmul.f32 %v2719, %v2720
    %v2722 = vsub.f32 1.0, %v2721
    %v2723 = vmul.f32 %v2720, %v2722
    %v2724 = vadd.f32 %v2720, %v2723
    %vm2725 = vweird.f32 %v2719
    %vm2726 = vweird.f32 %v2720
    %vm2727 = vmor %vm2725, %vm2726
    %v2728 = vsel %vm2727, %v2720, %v2724
    %v2729 = vand.u32 2147483647, %v2719
    %vm2730 = vcmp.eq.f32.partialorder %v2729, 8.507059e+37
    %v2731 = vand.u32 %v2719, 2147483648
    %v2732 = vor.u32 1.1754944e-38, %v2731
    %v2733 = vsel %vm2730, %v2732, %v2728
    %v2734 = vmul.f32 %v2709, %v2733
    %v2735 = vmin.f32 %v2734, 1.0
    %v2736 = vmax.f32 %v2735, -1.0
    %v2737 = vmul.f32 %v2612, %v2612
    %v2738 = vmin.f32 16.0, %v2737
    %v2739 = vmul.f32 %v2738, 2.1237322e-06
    %v2740 = vadd.f32 %v2739, 0.00028619796
    %v2741 = vmul.f32 %v2738, %v2740
    %v2742 = vadd.f32 %v2741, 0.0036580483
    %v2743 = vmul.f32 %v2738, %v2742
    %v2744 = vadd.f32 %v2743, 0.05243302
    %v2745 = vmul.f32 %v2738, %v2744
    %v2746 = vadd.f32 %v2745, 0.18741608
    %v2747 = vmul.f32 %v2738, %v2746
    %v2748 = vadd.f32 %v2747, 1.1283791
    %v2749 = vmul.f32 %v2612, %v2748
    %v2750 = vmul.f32 %v2738, 3.8918573e-05
    %v2751 = vadd.f32 %v2750, 0.001143296
    %v2752 = vmul.f32 %v2738, %v2751
    %v2753 = vadd.f32 %v2752, 0.014752088
    %v2754 = vmul.f32 %v2738, %v2753
    %v2755 = vadd.f32 %v2754, 0.112945676
    %v2756 = vmul.f32 %v2738, %v2755
    %v2757 = vadd.f32 %v2756, 0.4994258
    %v2758 = vmul.f32 %v2738, %v2757
    %v2759 = vadd.f32 %v2758, 1.0
    %v2760 = vrcp.pop %v2759
    %v2761 = vmul.f32 %v2759, %v2760
    %v2762 = vsub.f32 1.0, %v2761
    %v2763 = vmul.f32 %v2760, %v2762
    %v2764 = vadd.f32 %v2760, %v2763
    %vm2765 = vweird.f32 %v2759
    %vm2766 = vweird.f32 %v2760
    %vm2767 = vmor %vm2765, %vm2766
    %v2768 = vsel %vm2767, %v2760, %v2764
    %v2769 = vand.u32 2147483647, %v2759
    %vm2770 = vcmp.eq.f32.partialorder %v2769, 8.507059e+37
    %v2771 = vand.u32 %v2759, 2147483648
    %v2772 = vor.u32 1.1754944e-38, %v2771
    %v2773 = vsel %vm2770, %v2772, %v2768
    %v2774 = vmul.f32 %v2749, %v2773
    %v2775 = vmin.f32 %v2774, 1.0
    %v2776 = vmax.f32 %v2775, -1.0
    %v2777 = vmul.f32 %v2613, %v2613
    %v2778 = vmin.f32 16.0, %v2777
    %v2779 = vmul.f32 %v2778, 2.1237322e-06
    %v2780 = vadd.f32 %v2779, 0.00028619796
    %v2781 = vmul.f32 %v2778, %v2780
    %v2782 = vadd.f32 %v2781, 0.0036580483
    %v2783 = vmul.f32 %v2778, %v2782
    %v2784 = vadd.f32 %v2783, 0.05243302
    %v2785 = vmul.f32 %v2778, %v2784
    %v2786 = vadd.f32 %v2785, 0.18741608
    %v2787 = vmul.f32 %v2778, %v2786
    %v2788 = vadd.f32 %v2787, 1.1283791
    %v2789 = vmul.f32 %v2613, %v2788
    %v2790 = vmul.f32 %v2778, 3.8918573e-05
    %v2791 = vadd.f32 %v2790, 0.001143296
    %v2792 = vmul.f32 %v2778, %v2791
    %v2793 = vadd.f32 %v2792, 0.014752088
    %v2794 = vmul.f32 %v2778, %v2793
    %v2795 = vadd.f32 %v2794, 0.112945676
    %v2796 = vmul.f32 %v2778, %v2795
    %v2797 = vadd.f32 %v2796, 0.4994258
    %v2798 = vmul.f32 %v2778, %v2797
    %v2799 = vadd.f32 %v2798, 1.0
    %v2800 = vrcp.pop %v2799
    %v2801 = vmul.f32 %v2799, %v2800
    %v2802 = vsub.f32 1.0, %v2801
    %v2803 = vmul.f32 %v2800, %v2802
    %v2804 = vadd.f32 %v2800, %v2803
    %vm2805 = vweird.f32 %v2799
    %vm2806 = vweird.f32 %v2800
    %vm2807 = vmor %vm2805, %vm2806
    %v2808 = vsel %vm2807, %v2800, %v2804
    %v2809 = vand.u32 2147483647, %v2799
    %vm2810 = vcmp.eq.f32.partialorder %v2809, 8.507059e+37
    %v2811 = vand.u32 %v2799, 2147483648
    %v2812 = vor.u32 1.1754944e-38, %v2811
    %v2813 = vsel %vm2810, %v2812, %v2808
    %v2814 = vmul.f32 %v2789, %v2813
    %v2815 = vmin.f32 %v2814, 1.0
    %v2816 = vmax.f32 %v2815, -1.0
    %v2817 = vmul.f32 %v2614, %v2614
    %v2818 = vmin.f32 16.0, %v2817
    %v2819 = vmul.f32 %v2818, 2.1237322e-06
    %v2820 = vadd.f32 %v2819, 0.00028619796
    %v2821 = vmul.f32 %v2818, %v2820
    %v2822 = vadd.f32 %v2821, 0.0036580483
    %v2823 = vmul.f32 %v2818, %v2822
    %v2824 = vadd.f32 %v2823, 0.05243302
    %v2825 = vmul.f32 %v2818, %v2824
    %v2826 = vadd.f32 %v2825, 0.18741608
    %v2827 = vmul.f32 %v2818, %v2826
    %v2828 = vadd.f32 %v2827, 1.1283791
    %v2829 = vmul.f32 %v2614, %v2828
    %v2830 = vmul.f32 %v2818, 3.8918573e-05
    %v2831 = vadd.f32 %v2830, 0.001143296
    %v2832 = vmul.f32 %v2818, %v2831
    %v2833 = vadd.f32 %v2832, 0.014752088
    %v2834 = vmul.f32 %v2818, %v2833
    %v2835 = vadd.f32 %v2834, 0.112945676
    %v2836 = vmul.f32 %v2818, %v2835
    %v2837 = vadd.f32 %v2836, 0.4994258
    %v2838 = vmul.f32 %v2818, %v2837
    %v2839 = vadd.f32 %v2838, 1.0
    %v2840 = vrcp.pop %v2839
    %v2841 = vmul.f32 %v2839, %v2840
    %v2842 = vsub.f32 1.0, %v2841
    %v2843 = vmul.f32 %v2840, %v2842
    %v2844 = vadd.f32 %v2840, %v2843
    %vm2845 = vweird.f32 %v2839
    %vm2846 = vweird.f32 %v2840
    %vm2847 = vmor %vm2845, %vm2846
    %v2848 = vsel %vm2847, %v2840, %v2844
    %v2849 = vand.u32 2147483647, %v2839
    %vm2850 = vcmp.eq.f32.partialorder %v2849, 8.507059e+37
    %v2851 = vand.u32 %v2839, 2147483648
    %v2852 = vor.u32 1.1754944e-38, %v2851
    %v2853 = vsel %vm2850, %v2852, %v2848
    %v2854 = vmul.f32 %v2829, %v2853
    %v2855 = vmin.f32 %v2854, 1.0
    %v2856 = vmax.f32 %v2855, -1.0
    %v2857 = vmul.f32 %v2615, %v2615
    %v2858 = vmin.f32 16.0, %v2857
    %v2859 = vmul.f32 %v2858, 2.1237322e-06
    %v2860 = vadd.f32 %v2859, 0.00028619796
    %v2861 = vmul.f32 %v2858, %v2860
    %v2862 = vadd.f32 %v2861, 0.0036580483
    %v2863 = vmul.f32 %v2858, %v2862
    %v2864 = vadd.f32 %v2863, 0.05243302
    %v2865 = vmul.f32 %v2858, %v2864
    %v2866 = vadd.f32 %v2865, 0.18741608
    %v2867 = vmul.f32 %v2858, %v2866
    %v2868 = vadd.f32 %v2867, 1.1283791
    %v2869 = vmul.f32 %v2615, %v2868
    %v2870 = vmul.f32 %v2858, 3.8918573e-05
    %v2871 = vadd.f32 %v2870, 0.001143296
    %v2872 = vmul.f32 %v2858, %v2871
    %v2873 = vadd.f32 %v2872, 0.014752088
    %v2874 = vmul.f32 %v2858, %v2873
    %v2875 = vadd.f32 %v2874, 0.112945676
    %v2876 = vmul.f32 %v2858, %v2875
    %v2877 = vadd.f32 %v2876, 0.4994258
    %v2878 = vmul.f32 %v2858, %v2877
    %v2879 = vadd.f32 %v2878, 1.0
    %v2880 = vrcp.pop %v2879
    %v2881 = vmul.f32 %v2879, %v2880
    %v2882 = vsub.f32 1.0, %v2881
    %v2883 = vmul.f32 %v2880, %v2882
    %v2884 = vadd.f32 %v2880, %v2883
    %vm2885 = vweird.f32 %v2879
    %vm2886 = vweird.f32 %v2880
    %vm2887 = vmor %vm2885, %vm2886
    %v2888 = vsel %vm2887, %v2880, %v2884
    %v2889 = vand.u32 2147483647, %v2879
    %vm2890 = vcmp.eq.f32.partialorder %v2889, 8.507059e+37
    %v2891 = vand.u32 %v2879, 2147483648
    %v2892 = vor.u32 1.1754944e-38, %v2891
    %v2893 = vsel %vm2890, %v2892, %v2888
    %v2894 = vmul.f32 %v2869, %v2893
    %v2895 = vmin.f32 %v2894, 1.0
    %v2896 = vmax.f32 %v2895, -1.0
    %v2897 = vmul.f32 %v2616, %v2616
    %v2898 = vmin.f32 16.0, %v2897
    %v2899 = vmul.f32 %v2898, 2.1237322e-06
    %v2900 = vadd.f32 %v2899, 0.00028619796
    %v2901 = vmul.f32 %v2898, %v2900
    %v2902 = vadd.f32 %v2901, 0.0036580483
    %v2903 = vmul.f32 %v2898, %v2902
    %v2904 = vadd.f32 %v2903, 0.05243302
    %v2905 = vmul.f32 %v2898, %v2904
    %v2906 = vadd.f32 %v2905, 0.18741608
    %v2907 = vmul.f32 %v2898, %v2906
    %v2908 = vadd.f32 %v2907, 1.1283791
    %v2909 = vmul.f32 %v2616, %v2908
    %v2910 = vmul.f32 %v2898, 3.8918573e-05
    %v2911 = vadd.f32 %v2910, 0.001143296
    %v2912 = vmul.f32 %v2898, %v2911
    %v2913 = vadd.f32 %v2912, 0.014752088
    %v2914 = vmul.f32 %v2898, %v2913
    %v2915 = vadd.f32 %v2914, 0.112945676
    %v2916 = vmul.f32 %v2898, %v2915
    %v2917 = vadd.f32 %v2916, 0.4994258
    %v2918 = vmul.f32 %v2898, %v2917
    %v2919 = vadd.f32 %v2918, 1.0
    %v2920 = vrcp.pop %v2919
    %v2921 = vmul.f32 %v2919, %v2920
    %v2922 = vsub.f32 1.0, %v2921
    %v2923 = vmul.f32 %v2920, %v2922
    %v2924 = vadd.f32 %v2920, %v2923
    %vm2925 = vweird.f32 %v2919
    %vm2926 = vweird.f32 %v2920
    %vm2927 = vmor %vm2925, %vm2926
    %v2928 = vsel %vm2927, %v2920, %v2924
    %v2929 = vand.u32 2147483647, %v2919
    %vm2930 = vcmp.eq.f32.partialorder %v2929, 8.507059e+37
    %v2931 = vand.u32 %v2919, 2147483648
    %v2932 = vor.u32 1.1754944e-38, %v2931
    %v2933 = vsel %vm2930, %v2932, %v2928
    %v2934 = vmul.f32 %v2909, %v2933
    %v2935 = vmin.f32 %v2934, 1.0
    %v2936 = vmax.f32 %v2935, -1.0
    %v2937 = vadd.f32 %v2656, 1.0
    %v2938 = vadd.f32 %v2696, 1.0
    %v2939 = vadd.f32 %v2736, 1.0
    %v2940 = vadd.f32 %v2776, 1.0
    %v2941 = vadd.f32 %v2816, 1.0
    %v2942 = vadd.f32 %v2856, 1.0
    %v2943 = vadd.f32 %v2896, 1.0
    %v2944 = vadd.f32 %v2936, 1.0
    %v2945 = vmul.f32 %v2601, %v2937
    %v2946 = vmul.f32 %v2602, %v2938
    %v2947 = vmul.f32 %v2603, %v2939
    %v2948 = vmul.f32 %v2604, %v2940
    %v2949 = vmul.f32 %v2605, %v2941
    %v2950 = vmul.f32 %v2606, %v2942
    %v2951 = vmul.f32 %v2607, %v2943
    %v2952 = vmul.f32 %v2608, %v2944
    %s2953 = scalar_lea.vmem %s6, 32
    %v2954 = vld [vmem:[%s2953] sm:$0xf]
    %v2955 = vld [vmem:[%s2953 + $0x4] sm:$0xf]
    %v2956 = vld [vmem:[%s2953 + $0x8] sm:$0xf]
    %v2957 = vld [vmem:[%s2953 + $0xc] sm:$0xf]
    %v2958 = vld [vmem:[%s2953 + $0x10] sm:$0xf]
    %v2959 = vld [vmem:[%s2953 + $0x14] sm:$0xf]
    %v2960 = vld [vmem:[%s2953 + $0x18] sm:$0xf]
    %v2961 = vld [vmem:[%s2953 + $0x1c] sm:$0xf]
    %v2962 = vpack.c.bf16 %v2946, %v2945
    %v2963 = vpack.c.bf16 %v2948, %v2947
    %v2964 = vpack.c.bf16 %v2950, %v2949
    %v2965 = vpack.c.bf16 %v2952, %v2951
    %v2966 = vperm.slane %v32, 7
    %v2975 = vunpack.c.l.b16 %v2954
    %v2976 = vunpack.c.l.b16 %v2955
    %v2977 = vunpack.c.l.b16 %v2956
    %v2978 = vunpack.c.l.b16 %v2957
    %v2979 = vunpack.c.l.b16 %v2958
    %v2980 = vunpack.c.l.b16 %v2959
    %v2981 = vunpack.c.l.b16 %v2960
    %v2982 = vunpack.c.l.b16 %v2961
    %v2983 = vpack.c.b16 %v2976, %v2975
    %v2984 = vpack.c.b16 %v2978, %v2977
    %v2985 = vpack.c.b16 %v2980, %v2979
    %v2986 = vpack.c.b16 %v2982, %v2981
    %v2992 = vsel %vm384, %v2962, 0
    %v2995 = vsel %vm384, %v2963, 0
    %v2998 = vsel %vm384, %v2964, 0
    %v3001 = vsel %vm384, %v2965, 0
    %3003 = vmatpush.bf16.msra.mxu0 0
    %3004 = vmatpush.bf16.msra.mxu0 0
    %3005 = vmatpush.bf16.msra.mxu0 0
    %3006 = vmatpush.bf16.msra.mxu0 0
    %3007 = vmatpush.bf16.msra.mxu0 %v2986
    %3008 = vmatpush.bf16.msra.mxu0 %v2985
    %3009 = vmatpush.bf16.msra.mxu0 %v2984
    %3010 = vmatpush.bf16.msra.mxu0 %v2983
    %3011 = vmatmul.bf16.gmra.mxu0 %v2992
    %v3012 = vpop.f32.mrf.mxu0
    %v3013 = vadd.f32 %v2966, %v3012
    %v3014 = vpop.f32.mrf.mxu0
    %v3015 = vadd.f32 %v2966, %v3014
    %3016 = vmatmul.bf16.gmra.mxu0 %v2995
    %v3017 = vpop.f32.mrf.mxu0
    %v3018 = vadd.f32 %v2966, %v3017
    %v3019 = vpop.f32.mrf.mxu0
    %v3020 = vadd.f32 %v2966, %v3019
    %3021 = vmatmul.bf16.gmra.mxu0 %v2998
    %v3022 = vpop.f32.mrf.mxu0
    %v3023 = vadd.f32 %v2966, %v3022
    %v3024 = vpop.f32.mrf.mxu0
    %v3025 = vadd.f32 %v2966, %v3024
    %3026 = vmatmul.bf16.gmra.mxu0 %v3001
    %v3027 = vpop.f32.mrf.mxu0
    %v3028 = vadd.f32 %v2966, %v3027
    %v3029 = vpop.f32.mrf.mxu0
    %v3030 = vadd.f32 %v2966, %v3029
    %3031 = vdwg.mxu0
    %v3032 = vadd.f32 %v3013, %v2530
    %v3033 = vadd.f32 %v3015, %v2531
    %v3034 = vadd.f32 %v3018, %v2532
    %v3035 = vadd.f32 %v3020, %v2533
    %v3036 = vadd.f32 %v3023, %v2534
    %v3037 = vadd.f32 %v3025, %v2535
    %v3038 = vadd.f32 %v3028, %v2536
    %v3039 = vadd.f32 %v3030, %v2537
    %v3040 = vsel %vm42, %v3032, 0.0
    %3041 = vadd.xlane.f32.xlu0 %v3040
    %v3042 = vpop.xlane.xlu0 %3041
    %v3043 = vsel %vm42, %v3033, 0.0
    %3044 = vadd.xlane.f32.xlu0 %v3043
    %v3045 = vpop.xlane.xlu0 %3044
    %v3046 = vsel %vm42, %v3034, 0.0
    %3047 = vadd.xlane.f32.xlu0 %v3046
    %v3048 = vpop.xlane.xlu0 %3047
    %v3049 = vsel %vm42, %v3035, 0.0
    %3050 = vadd.xlane.f32.xlu0 %v3049
    %v3051 = vpop.xlane.xlu0 %3050
    %v3052 = vsel %vm42, %v3036, 0.0
    %3053 = vadd.xlane.f32.xlu0 %v3052
    %v3054 = vpop.xlane.xlu0 %3053
    %v3055 = vsel %vm42, %v3037, 0.0
    %3056 = vadd.xlane.f32.xlu0 %v3055
    %v3057 = vpop.xlane.xlu0 %3056
    %v3058 = vsel %vm42, %v3038, 0.0
    %3059 = vadd.xlane.f32.xlu0 %v3058
    %v3060 = vpop.xlane.xlu0 %3059
    %v3061 = vsel %vm42, %v3039, 0.0
    %3062 = vadd.xlane.f32.xlu0 %v3061
    %v3063 = vpop.xlane.xlu0 %3062
    %v3064 = vmul.f32 %v3042, %v73
    %v3065 = vmul.f32 %v3045, %v73
    %v3066 = vmul.f32 %v3048, %v73
    %v3067 = vmul.f32 %v3051, %v73
    %v3068 = vmul.f32 %v3054, %v73
    %v3069 = vmul.f32 %v3057, %v73
    %v3070 = vmul.f32 %v3060, %v73
    %v3071 = vmul.f32 %v3063, %v73
    %v3072 = vsub.f32 %v3032, %v3064
    %v3073 = vsub.f32 %v3033, %v3065
    %v3074 = vsub.f32 %v3034, %v3066
    %v3075 = vsub.f32 %v3035, %v3067
    %v3076 = vsub.f32 %v3036, %v3068
    %v3077 = vsub.f32 %v3037, %v3069
    %v3078 = vsub.f32 %v3038, %v3070
    %v3079 = vsub.f32 %v3039, %v3071
    %v3080 = vmul.f32 %v3072, %v3072
    %v3081 = vmul.f32 %v3073, %v3073
    %v3082 = vmul.f32 %v3074, %v3074
    %v3083 = vmul.f32 %v3075, %v3075
    %v3084 = vmul.f32 %v3076, %v3076
    %v3085 = vmul.f32 %v3077, %v3077
    %v3086 = vmul.f32 %v3078, %v3078
    %v3087 = vmul.f32 %v3079, %v3079
    %v3088 = vsel %vm42, %v3080, 0.0
    %3089 = vadd.xlane.f32.xlu0 %v3088
    %v3090 = vpop.xlane.xlu0 %3089
    %v3091 = vsel %vm42, %v3081, 0.0
    %3092 = vadd.xlane.f32.xlu0 %v3091
    %v3093 = vpop.xlane.xlu0 %3092
    %v3094 = vsel %vm42, %v3082, 0.0
    %3095 = vadd.xlane.f32.xlu0 %v3094
    %v3096 = vpop.xlane.xlu0 %3095
    %v3097 = vsel %vm42, %v3083, 0.0
    %3098 = vadd.xlane.f32.xlu0 %v3097
    %v3099 = vpop.xlane.xlu0 %3098
    %v3100 = vsel %vm42, %v3084, 0.0
    %3101 = vadd.xlane.f32.xlu0 %v3100
    %v3102 = vpop.xlane.xlu0 %3101
    %v3103 = vsel %vm42, %v3085, 0.0
    %3104 = vadd.xlane.f32.xlu0 %v3103
    %v3105 = vpop.xlane.xlu0 %3104
    %v3106 = vsel %vm42, %v3086, 0.0
    %3107 = vadd.xlane.f32.xlu0 %v3106
    %v3108 = vpop.xlane.xlu0 %3107
    %v3109 = vsel %vm42, %v3087, 0.0
    %3110 = vadd.xlane.f32.xlu0 %v3109
    %v3111 = vpop.xlane.xlu0 %3110
    %v3112 = vmul.f32 %v3090, %v73
    %v3113 = vmul.f32 %v3093, %v73
    %v3114 = vmul.f32 %v3096, %v73
    %v3115 = vmul.f32 %v3099, %v73
    %v3116 = vmul.f32 %v3102, %v73
    %v3117 = vmul.f32 %v3105, %v73
    %v3118 = vmul.f32 %v3108, %v73
    %v3119 = vmul.f32 %v3111, %v73
    %v3120 = vadd.f32 %v3112, 1e-12
    %v3121 = vadd.f32 %v3113, 1e-12
    %v3122 = vadd.f32 %v3114, 1e-12
    %v3123 = vadd.f32 %v3115, 1e-12
    %v3124 = vadd.f32 %v3116, 1e-12
    %v3125 = vadd.f32 %v3117, 1e-12
    %v3126 = vadd.f32 %v3118, 1e-12
    %v3127 = vadd.f32 %v3119, 1e-12
    %v3128 = vrsqrt.pop %v3120
    %v3129 = vmul.f32 %v3128, %v3120
    %v3130 = vmul.f32 %v3129, %v3128
    %v3131 = vmul.f32 0.5, %v3130
    %v3132 = vsub.f32 1.5, %v3131
    %v3133 = vmul.f32 %v3128, %v3132
    %vm3134 = vweird.f32 %v3120
    %vm3135 = vweird.f32 %v3128
    %vm3136 = vmor %vm3134, %vm3135
    %v3137 = vsel %vm3136, %v3128, %v3133
    %v3138 = vrsqrt.pop %v3121
    %v3139 = vmul.f32 %v3138, %v3121
    %v3140 = vmul.f32 %v3139, %v3138
    %v3141 = vmul.f32 0.5, %v3140
    %v3142 = vsub.f32 1.5, %v3141
    %v3143 = vmul.f32 %v3138, %v3142
    %vm3144 = vweird.f32 %v3121
    %vm3145 = vweird.f32 %v3138
    %vm3146 = vmor %vm3144, %vm3145
    %v3147 = vsel %vm3146, %v3138, %v3143
    %v3148 = vrsqrt.pop %v3122
    %v3149 = vmul.f32 %v3148, %v3122
    %v3150 = vmul.f32 %v3149, %v3148
    %v3151 = vmul.f32 0.5, %v3150
    %v3152 = vsub.f32 1.5, %v3151
    %v3153 = vmul.f32 %v3148, %v3152
    %vm3154 = vweird.f32 %v3122
    %vm3155 = vweird.f32 %v3148
    %vm3156 = vmor %vm3154, %vm3155
    %v3157 = vsel %vm3156, %v3148, %v3153
    %v3158 = vrsqrt.pop %v3123
    %v3159 = vmul.f32 %v3158, %v3123
    %v3160 = vmul.f32 %v3159, %v3158
    %v3161 = vmul.f32 0.5, %v3160
    %v3162 = vsub.f32 1.5, %v3161
    %v3163 = vmul.f32 %v3158, %v3162
    %vm3164 = vweird.f32 %v3123
    %vm3165 = vweird.f32 %v3158
    %vm3166 = vmor %vm3164, %vm3165
    %v3167 = vsel %vm3166, %v3158, %v3163
    %v3168 = vrsqrt.pop %v3124
    %v3169 = vmul.f32 %v3168, %v3124
    %v3170 = vmul.f32 %v3169, %v3168
    %v3171 = vmul.f32 0.5, %v3170
    %v3172 = vsub.f32 1.5, %v3171
    %v3173 = vmul.f32 %v3168, %v3172
    %vm3174 = vweird.f32 %v3124
    %vm3175 = vweird.f32 %v3168
    %vm3176 = vmor %vm3174, %vm3175
    %v3177 = vsel %vm3176, %v3168, %v3173
    %v3178 = vrsqrt.pop %v3125
    %v3179 = vmul.f32 %v3178, %v3125
    %v3180 = vmul.f32 %v3179, %v3178
    %v3181 = vmul.f32 0.5, %v3180
    %v3182 = vsub.f32 1.5, %v3181
    %v3183 = vmul.f32 %v3178, %v3182
    %vm3184 = vweird.f32 %v3125
    %vm3185 = vweird.f32 %v3178
    %vm3186 = vmor %vm3184, %vm3185
    %v3187 = vsel %vm3186, %v3178, %v3183
    %v3188 = vrsqrt.pop %v3126
    %v3189 = vmul.f32 %v3188, %v3126
    %v3190 = vmul.f32 %v3189, %v3188
    %v3191 = vmul.f32 0.5, %v3190
    %v3192 = vsub.f32 1.5, %v3191
    %v3193 = vmul.f32 %v3188, %v3192
    %vm3194 = vweird.f32 %v3126
    %vm3195 = vweird.f32 %v3188
    %vm3196 = vmor %vm3194, %vm3195
    %v3197 = vsel %vm3196, %v3188, %v3193
    %v3198 = vrsqrt.pop %v3127
    %v3199 = vmul.f32 %v3198, %v3127
    %v3200 = vmul.f32 %v3199, %v3198
    %v3201 = vmul.f32 0.5, %v3200
    %v3202 = vsub.f32 1.5, %v3201
    %v3203 = vmul.f32 %v3198, %v3202
    %vm3204 = vweird.f32 %v3127
    %vm3205 = vweird.f32 %v3198
    %vm3206 = vmor %vm3204, %vm3205
    %v3207 = vsel %vm3206, %v3198, %v3203
    %v3208 = vmul.f32 %v3072, %v3137
    %v3209 = vmul.f32 %v3073, %v3147
    %v3210 = vmul.f32 %v3074, %v3157
    %v3211 = vmul.f32 %v3075, %v3167
    %v3212 = vmul.f32 %v3076, %v3177
    %v3213 = vmul.f32 %v3077, %v3187
    %v3214 = vmul.f32 %v3078, %v3197
    %v3215 = vmul.f32 %v3079, %v3207
    %v3216 = vperm.slane %v33, 0
    %v3217 = vmul.f32 %v3208, %v3216
    %v3218 = vmul.f32 %v3209, %v3216
    %v3219 = vmul.f32 %v3210, %v3216
    %v3220 = vmul.f32 %v3211, %v3216
    %v3221 = vmul.f32 %v3212, %v3216
    %v3222 = vmul.f32 %v3213, %v3216
    %v3223 = vmul.f32 %v3214, %v3216
    %v3224 = vmul.f32 %v3215, %v3216
    %v3225 = vperm.slane %v33, 1
    %v3226 = vadd.f32 %v3217, %v3225
    %v3227 = vadd.f32 %v3218, %v3225
    %v3228 = vadd.f32 %v3219, %v3225
    %v3229 = vadd.f32 %v3220, %v3225
    %v3230 = vadd.f32 %v3221, %v3225
    %v3231 = vadd.f32 %v3222, %v3225
    %v3232 = vadd.f32 %v3223, %v3225
    %v3233 = vadd.f32 %v3224, %v3225
    %v3234 = vld [vmem:[%s7] sm:$0xf]
    %v3235 = vld [vmem:[%s7 + $0x4] sm:$0xf]
    %v3236 = vld [vmem:[%s7 + $0x8] sm:$0xf]
    %v3237 = vld [vmem:[%s7 + $0xc] sm:$0xf]
    %v3238 = vpack.c.bf16 %v3227, %v3226
    %v3239 = vpack.c.bf16 %v3229, %v3228
    %v3240 = vpack.c.bf16 %v3231, %v3230
    %v3241 = vpack.c.bf16 %v3233, %v3232
    %v3242 = vperm.slane %v33, 2
    %v3247 = vunpack.c.l.b16 %v3234
    %v3248 = vunpack.c.l.b16 %v3235
    %v3249 = vunpack.c.l.b16 %v3236
    %v3250 = vunpack.c.l.b16 %v3237
    %v3251 = vpack.c.b16 %v3248, %v3247
    %v3252 = vpack.c.b16 %v3250, %v3249
    %v3256 = vsel %vm42, %v3238, 0
    %v3259 = vsel %vm42, %v3239, 0
    %v3262 = vsel %vm42, %v3240, 0
    %v3265 = vsel %vm42, %v3241, 0
    %3267 = vmatpush.bf16.msra.mxu0 0
    %3268 = vmatpush.bf16.msra.mxu0 0
    %3269 = vmatpush.bf16.msra.mxu0 0
    %3270 = vmatpush.bf16.msra.mxu0 0
    %3271 = vmatpush.bf16.msra.mxu0 0
    %3272 = vmatpush.bf16.msra.mxu0 0
    %3273 = vmatpush.bf16.msra.mxu0 %v3252
    %3274 = vmatpush.bf16.msra.mxu0 %v3251
    %3275 = vmatmul.bf16.gmra.mxu0 %v3256
    %v3276 = vpop.f32.mrf.mxu0
    %v3277 = vadd.f32 %v3242, %v3276
    %v3278 = vpop.f32.mrf.mxu0
    %v3279 = vadd.f32 %v3242, %v3278
    %3280 = vmatmul.bf16.gmra.mxu0 %v3259
    %v3281 = vpop.f32.mrf.mxu0
    %v3282 = vadd.f32 %v3242, %v3281
    %v3283 = vpop.f32.mrf.mxu0
    %v3284 = vadd.f32 %v3242, %v3283
    %3285 = vmatmul.bf16.gmra.mxu0 %v3262
    %v3286 = vpop.f32.mrf.mxu0
    %v3287 = vadd.f32 %v3242, %v3286
    %v3288 = vpop.f32.mrf.mxu0
    %v3289 = vadd.f32 %v3242, %v3288
    %3290 = vmatmul.bf16.gmra.mxu0 %v3265
    %v3291 = vpop.f32.mrf.mxu0
    %v3292 = vadd.f32 %v3242, %v3291
    %v3293 = vpop.f32.mrf.mxu0
    %v3294 = vadd.f32 %v3242, %v3293
    %3295 = vdwg.mxu0
    %3296 = vmax.xlane.f32.xlu0 %v3277
    %v3297 = vpop.xlane.xlu0 %3296
    %3298 = vmax.xlane.f32.xlu0 %v3279
    %v3299 = vpop.xlane.xlu0 %3298
    %3300 = vmax.xlane.f32.xlu0 %v3282
    %v3301 = vpop.xlane.xlu0 %3300
    %3302 = vmax.xlane.f32.xlu0 %v3284
    %v3303 = vpop.xlane.xlu0 %3302
    %3304 = vmax.xlane.f32.xlu0 %v3287
    %v3305 = vpop.xlane.xlu0 %3304
    %3306 = vmax.xlane.f32.xlu0 %v3289
    %v3307 = vpop.xlane.xlu0 %3306
    %3308 = vmax.xlane.f32.xlu0 %v3292
    %v3309 = vpop.xlane.xlu0 %3308
    %3310 = vmax.xlane.f32.xlu0 %v3294
    %v3311 = vpop.xlane.xlu0 %3310
    %v3312 = vsub.f32 %v3277, %v3297
    %v3313 = vsub.f32 %v3279, %v3299
    %v3314 = vsub.f32 %v3282, %v3301
    %v3315 = vsub.f32 %v3284, %v3303
    %v3316 = vsub.f32 %v3287, %v3305
    %v3317 = vsub.f32 %v3289, %v3307
    %v3318 = vsub.f32 %v3292, %v3309
    %v3319 = vsub.f32 %v3294, %v3311
    %v3320 = vmul.f32 %v3312, 1.442695
    %v3321 = vpow.pop %v3320
    %v3322 = vmul.f32 %v3313, 1.442695
    %v3323 = vpow.pop %v3322
    %v3324 = vmul.f32 %v3314, 1.442695
    %v3325 = vpow.pop %v3324
    %v3326 = vmul.f32 %v3315, 1.442695
    %v3327 = vpow.pop %v3326
    %v3328 = vmul.f32 %v3316, 1.442695
    %v3329 = vpow.pop %v3328
    %v3330 = vmul.f32 %v3317, 1.442695
    %v3331 = vpow.pop %v3330
    %v3332 = vmul.f32 %v3318, 1.442695
    %v3333 = vpow.pop %v3332
    %v3334 = vmul.f32 %v3319, 1.442695
    %v3335 = vpow.pop %v3334
    %3336 = vadd.xlane.f32.xlu0 %v3321
    %v3337 = vpop.xlane.xlu0 %3336
    %3338 = vadd.xlane.f32.xlu0 %v3323
    %v3339 = vpop.xlane.xlu0 %3338
    %3340 = vadd.xlane.f32.xlu0 %v3325
    %v3341 = vpop.xlane.xlu0 %3340
    %3342 = vadd.xlane.f32.xlu0 %v3327
    %v3343 = vpop.xlane.xlu0 %3342
    %3344 = vadd.xlane.f32.xlu0 %v3329
    %v3345 = vpop.xlane.xlu0 %3344
    %3346 = vadd.xlane.f32.xlu0 %v3331
    %v3347 = vpop.xlane.xlu0 %3346
    %3348 = vadd.xlane.f32.xlu0 %v3333
    %v3349 = vpop.xlane.xlu0 %3348
    %3350 = vadd.xlane.f32.xlu0 %v3335
    %v3351 = vpop.xlane.xlu0 %3350
    %v3352 = vrcp.pop %v3337
    %v3353 = vmul.f32 %v3337, %v3352
    %v3354 = vsub.f32 1.0, %v3353
    %v3355 = vmul.f32 %v3352, %v3354
    %v3356 = vadd.f32 %v3352, %v3355
    %vm3357 = vweird.f32 %v3337
    %vm3358 = vweird.f32 %v3352
    %vm3359 = vmor %vm3357, %vm3358
    %v3360 = vsel %vm3359, %v3352, %v3356
    %v3361 = vand.u32 2147483647, %v3337
    %vm3362 = vcmp.eq.f32.partialorder %v3361, 8.507059e+37
    %v3363 = vand.u32 %v3337, 2147483648
    %v3364 = vor.u32 1.1754944e-38, %v3363
    %v3365 = vsel %vm3362, %v3364, %v3360
    %v3366 = vmul.f32 %v3321, %v3365
    %v3367 = vrcp.pop %v3339
    %v3368 = vmul.f32 %v3339, %v3367
    %v3369 = vsub.f32 1.0, %v3368
    %v3370 = vmul.f32 %v3367, %v3369
    %v3371 = vadd.f32 %v3367, %v3370
    %vm3372 = vweird.f32 %v3339
    %vm3373 = vweird.f32 %v3367
    %vm3374 = vmor %vm3372, %vm3373
    %v3375 = vsel %vm3374, %v3367, %v3371
    %v3376 = vand.u32 2147483647, %v3339
    %vm3377 = vcmp.eq.f32.partialorder %v3376, 8.507059e+37
    %v3378 = vand.u32 %v3339, 2147483648
    %v3379 = vor.u32 1.1754944e-38, %v3378
    %v3380 = vsel %vm3377, %v3379, %v3375
    %v3381 = vmul.f32 %v3323, %v3380
    %v3382 = vrcp.pop %v3341
    %v3383 = vmul.f32 %v3341, %v3382
    %v3384 = vsub.f32 1.0, %v3383
    %v3385 = vmul.f32 %v3382, %v3384
    %v3386 = vadd.f32 %v3382, %v3385
    %vm3387 = vweird.f32 %v3341
    %vm3388 = vweird.f32 %v3382
    %vm3389 = vmor %vm3387, %vm3388
    %v3390 = vsel %vm3389, %v3382, %v3386
    %v3391 = vand.u32 2147483647, %v3341
    %vm3392 = vcmp.eq.f32.partialorder %v3391, 8.507059e+37
    %v3393 = vand.u32 %v3341, 2147483648
    %v3394 = vor.u32 1.1754944e-38, %v3393
    %v3395 = vsel %vm3392, %v3394, %v3390
    %v3396 = vmul.f32 %v3325, %v3395
    %v3397 = vrcp.pop %v3343
    %v3398 = vmul.f32 %v3343, %v3397
    %v3399 = vsub.f32 1.0, %v3398
    %v3400 = vmul.f32 %v3397, %v3399
    %v3401 = vadd.f32 %v3397, %v3400
    %vm3402 = vweird.f32 %v3343
    %vm3403 = vweird.f32 %v3397
    %vm3404 = vmor %vm3402, %vm3403
    %v3405 = vsel %vm3404, %v3397, %v3401
    %v3406 = vand.u32 2147483647, %v3343
    %vm3407 = vcmp.eq.f32.partialorder %v3406, 8.507059e+37
    %v3408 = vand.u32 %v3343, 2147483648
    %v3409 = vor.u32 1.1754944e-38, %v3408
    %v3410 = vsel %vm3407, %v3409, %v3405
    %v3411 = vmul.f32 %v3327, %v3410
    %v3412 = vrcp.pop %v3345
    %v3413 = vmul.f32 %v3345, %v3412
    %v3414 = vsub.f32 1.0, %v3413
    %v3415 = vmul.f32 %v3412, %v3414
    %v3416 = vadd.f32 %v3412, %v3415
    %vm3417 = vweird.f32 %v3345
    %vm3418 = vweird.f32 %v3412
    %vm3419 = vmor %vm3417, %vm3418
    %v3420 = vsel %vm3419, %v3412, %v3416
    %v3421 = vand.u32 2147483647, %v3345
    %vm3422 = vcmp.eq.f32.partialorder %v3421, 8.507059e+37
    %v3423 = vand.u32 %v3345, 2147483648
    %v3424 = vor.u32 1.1754944e-38, %v3423
    %v3425 = vsel %vm3422, %v3424, %v3420
    %v3426 = vmul.f32 %v3329, %v3425
    %v3427 = vrcp.pop %v3347
    %v3428 = vmul.f32 %v3347, %v3427
    %v3429 = vsub.f32 1.0, %v3428
    %v3430 = vmul.f32 %v3427, %v3429
    %v3431 = vadd.f32 %v3427, %v3430
    %vm3432 = vweird.f32 %v3347
    %vm3433 = vweird.f32 %v3427
    %vm3434 = vmor %vm3432, %vm3433
    %v3435 = vsel %vm3434, %v3427, %v3431
    %v3436 = vand.u32 2147483647, %v3347
    %vm3437 = vcmp.eq.f32.partialorder %v3436, 8.507059e+37
    %v3438 = vand.u32 %v3347, 2147483648
    %v3439 = vor.u32 1.1754944e-38, %v3438
    %v3440 = vsel %vm3437, %v3439, %v3435
    %v3441 = vmul.f32 %v3331, %v3440
    %v3442 = vrcp.pop %v3349
    %v3443 = vmul.f32 %v3349, %v3442
    %v3444 = vsub.f32 1.0, %v3443
    %v3445 = vmul.f32 %v3442, %v3444
    %v3446 = vadd.f32 %v3442, %v3445
    %vm3447 = vweird.f32 %v3349
    %vm3448 = vweird.f32 %v3442
    %vm3449 = vmor %vm3447, %vm3448
    %v3450 = vsel %vm3449, %v3442, %v3446
    %v3451 = vand.u32 2147483647, %v3349
    %vm3452 = vcmp.eq.f32.partialorder %v3451, 8.507059e+37
    %v3453 = vand.u32 %v3349, 2147483648
    %v3454 = vor.u32 1.1754944e-38, %v3453
    %v3455 = vsel %vm3452, %v3454, %v3450
    %v3456 = vmul.f32 %v3333, %v3455
    %v3457 = vrcp.pop %v3351
    %v3458 = vmul.f32 %v3351, %v3457
    %v3459 = vsub.f32 1.0, %v3458
    %v3460 = vmul.f32 %v3457, %v3459
    %v3461 = vadd.f32 %v3457, %v3460
    %vm3462 = vweird.f32 %v3351
    %vm3463 = vweird.f32 %v3457
    %vm3464 = vmor %vm3462, %vm3463
    %v3465 = vsel %vm3464, %v3457, %v3461
    %v3466 = vand.u32 2147483647, %v3351
    %vm3467 = vcmp.eq.f32.partialorder %v3466, 8.507059e+37
    %v3468 = vand.u32 %v3351, 2147483648
    %v3469 = vor.u32 1.1754944e-38, %v3468
    %v3470 = vsel %vm3467, %v3469, %v3465
    %v3471 = vmul.f32 %v3335, %v3470
    %3472 = vst [vmem:[#allocation2] sm:$0xff] %v3366
    %3473 = vst [vmem:[#allocation2 + $0x8] sm:$0xff] %v3381
    %3474 = vst [vmem:[#allocation2 + $0x10] sm:$0xff] %v3396
    %3475 = vst [vmem:[#allocation2 + $0x18] sm:$0xff] %v3411
    %3476 = vst [vmem:[#allocation2 + $0x20] sm:$0xff] %v3426
    %3477 = vst [vmem:[#allocation2 + $0x28] sm:$0xff] %v3441
    %3478 = vst [vmem:[#allocation2 + $0x30] sm:$0xff] %v3456
    %3479 = vst [vmem:[#allocation2 + $0x38] sm:$0xff] %v3471
    // Predicated region
    $region34: #{_lambda_.1} parent=1 // pred_check
      _
    $region35: #{_lambda_.1} parent=1 // pred_check_branch
      %3481 = sbr.rel (0) target = $region37
    $region36: #{_lambda_.1} parent=1 // pred_region
      %3483 = vsyncadd [#allocation3], 0
      %s3484 = sshll.u32 [#allocation2], 4
      %s3485 = int_to_ptr.vmem [resolvable:$true] %s3484
      %s3486 = sshll.u32 %s8, 4
      %s3487 = int_to_ptr.hbm [resolvable:$true] %s3486
      %3492 = dma.vmem_to_hbm [thread:$0]  %s3485, 1024, %s3487, [#allocation3], 128, 128, 8
    $region37: #{_lambda_.1} parent=1 // pred_fallthru
      _
    // Predicated region
    $region38: #{_lambda_.1} parent=1 // pred_check
      _
    $region39: #{_lambda_.1} parent=1 // pred_check_branch
      %3494 = sbr.rel (0) target = $region41
    $region40: #{_lambda_.1} parent=1 // pred_region
      %3496 = dma.done [#allocation3], 1024
    $region41: #{_lambda_.1} parent=1 // pred_fallthru
      _
    %3497 = vsyncpa [#allocation3], 1

</llo_original>
